<compile_context>
chip_gen: v7x
topology: tpu7x:2x2x1
jax: 0.10.0
libtpu: 0.0.40
codegen_flags: <defaults>
</compile_context>

<pallas_src>
import functools
import math

import jax
import jax.numpy as jnp
import numpy as np
from jax.experimental import pallas as pl
from jax.experimental.pallas import tpu as pltpu

_PARALLEL = pltpu.CompilerParams(dimension_semantics=("parallel",))
_LANE = 128


def _round_up(x, m):
    return (x + m - 1) // m * m


# ------------------------------ fused flow-block kernel ----------------------

def _flow_block_kernel(x0_ref, x1_ref, m_ref,
                       w00_ref, w01_ref, w10_ref, w11_ref, b0_ref, b1_ref,
                       sw_ref, sb_ref, win_ref, bin_ref, wrs_ref, brs_ref,
                       ewm_ref, ebm_ref, ewl_ref, ebl_ref,
                       z0_ref, z1_ref, ld_ref,
                       *, H, K, n_layers, dilation_rate):
    """ActNorm + InvConvNear + CouplingBlock for one batch element, VMEM resident."""
    f32 = jnp.float32
    m = m_ref[0]                       # (1, T)
    x0 = x0_ref[0]                     # (half, T)
    x1 = x1_ref[0]                     # (half, T)
    T = x0.shape[-1]

    # --- ActNorm + InvConvNear: both are per-timestep channel mixes, pre-fused on
    #     the host into a single (C, C) affine, passed as half x half quadrants.
    y0 = (jnp.dot(w00_ref[...], x0, preferred_element_type=f32)
          + jnp.dot(w01_ref[...], x1, preferred_element_type=f32)
          + b0_ref[...]) * m
    y1 = (jnp.dot(w10_ref[...], x0, preferred_element_type=f32)
          + jnp.dot(w11_ref[...], x1, preferred_element_type=f32)
          + b1_ref[...]) * m

    # --- CouplingBlock: start 1x1 conv (masked).
    h = (jnp.dot(sw_ref[...], y0, preferred_element_type=f32) + sb_ref[...]) * m
    skip = jnp.zeros_like(h)

    # --- WN layers, fully fused; K taps gathered by lane rotation, one matmul.
    for i in range(n_layers):
        d = dilation_rate ** i
        pad = (K * d - d) // 2
        cols = []
        for k in range(K):
            s = (pad - k * d) % T
            cols.append(h if s == 0 else pltpu.roll(h, shift=s, axis=1))
        stacked = jnp.concatenate(cols, axis=0)                     # (K*H, T)
        acc = (jnp.dot(win_ref[i], stacked, preferred_element_type=f32)
               + bin_ref[i])                                        # (2H, T)
        acts = jnp.tanh(acc[:H]) * jax.nn.sigmoid(acc[H:])          # gated, g=None
        rs = (jnp.dot(wrs_ref[i], acts, preferred_element_type=f32)
              + brs_ref[i])                                         # (2H, T)
        if i < n_layers - 1:
            h = (h + rs[:H]) * m                                    # residual
        skip = skip + rs[H:]                                        # skip path

    # --- end 1x1 conv (weights pre-split into mu / logs halves) + affine coupling.
    skip = skip * m
    mu = jnp.dot(ewm_ref[...], skip, preferred_element_type=f32) + ebm_ref[...]
    logs = jnp.dot(ewl_ref[...], skip, preferred_element_type=f32) + ebl_ref[...]
    # TODO(synk): sigmoid_scale=True branch (logs = log(1e-6 + sigmoid(logs+2))) not wired.

    z0_ref[0] = y0                                   # z0 = x0 of the coupling block
    z1_ref[0] = (mu + jnp.exp(logs) * y1) * m
    # lane-dense per-column logdet partials; reduced over T in the JAX glue.
    ld_ref[0] = jnp.sum(logs * m, axis=0, keepdims=True)


def flow_block(x0, x1, x_mask, inv_p, cp_p, cfg):
    B, half, T = x0.shape
    kernel = functools.partial(
        _flow_block_kernel, H=cfg["hidden_channels"], K=cfg["kernel_size"],
        n_layers=cfg["n_layers"], dilation_rate=cfg["dilation_rate"])

    def act_spec(c):
        return pl.BlockSpec((1, c, T), lambda b: (b, 0, 0))

    def par_spec(a):
        nd = a.ndim
        return pl.BlockSpec(a.shape, lambda b, _nd=nd: (0,) * _nd)

    w00, w01, w10, w11, b0, b1 = inv_p
    par_inputs = (w00, w01, w10, w11, b0, b1,
                  cp_p["sw"], cp_p["sb"], cp_p["win"], cp_p["bin"],
                  cp_p["wrs"], cp_p["brs"],
                  cp_p["ewm"], cp_p["ebm"], cp_p["ewl"], cp_p["ebl"])
    z0, z1, ld = pl.pallas_call(
        kernel,
        out_shape=(jax.ShapeDtypeStruct((B, half, T), x0.dtype),
                   jax.ShapeDtypeStruct((B, half, T), x0.dtype),
                   jax.ShapeDtypeStruct((B, 1, T), jnp.float32)),
        grid=(B,),
        in_specs=[act_spec(half), act_spec(half), act_spec(1)]
                 + [par_spec(a) for a in par_inputs],
        out_specs=(act_spec(half), act_spec(half), act_spec(1)),
        compiler_params=_PARALLEL,
    )(x0, x1, x_mask, *par_inputs)
    return z0, z1, ld


# ----------------------------- host-side param packing -----------------------

def _invconv_channel_perm(C, n_split):
    ns, cp, hns = n_split, C // n_split, n_split // 2
    perm = np.zeros((ns, cp), dtype=np.int64)
    for i in range(ns):
        a, k = divmod(i, hns)
        for j in range(cp):
            perm[i, j] = a * cp * hns + j * hns + k
    return perm


def _pack_actnorm_invconv(W, logs, bias, C, n_split):
    """Fuse ActNorm (scale/shift) and InvConvNear (grouped 1x1) into one (C,C) affine,
    returned as half x half quadrants so the kernel never slices sublanes."""
    perm = _invconv_channel_perm(C, n_split)
    Wb = jnp.zeros((C, C), jnp.float32)
    for j in range(perm.shape[1]):
        idx = perm[:, j]
        Wb = Wb.at[jnp.ix_(idx, idx)].set(W)
    scale = jnp.exp(logs)[:, 0]                      # (C,)
    Wf = Wb * scale[None, :]                         # fold exp(logs) into the mix
    bf = Wb @ bias                                   # fold ActNorm bias
    h = C // 2
    return (Wf[:h, :h], Wf[:h, h:], Wf[h:, :h], Wf[h:, h:], bf[:h], bf[h:])


def _pack_coupling(p, cfg, half):
    H, K, L = cfg["hidden_channels"], cfg["kernel_size"], cfg["n_layers"]
    # Fuse the K dilated-conv taps into one (2H, K*H) matmul per layer.
    win = jnp.stack([jnp.concatenate([p["wn_in_w"][i][k] for k in range(K)], axis=1)
                     for i in range(L)])
    b_in = jnp.stack(p["wn_in_b"])                   # (L, 2H, 1)
    wrs, brs = [], []
    for i in range(L):
        w, b = p["wn_rs_w"][i], p["wn_rs_b"][i]
        if w.shape[0] == H:                          # last layer: skip-only, pad res rows
            w = jnp.concatenate([jnp.zeros((H, H), w.dtype), w], axis=0)
            b = jnp.concatenate([jnp.zeros((H, 1), b.dtype), b], axis=0)
        wrs.append(w)
        brs.append(b)
    ew, eb = p["end_w"], p["end_b"]
    return dict(sw=p["start_w"], sb=p["start_b"], win=win, bin=b_in,
                wrs=jnp.stack(wrs), brs=jnp.stack(brs),
                ewm=ew[:half], ebm=eb[:half], ewl=ew[half:], ebl=eb[half:])


# --------------------------- flow modules (glue + kernels) -------------------

def squeeze(x, x_mask, n_sqz):
    b, c, t = x.shape
    t = (t // n_sqz) * n_sqz
    x = x[:, :, :t]
    x_sqz = x.reshape(b, c, t // n_sqz, n_sqz)
    x_sqz = jnp.transpose(x_sqz, (0, 3, 1, 2)).reshape(b, c * n_sqz, t // n_sqz)
    x_mask = x_mask[:, :, n_sqz - 1::n_sqz]
    return x_sqz * x_mask, x_mask


def unsqueeze(x, x_mask, n_sqz):
    b, c, t = x.shape
    x_unsqz = x.reshape(b, n_sqz, c // n_sqz, t)
    x_unsqz = jnp.transpose(x_unsqz, (0, 2, 3, 1)).reshape(b, c // n_sqz, t * n_sqz)
    x_mask = jnp.repeat(x_mask[..., None], n_sqz, axis=-1).reshape(b, 1, t * n_sqz)
    return x_unsqz * x_mask, x_mask


def flow_spec_decoder_forward(params, x, x_mask, cfg):
    """reverse=False path of FlowSpecDecoder.forward."""
    # TODO(synk): reverse=True inverse path and store_inverse() not implemented.
    n_sqz = cfg["n_sqz"]
    if n_sqz > 1:
        x, x_mask = squeeze(x, x_mask, n_sqz)
    B, C, T_sq = x.shape
    half = C // 2
    K, dr, L = cfg["kernel_size"], cfg["dilation_rate"], cfg["n_layers"]
    # Pad T once so (a) all stores are lane-dense (multiple of 128) and (b) the
    # dilated-conv halo produced via lane rotation never wraps into valid columns.
    max_pad = (K - 1) * (dr ** (L - 1)) // 2
    T_pad = max(_round_up(T_sq + max_pad, _LANE), _LANE)
    xp = jnp.pad(x, ((0, 0), (0, 0), (0, T_pad - T_sq)))
    mp = jnp.pad(x_mask, ((0, 0), (0, 0), (0, T_pad - T_sq)))
    x0, x1 = xp[:, :half], xp[:, half:]

    x_len = jnp.sum(mp, axis=(1, 2))
    logdet_tot = jnp.zeros((B,), jnp.float32)
    for blk in params["flows"]:
        logs_a, bias_a = blk["actnorm"]["logs"], blk["actnorm"]["bias"]
        W = blk["invconv"]
        inv_p = _pack_actnorm_invconv(W, logs_a, bias_a, C, cfg["n_split"])
        cp_p = _pack_coupling(blk["coupling"], cfg, half)
        x0, x1, ld_part = flow_block(x0, x1, mp, inv_p, cp_p, cfg)
        logdet_tot = (logdet_tot
                      + jnp.sum(logs_a) * x_len
                      + jnp.linalg.slogdet(W)[1] * (C / cfg["n_split"]) * x_len
                      + jnp.sum(ld_part, axis=(1, 2)))
    z = jnp.concatenate([x0, x1], axis=1)[:, :, :T_sq]
    if n_sqz > 1:
        z, x_mask = unsqueeze(z, x_mask, n_sqz)
    return z, logdet_tot


# --------------------------- parameter initialization ------------------------

def init_params(key, cfg):
    # Deterministic synthetic init. Shapes follow the PyTorch __init__.
    # (PyTorch zero-inits the `end` conv and ActNorm params; we use small random
    #  values so the kernels are actually exercised.)
    C = cfg["in_channels"] * cfg["n_sqz"]
    H = cfg["hidden_channels"]
    K = cfg["kernel_size"]
    half = C // 2
    flows = []
    for _ in range(cfg["n_blocks"]):
        key, *ks = jax.random.split(key, 8)
        actnorm = {"logs": 0.1 * jax.random.normal(ks[0], (C, 1), jnp.float32),
                   "bias": 0.1 * jax.random.normal(ks[1], (C, 1), jnp.float32)}
        # InvConvNear: orthogonal init via QR, force det > 0
        w = jax.random.normal(ks[2], (cfg["n_split"], cfg["n_split"]), jnp.float32)
        q, _ = jnp.linalg.qr(w)
        q = jnp.where(jnp.linalg.det(q) < 0, q.at[:, 0].multiply(-1.0), q)
        coupling = {
            "start_w": jax.random.normal(ks[3], (H, half), jnp.float32) / math.sqrt(half),
            "start_b": 0.01 * jax.random.normal(ks[4], (H, 1), jnp.float32),
            "end_w": 0.01 * jax.random.normal(ks[5], (C, H), jnp.float32),
            "end_b": 0.01 * jax.random.normal(ks[6], (C, 1), jnp.float32),
            "wn_in_w": [], "wn_in_b": [], "wn_rs_w": [], "wn_rs_b": [],
        }
        for i in range(cfg["n_layers"]):
            key, k1, k2, k3, k4 = jax.random.split(key, 5)
            coupling["wn_in_w"].append(
                jax.random.normal(k1, (K, 2 * H, H), jnp.float32) / math.sqrt(H * K))
            coupling["wn_in_b"].append(0.01 * jax.random.normal(k2, (2 * H, 1), jnp.float32))
            RS = 2 * H if i < cfg["n_layers"] - 1 else H
            coupling["wn_rs_w"].append(
                jax.random.normal(k3, (RS, H), jnp.float32) / math.sqrt(H))
            coupling["wn_rs_b"].append(0.01 * jax.random.normal(k4, (RS, 1), jnp.float32))
        flows.append({"actnorm": actnorm, "invconv": q, "coupling": coupling})
    return {"flows": flows}


# --------------------------- pure-JAX reference (for checking) ---------------

def _einsum(w, x):
    return jnp.einsum("oc,bct->bot", w, x, precision=jax.lax.Precision.HIGHEST)


def reference_forward(params, x, x_mask, cfg):
    xq, mq = squeeze(x, x_mask, cfg["n_sqz"])
    B = x.shape[0]
    H, K, ns = cfg["hidden_channels"], cfg["kernel_size"], cfg["n_split"]
    logdet_tot = jnp.zeros((B,), jnp.float32)
    h = xq
    for blk in params["flows"]:
        C, T = h.shape[1], h.shape[2]
        x_len = jnp.sum(mq, axis=(1, 2))
        # ActNorm
        logs_a, bias_a = blk["actnorm"]["logs"], blk["actnorm"]["bias"]
        h = (bias_a[None] + jnp.exp(logs_a)[None] * h) * mq
        logdet_tot = logdet_tot + jnp.sum(logs_a) * x_len
        # InvConvNear
        W = blk["invconv"]
        cp = C // ns
        hr = h.reshape(B, 2, cp, ns // 2, T)
        hr = jnp.transpose(hr, (0, 1, 3, 2, 4)).reshape(B, ns, cp, T)
        zr = jnp.einsum("ik,bkjt->bijt", W, hr, precision=jax.lax.Precision.HIGHEST)
        z = zr.reshape(B, 2, ns // 2, cp, T)
        h = jnp.transpose(z, (0, 1, 3, 2, 4)).reshape(B, C, T) * mq
        logdet_tot = logdet_tot + jnp.linalg.slogdet(W)[1] * (C / ns) * x_len
        # CouplingBlock
        p = blk["coupling"]
        half = C // 2
        x0, x1 = h[:, :half], h[:, half:]
        hh = (_einsum(p["start_w"], x0) + p["start_b"][None]) * mq
        skip = jnp.zeros((B, H, T), jnp.float32)
        for i in range(cfg["n_layers"]):
            d = cfg["dilation_rate"] ** i
            pad = (K * d - d) // 2
            hpad = jnp.pad(hh, ((0, 0), (0, 0), (pad, pad)))
            acc = jnp.zeros((B, 2 * H, T), jnp.float32) + p["wn_in_b"][i][None]
            for k in range(K):
                acc = acc + _einsum(p["wn_in_w"][i][k], hpad[:, :, k * d:k * d + T])
            acts = jnp.tanh(acc[:, :H]) * jax.nn.sigmoid(acc[:, H:])
            rs = _einsum(p["wn_rs_w"][i], acts) + p["wn_rs_b"][i][None]
            if i < cfg["n_layers"] - 1:
                hh = (hh + rs[:, :H]) * mq
                skip = skip + rs[:, H:]
            else:
                skip = skip + rs
        nn_out = _einsum(p["end_w"], skip * mq) + p["end_b"][None]
        mu, logs_c = nn_out[:, :half], nn_out[:, half:]
        z1 = (mu + jnp.exp(logs_c) * x1) * mq
        h = jnp.concatenate([x0, z1], axis=1)
        logdet_tot = logdet_tot + jnp.sum(logs_c * mq, axis=(1, 2))
    out, _ = unsqueeze(h, mq, cfg["n_sqz"])
    return out, logdet_tot


# ----------------------------------- main ------------------------------------

if __name__ == "__main__":
    cfg = dict(in_channels=4, hidden_channels=32, kernel_size=3, dilation_rate=2,
               n_blocks=2, n_layers=2, p_dropout=0.0, n_split=4, n_sqz=2,
               sigmoid_scale=False, gin_channels=0)

    key = jax.random.PRNGKey(0)
    kx, kp = jax.random.split(key, 2)
    B, Cin, T = 2, cfg["in_channels"], 16
    x = jax.random.normal(kx, (B, Cin, T), jnp.float32)
    lengths = jnp.array([16, 12], jnp.int32)
    x_mask = (jnp.arange(T)[None, :] < lengths[:, None]).astype(jnp.float32)[:, None, :]

    params = init_params(kp, cfg)

    fwd = jax.jit(functools.partial(flow_spec_decoder_forward, cfg=cfg))
    z, logdet = fwd(params, x, x_mask)
    z = jax.block_until_ready(z)
    logdet = jax.block_until_ready(logdet)

    z_ref, logdet_ref = reference_forward(params, x, x_mask, cfg)
    assert z.shape == (B, Cin, T) and logdet.shape == (B,)
    assert jnp.allclose(z, z_ref, atol=2e-4, rtol=2e-4), "z mismatch vs reference"
    assert jnp.allclose(logdet, logdet_ref, atol=2e-3, rtol=2e-3), "logdet mismatch"
    print("KERNEL_OK")
</pallas_src>

<mosaic_0001>
module attributes {stable_mosaic.version = 11 : i64} {
  func.func @_flow_block_kernel(%arg0: i32, %arg1: memref<1x4x128xf32, #tpu.memory_space<vmem>>, %arg2: memref<1x4x128xf32, #tpu.memory_space<vmem>>, %arg3: memref<1x1x128xf32, #tpu.memory_space<vmem>>, %arg4: memref<4x4xf32, #tpu.memory_space<vmem>>, %arg5: memref<4x4xf32, #tpu.memory_space<vmem>>, %arg6: memref<4x4xf32, #tpu.memory_space<vmem>>, %arg7: memref<4x4xf32, #tpu.memory_space<vmem>>, %arg8: memref<4x1xf32, #tpu.memory_space<vmem>>, %arg9: memref<4x1xf32, #tpu.memory_space<vmem>>, %arg10: memref<32x4xf32, #tpu.memory_space<vmem>>, %arg11: memref<32x1xf32, #tpu.memory_space<vmem>>, %arg12: memref<2x64x96xf32, #tpu.memory_space<vmem>>, %arg13: memref<2x64x1xf32, #tpu.memory_space<vmem>>, %arg14: memref<2x64x32xf32, #tpu.memory_space<vmem>>, %arg15: memref<2x64x1xf32, #tpu.memory_space<vmem>>, %arg16: memref<4x32xf32, #tpu.memory_space<vmem>>, %arg17: memref<4x1xf32, #tpu.memory_space<vmem>>, %arg18: memref<4x32xf32, #tpu.memory_space<vmem>>, %arg19: memref<4x1xf32, #tpu.memory_space<vmem>>, %arg20: memref<1x4x128xf32, #tpu.memory_space<vmem>>, %arg21: memref<1x4x128xf32, #tpu.memory_space<vmem>>, %arg22: memref<1x1x128xf32, #tpu.memory_space<vmem>>) attributes {dimension_semantics = [#tpu.dimension_semantics<parallel>], iteration_bounds = array<i64: 2>, scalar_prefetch = 0 : i64, scratch_operands = 0 : i64, tpu.core_type = #tpu.core_type<tc>, window_params = [{transform_indices = @transform_0, window_bounds = array<i64: 1, 4, 128>}, {transform_indices = @transform_1, window_bounds = array<i64: 1, 4, 128>}, {transform_indices = @transform_2, window_bounds = array<i64: 1, 1, 128>}, {pipeline_mode = #tpu.pipeline_mode<synchronous>, transform_indices = @transform_3, window_bounds = array<i64: 4, 4>}, {pipeline_mode = #tpu.pipeline_mode<synchronous>, transform_indices = @transform_4, window_bounds = array<i64: 4, 4>}, {pipeline_mode = #tpu.pipeline_mode<synchronous>, transform_indices = @transform_5, window_bounds = array<i64: 4, 4>}, {pipeline_mode = #tpu.pipeline_mode<synchronous>, transform_indices = @transform_6, window_bounds = array<i64: 4, 4>}, {pipeline_mode = #tpu.pipeline_mode<synchronous>, transform_indices = @transform_7, window_bounds = array<i64: 4, 1>}, {pipeline_mode = #tpu.pipeline_mode<synchronous>, transform_indices = @transform_8, window_bounds = array<i64: 4, 1>}, {pipeline_mode = #tpu.pipeline_mode<synchronous>, transform_indices = @transform_9, window_bounds = array<i64: 32, 4>}, {pipeline_mode = #tpu.pipeline_mode<synchronous>, transform_indices = @transform_10, window_bounds = array<i64: 32, 1>}, {pipeline_mode = #tpu.pipeline_mode<synchronous>, transform_indices = @transform_11, window_bounds = array<i64: 2, 64, 96>}, {pipeline_mode = #tpu.pipeline_mode<synchronous>, transform_indices = @transform_12, window_bounds = array<i64: 2, 64, 1>}, {pipeline_mode = #tpu.pipeline_mode<synchronous>, transform_indices = @transform_13, window_bounds = array<i64: 2, 64, 32>}, {pipeline_mode = #tpu.pipeline_mode<synchronous>, transform_indices = @transform_14, window_bounds = array<i64: 2, 64, 1>}, {pipeline_mode = #tpu.pipeline_mode<synchronous>, transform_indices = @transform_15, window_bounds = array<i64: 4, 32>}, {pipeline_mode = #tpu.pipeline_mode<synchronous>, transform_indices = @transform_16, window_bounds = array<i64: 4, 1>}, {pipeline_mode = #tpu.pipeline_mode<synchronous>, transform_indices = @transform_17, window_bounds = array<i64: 4, 32>}, {pipeline_mode = #tpu.pipeline_mode<synchronous>, transform_indices = @transform_18, window_bounds = array<i64: 4, 1>}, {transform_indices = @transform_19, window_bounds = array<i64: 1, 4, 128>}, {transform_indices = @transform_20, window_bounds = array<i64: 1, 4, 128>}, {transform_indices = @transform_21, window_bounds = array<i64: 1, 1, 128>}]} {
    %c0 = arith.constant 0 : index
    %c0_0 = arith.constant 0 : index
    %c0_1 = arith.constant 0 : index
    %0 = vector.load %arg3[%c0, %c0_0, %c0_1] : memref<1x1x128xf32, #tpu.memory_space<vmem>>, vector<1x1x128xf32>
    %1 = vector.shape_cast %0 : vector<1x1x128xf32> to vector<1x128xf32>
    %c0_2 = arith.constant 0 : index
    %c0_3 = arith.constant 0 : index
    %c0_4 = arith.constant 0 : index
    %2 = vector.load %arg1[%c0_2, %c0_3, %c0_4] : memref<1x4x128xf32, #tpu.memory_space<vmem>>, vector<1x4x128xf32>
    %3 = vector.shape_cast %2 : vector<1x4x128xf32> to vector<4x128xf32>
    %c0_5 = arith.constant 0 : index
    %c0_6 = arith.constant 0 : index
    %c0_7 = arith.constant 0 : index
    %4 = vector.load %arg2[%c0_5, %c0_6, %c0_7] : memref<1x4x128xf32, #tpu.memory_space<vmem>>, vector<1x4x128xf32>
    %5 = vector.shape_cast %4 : vector<1x4x128xf32> to vector<4x128xf32>
    %c0_8 = arith.constant 0 : index
    %c0_9 = arith.constant 0 : index
    %6 = vector.load %arg4[%c0_8, %c0_9] : memref<4x4xf32, #tpu.memory_space<vmem>>, vector<4x4xf32>
    %cst = arith.constant dense<0.000000e+00> : vector<4x128xf32>
    %7 = tpu.matmul %6, %3, %cst {dimension_numbers = #tpu.dot_dimension_numbers<[1], [0], [0], [1], [0, 0, 1, 1], [], []>} : vector<4x4xf32>, vector<4x128xf32>, vector<4x128xf32> -> vector<4x128xf32>
    %c0_10 = arith.constant 0 : index
    %c0_11 = arith.constant 0 : index
    %8 = vector.load %arg5[%c0_10, %c0_11] : memref<4x4xf32, #tpu.memory_space<vmem>>, vector<4x4xf32>
    %cst_12 = arith.constant dense<0.000000e+00> : vector<4x128xf32>
    %9 = tpu.matmul %8, %5, %cst_12 {dimension_numbers = #tpu.dot_dimension_numbers<[1], [0], [0], [1], [0, 0, 1, 1], [], []>} : vector<4x4xf32>, vector<4x128xf32>, vector<4x128xf32> -> vector<4x128xf32>
    %10 = arith.addf %7, %9 : vector<4x128xf32>
    %c0_13 = arith.constant 0 : index
    %c0_14 = arith.constant 0 : index
    %11 = vector.load %arg8[%c0_13, %c0_14] : memref<4x1xf32, #tpu.memory_space<vmem>>, vector<4x1xf32>
    %12 = vector.broadcast %11 : vector<4x1xf32> to vector<4x128xf32>
    %13 = arith.addf %10, %12 : vector<4x128xf32>
    %14 = vector.broadcast %1 : vector<1x128xf32> to vector<4x128xf32>
    %15 = arith.mulf %13, %14 : vector<4x128xf32>
    %c0_15 = arith.constant 0 : index
    %c0_16 = arith.constant 0 : index
    %16 = vector.load %arg6[%c0_15, %c0_16] : memref<4x4xf32, #tpu.memory_space<vmem>>, vector<4x4xf32>
    %cst_17 = arith.constant dense<0.000000e+00> : vector<4x128xf32>
    %17 = tpu.matmul %16, %3, %cst_17 {dimension_numbers = #tpu.dot_dimension_numbers<[1], [0], [0], [1], [0, 0, 1, 1], [], []>} : vector<4x4xf32>, vector<4x128xf32>, vector<4x128xf32> -> vector<4x128xf32>
    %c0_18 = arith.constant 0 : index
    %c0_19 = arith.constant 0 : index
    %18 = vector.load %arg7[%c0_18, %c0_19] : memref<4x4xf32, #tpu.memory_space<vmem>>, vector<4x4xf32>
    %cst_20 = arith.constant dense<0.000000e+00> : vector<4x128xf32>
    %19 = tpu.matmul %18, %5, %cst_20 {dimension_numbers = #tpu.dot_dimension_numbers<[1], [0], [0], [1], [0, 0, 1, 1], [], []>} : vector<4x4xf32>, vector<4x128xf32>, vector<4x128xf32> -> vector<4x128xf32>
    %20 = arith.addf %17, %19 : vector<4x128xf32>
    %c0_21 = arith.constant 0 : index
    %c0_22 = arith.constant 0 : index
    %21 = vector.load %arg9[%c0_21, %c0_22] : memref<4x1xf32, #tpu.memory_space<vmem>>, vector<4x1xf32>
    %22 = vector.broadcast %21 : vector<4x1xf32> to vector<4x128xf32>
    %23 = arith.addf %20, %22 : vector<4x128xf32>
    %24 = vector.broadcast %1 : vector<1x128xf32> to vector<4x128xf32>
    %25 = arith.mulf %23, %24 : vector<4x128xf32>
    %c0_23 = arith.constant 0 : index
    %c0_24 = arith.constant 0 : index
    %26 = vector.load %arg10[%c0_23, %c0_24] : memref<32x4xf32, #tpu.memory_space<vmem>>, vector<32x4xf32>
    %cst_25 = arith.constant dense<0.000000e+00> : vector<32x128xf32>
    %27 = tpu.matmul %26, %15, %cst_25 {dimension_numbers = #tpu.dot_dimension_numbers<[1], [0], [0], [1], [0, 0, 1, 1], [], []>} : vector<32x4xf32>, vector<4x128xf32>, vector<32x128xf32> -> vector<32x128xf32>
    %c0_26 = arith.constant 0 : index
    %c0_27 = arith.constant 0 : index
    %28 = vector.load %arg11[%c0_26, %c0_27] : memref<32x1xf32, #tpu.memory_space<vmem>>, vector<32x1xf32>
    %29 = vector.broadcast %28 : vector<32x1xf32> to vector<32x128xf32>
    %30 = arith.addf %27, %29 : vector<32x128xf32>
    %31 = vector.broadcast %1 : vector<1x128xf32> to vector<32x128xf32>
    %32 = arith.mulf %30, %31 : vector<32x128xf32>
    %cst_28 = arith.constant 0.000000e+00 : f32
    %33 = vector.broadcast %cst_28 : f32 to vector<32x128xf32>
    %c1_i32 = arith.constant 1 : i32
    %34 = tpu.dynamic_rotate %32 by %c1_i32 dim 1 : vector<32x128xf32>, i32 -> vector<32x128xf32>
    %c127_i32 = arith.constant 127 : i32
    %35 = tpu.dynamic_rotate %32 by %c127_i32 dim 1 : vector<32x128xf32>, i32 -> vector<32x128xf32>
    %36 = tpu.concatenate %34, %32, %35 in 0 : vector<32x128xf32>, vector<32x128xf32>, vector<32x128xf32> -> vector<96x128xf32>
    %c0_29 = arith.constant 0 : index
    %c0_30 = arith.constant 0 : index
    %c0_31 = arith.constant 0 : index
    %37 = vector.load %arg12[%c0_29, %c0_30, %c0_31] : memref<2x64x96xf32, #tpu.memory_space<vmem>>, vector<1x64x96xf32>
    %38 = vector.shape_cast %37 : vector<1x64x96xf32> to vector<64x96xf32>
    %cst_32 = arith.constant dense<0.000000e+00> : vector<64x128xf32>
    %39 = tpu.matmul %38, %36, %cst_32 {dimension_numbers = #tpu.dot_dimension_numbers<[1], [0], [0], [1], [0, 0, 1, 1], [], []>} : vector<64x96xf32>, vector<96x128xf32>, vector<64x128xf32> -> vector<64x128xf32>
    %c0_33 = arith.constant 0 : index
    %c0_34 = arith.constant 0 : index
    %c0_35 = arith.constant 0 : index
    %40 = vector.load %arg13[%c0_33, %c0_34, %c0_35] : memref<2x64x1xf32, #tpu.memory_space<vmem>>, vector<1x64x1xf32>
    %41 = vector.shape_cast %40 : vector<1x64x1xf32> to vector<64x1xf32>
    %42 = vector.broadcast %41 : vector<64x1xf32> to vector<64x128xf32>
    %43 = arith.addf %39, %42 : vector<64x128xf32>
    %44 = vector.extract_strided_slice %43 {offsets = [0, 0], sizes = [32, 128], strides = [1, 1]} : vector<64x128xf32> to vector<32x128xf32>
    %45 = math.tanh %44 : vector<32x128xf32>
    %46 = vector.extract_strided_slice %43 {offsets = [32, 0], sizes = [32, 128], strides = [1, 1]} : vector<64x128xf32> to vector<32x128xf32>
    %47 = arith.negf %46 : vector<32x128xf32>
    %48 = math.exp %47 : vector<32x128xf32>
    %cst_36 = arith.constant 1.000000e+00 : f32
    %49 = vector.broadcast %cst_36 : f32 to vector<32x128xf32>
    %50 = arith.addf %49, %48 : vector<32x128xf32>
    %51 = arith.divf %49, %50 : vector<32x128xf32>
    %52 = arith.mulf %45, %51 : vector<32x128xf32>
    %c0_37 = arith.constant 0 : index
    %c0_38 = arith.constant 0 : index
    %c0_39 = arith.constant 0 : index
    %53 = vector.load %arg14[%c0_37, %c0_38, %c0_39] : memref<2x64x32xf32, #tpu.memory_space<vmem>>, vector<1x64x32xf32>
    %54 = vector.shape_cast %53 : vector<1x64x32xf32> to vector<64x32xf32>
    %cst_40 = arith.constant dense<0.000000e+00> : vector<64x128xf32>
    %55 = tpu.matmul %54, %52, %cst_40 {dimension_numbers = #tpu.dot_dimension_numbers<[1], [0], [0], [1], [0, 0, 1, 1], [], []>} : vector<64x32xf32>, vector<32x128xf32>, vector<64x128xf32> -> vector<64x128xf32>
    %c0_41 = arith.constant 0 : index
    %c0_42 = arith.constant 0 : index
    %c0_43 = arith.constant 0 : index
    %56 = vector.load %arg15[%c0_41, %c0_42, %c0_43] : memref<2x64x1xf32, #tpu.memory_space<vmem>>, vector<1x64x1xf32>
    %57 = vector.shape_cast %56 : vector<1x64x1xf32> to vector<64x1xf32>
    %58 = vector.broadcast %57 : vector<64x1xf32> to vector<64x128xf32>
    %59 = arith.addf %55, %58 : vector<64x128xf32>
    %60 = vector.extract_strided_slice %59 {offsets = [0, 0], sizes = [32, 128], strides = [1, 1]} : vector<64x128xf32> to vector<32x128xf32>
    %61 = arith.addf %32, %60 : vector<32x128xf32>
    %62 = vector.broadcast %1 : vector<1x128xf32> to vector<32x128xf32>
    %63 = arith.mulf %61, %62 : vector<32x128xf32>
    %64 = vector.extract_strided_slice %59 {offsets = [32, 0], sizes = [32, 128], strides = [1, 1]} : vector<64x128xf32> to vector<32x128xf32>
    %65 = arith.addf %33, %64 : vector<32x128xf32>
    %c2_i32 = arith.constant 2 : i32
    %66 = tpu.dynamic_rotate %63 by %c2_i32 dim 1 : vector<32x128xf32>, i32 -> vector<32x128xf32>
    %c126_i32 = arith.constant 126 : i32
    %67 = tpu.dynamic_rotate %63 by %c126_i32 dim 1 : vector<32x128xf32>, i32 -> vector<32x128xf32>
    %68 = tpu.concatenate %66, %63, %67 in 0 : vector<32x128xf32>, vector<32x128xf32>, vector<32x128xf32> -> vector<96x128xf32>
    %c1 = arith.constant 1 : index
    %c0_44 = arith.constant 0 : index
    %c0_45 = arith.constant 0 : index
    %69 = vector.load %arg12[%c1, %c0_44, %c0_45] : memref<2x64x96xf32, #tpu.memory_space<vmem>>, vector<1x64x96xf32>
    %70 = vector.shape_cast %69 : vector<1x64x96xf32> to vector<64x96xf32>
    %cst_46 = arith.constant dense<0.000000e+00> : vector<64x128xf32>
    %71 = tpu.matmul %70, %68, %cst_46 {dimension_numbers = #tpu.dot_dimension_numbers<[1], [0], [0], [1], [0, 0, 1, 1], [], []>} : vector<64x96xf32>, vector<96x128xf32>, vector<64x128xf32> -> vector<64x128xf32>
    %c1_47 = arith.constant 1 : index
    %c0_48 = arith.constant 0 : index
    %c0_49 = arith.constant 0 : index
    %72 = vector.load %arg13[%c1_47, %c0_48, %c0_49] : memref<2x64x1xf32, #tpu.memory_space<vmem>>, vector<1x64x1xf32>
    %73 = vector.shape_cast %72 : vector<1x64x1xf32> to vector<64x1xf32>
    %74 = vector.broadcast %73 : vector<64x1xf32> to vector<64x128xf32>
    %75 = arith.addf %71, %74 : vector<64x128xf32>
    %76 = vector.extract_strided_slice %75 {offsets = [0, 0], sizes = [32, 128], strides = [1, 1]} : vector<64x128xf32> to vector<32x128xf32>
    %77 = math.tanh %76 : vector<32x128xf32>
    %78 = vector.extract_strided_slice %75 {offsets = [32, 0], sizes = [32, 128], strides = [1, 1]} : vector<64x128xf32> to vector<32x128xf32>
    %79 = arith.negf %78 : vector<32x128xf32>
    %80 = math.exp %79 : vector<32x128xf32>
    %cst_50 = arith.constant 1.000000e+00 : f32
    %81 = vector.broadcast %cst_50 : f32 to vector<32x128xf32>
    %82 = arith.addf %81, %80 : vector<32x128xf32>
    %83 = arith.divf %81, %82 : vector<32x128xf32>
    %84 = arith.mulf %77, %83 : vector<32x128xf32>
    %c1_51 = arith.constant 1 : index
    %c0_52 = arith.constant 0 : index
    %c0_53 = arith.constant 0 : index
    %85 = vector.load %arg14[%c1_51, %c0_52, %c0_53] : memref<2x64x32xf32, #tpu.memory_space<vmem>>, vector<1x64x32xf32>
    %86 = vector.shape_cast %85 : vector<1x64x32xf32> to vector<64x32xf32>
    %cst_54 = arith.constant dense<0.000000e+00> : vector<64x128xf32>
    %87 = tpu.matmul %86, %84, %cst_54 {dimension_numbers = #tpu.dot_dimension_numbers<[1], [0], [0], [1], [0, 0, 1, 1], [], []>} : vector<64x32xf32>, vector<32x128xf32>, vector<64x128xf32> -> vector<64x128xf32>
    %c1_55 = arith.constant 1 : index
    %c0_56 = arith.constant 0 : index
    %c0_57 = arith.constant 0 : index
    %88 = vector.load %arg15[%c1_55, %c0_56, %c0_57] : memref<2x64x1xf32, #tpu.memory_space<vmem>>, vector<1x64x1xf32>
    %89 = vector.shape_cast %88 : vector<1x64x1xf32> to vector<64x1xf32>
    %90 = vector.broadcast %89 : vector<64x1xf32> to vector<64x128xf32>
    %91 = arith.addf %87, %90 : vector<64x128xf32>
    %92 = vector.extract_strided_slice %91 {offsets = [32, 0], sizes = [32, 128], strides = [1, 1]} : vector<64x128xf32> to vector<32x128xf32>
    %93 = arith.addf %65, %92 : vector<32x128xf32>
    %94 = vector.broadcast %1 : vector<1x128xf32> to vector<32x128xf32>
    %95 = arith.mulf %93, %94 : vector<32x128xf32>
    %c0_58 = arith.constant 0 : index
    %c0_59 = arith.constant 0 : index
    %96 = vector.load %arg16[%c0_58, %c0_59] : memref<4x32xf32, #tpu.memory_space<vmem>>, vector<4x32xf32>
    %cst_60 = arith.constant dense<0.000000e+00> : vector<4x128xf32>
    %97 = tpu.matmul %96, %95, %cst_60 {dimension_numbers = #tpu.dot_dimension_numbers<[1], [0], [0], [1], [0, 0, 1, 1], [], []>} : vector<4x32xf32>, vector<32x128xf32>, vector<4x128xf32> -> vector<4x128xf32>
    %c0_61 = arith.constant 0 : index
    %c0_62 = arith.constant 0 : index
    %98 = vector.load %arg17[%c0_61, %c0_62] : memref<4x1xf32, #tpu.memory_space<vmem>>, vector<4x1xf32>
    %99 = vector.broadcast %98 : vector<4x1xf32> to vector<4x128xf32>
    %100 = arith.addf %97, %99 : vector<4x128xf32>
    %c0_63 = arith.constant 0 : index
    %c0_64 = arith.constant 0 : index
    %101 = vector.load %arg18[%c0_63, %c0_64] : memref<4x32xf32, #tpu.memory_space<vmem>>, vector<4x32xf32>
    %cst_65 = arith.constant dense<0.000000e+00> : vector<4x128xf32>
    %102 = tpu.matmul %101, %95, %cst_65 {dimension_numbers = #tpu.dot_dimension_numbers<[1], [0], [0], [1], [0, 0, 1, 1], [], []>} : vector<4x32xf32>, vector<32x128xf32>, vector<4x128xf32> -> vector<4x128xf32>
    %c0_66 = arith.constant 0 : index
    %c0_67 = arith.constant 0 : index
    %103 = vector.load %arg19[%c0_66, %c0_67] : memref<4x1xf32, #tpu.memory_space<vmem>>, vector<4x1xf32>
    %104 = vector.broadcast %103 : vector<4x1xf32> to vector<4x128xf32>
    %105 = arith.addf %102, %104 : vector<4x128xf32>
    %c0_68 = arith.constant 0 : index
    %c0_69 = arith.constant 0 : index
    %c0_70 = arith.constant 0 : index
    %106 = vector.load %arg20[%c0_68, %c0_69, %c0_70] : memref<1x4x128xf32, #tpu.memory_space<vmem>>, vector<1x4x128xf32>
    %107 = vector.shape_cast %106 : vector<1x4x128xf32> to vector<4x128xf32>
    %108 = vector.shape_cast %15 : vector<4x128xf32> to vector<1x4x128xf32>
    tpu.vector_store %arg20[%c0_68, %c0_69, %c0_70], %108 {strides = array<i32>} : memref<1x4x128xf32, #tpu.memory_space<vmem>>, vector<1x4x128xf32>,
    %109 = math.exp %105 : vector<4x128xf32>
    %110 = arith.mulf %109, %25 : vector<4x128xf32>
    %111 = arith.addf %100, %110 : vector<4x128xf32>
    %112 = vector.broadcast %1 : vector<1x128xf32> to vector<4x128xf32>
    %113 = arith.mulf %111, %112 : vector<4x128xf32>
    %c0_71 = arith.constant 0 : index
    %c0_72 = arith.constant 0 : index
    %c0_73 = arith.constant 0 : index
    %114 = vector.load %arg21[%c0_71, %c0_72, %c0_73] : memref<1x4x128xf32, #tpu.memory_space<vmem>>, vector<1x4x128xf32>
    %115 = vector.shape_cast %114 : vector<1x4x128xf32> to vector<4x128xf32>
    %116 = vector.shape_cast %113 : vector<4x128xf32> to vector<1x4x128xf32>
    tpu.vector_store %arg21[%c0_71, %c0_72, %c0_73], %116 {strides = array<i32>} : memref<1x4x128xf32, #tpu.memory_space<vmem>>, vector<1x4x128xf32>,
    %117 = vector.broadcast %1 : vector<1x128xf32> to vector<4x128xf32>
    %118 = arith.mulf %105, %117 : vector<4x128xf32>
    %cst_74 = arith.constant dense<0.000000e+00> : vector<128xf32>
    %119 = vector.multi_reduction <add>, %118, %cst_74 [0] : vector<4x128xf32> to vector<128xf32>
    %120 = vector.shape_cast %119 : vector<128xf32> to vector<1x128xf32>
    %c0_75 = arith.constant 0 : index
    %c0_76 = arith.constant 0 : index
    %c0_77 = arith.constant 0 : index
    %121 = vector.load %arg22[%c0_75, %c0_76, %c0_77] : memref<1x1x128xf32, #tpu.memory_space<vmem>>, vector<1x1x128xf32>
    %122 = vector.shape_cast %121 : vector<1x1x128xf32> to vector<1x128xf32>
    %123 = vector.shape_cast %120 : vector<1x128xf32> to vector<1x1x128xf32>
    tpu.vector_store %arg22[%c0_75, %c0_76, %c0_77], %123 {strides = array<i32>} : memref<1x1x128xf32, #tpu.memory_space<vmem>>, vector<1x1x128xf32>,
    return
  }
  func.func @transform_0(%arg0: i32) -> (i32, i32, i32) {
    %c0_i32 = arith.constant 0 : i32
    %c0_i32_0 = arith.constant 0 : i32
    %c0_i32_1 = arith.constant 0 : i32
    return %arg0, %c0_i32, %c0_i32_0 : i32, i32, i32
  }
  func.func @transform_1(%arg0: i32) -> (i32, i32, i32) {
    %c0_i32 = arith.constant 0 : i32
    %c0_i32_0 = arith.constant 0 : i32
    %c0_i32_1 = arith.constant 0 : i32
    return %arg0, %c0_i32, %c0_i32_0 : i32, i32, i32
  }
  func.func @transform_2(%arg0: i32) -> (i32, i32, i32) {
    %c0_i32 = arith.constant 0 : i32
    %c0_i32_0 = arith.constant 0 : i32
    %c0_i32_1 = arith.constant 0 : i32
    return %arg0, %c0_i32, %c0_i32_0 : i32, i32, i32
  }
  func.func @transform_3(%arg0: i32) -> (i32, i32) {
    %c0_i32 = arith.constant 0 : i32
    %c0_i32_0 = arith.constant 0 : i32
    %c0_i32_1 = arith.constant 0 : i32
    return %c0_i32, %c0_i32_0 : i32, i32
  }
  func.func @transform_4(%arg0: i32) -> (i32, i32) {
    %c0_i32 = arith.constant 0 : i32
    %c0_i32_0 = arith.constant 0 : i32
    %c0_i32_1 = arith.constant 0 : i32
    return %c0_i32, %c0_i32_0 : i32, i32
  }
  func.func @transform_5(%arg0: i32) -> (i32, i32) {
    %c0_i32 = arith.constant 0 : i32
    %c0_i32_0 = arith.constant 0 : i32
    %c0_i32_1 = arith.constant 0 : i32
    return %c0_i32, %c0_i32_0 : i32, i32
  }
  func.func @transform_6(%arg0: i32) -> (i32, i32) {
    %c0_i32 = arith.constant 0 : i32
    %c0_i32_0 = arith.constant 0 : i32
    %c0_i32_1 = arith.constant 0 : i32
    return %c0_i32, %c0_i32_0 : i32, i32
  }
  func.func @transform_7(%arg0: i32) -> (i32, i32) {
    %c0_i32 = arith.constant 0 : i32
    %c0_i32_0 = arith.constant 0 : i32
    %c0_i32_1 = arith.constant 0 : i32
    return %c0_i32, %c0_i32_0 : i32, i32
  }
  func.func @transform_8(%arg0: i32) -> (i32, i32) {
    %c0_i32 = arith.constant 0 : i32
    %c0_i32_0 = arith.constant 0 : i32
    %c0_i32_1 = arith.constant 0 : i32
    return %c0_i32, %c0_i32_0 : i32, i32
  }
  func.func @transform_9(%arg0: i32) -> (i32, i32) {
    %c0_i32 = arith.constant 0 : i32
    %c0_i32_0 = arith.constant 0 : i32
    %c0_i32_1 = arith.constant 0 : i32
    return %c0_i32, %c0_i32_0 : i32, i32
  }
  func.func @transform_10(%arg0: i32) -> (i32, i32) {
    %c0_i32 = arith.constant 0 : i32
    %c0_i32_0 = arith.constant 0 : i32
    %c0_i32_1 = arith.constant 0 : i32
    return %c0_i32, %c0_i32_0 : i32, i32
  }
  func.func @transform_11(%arg0: i32) -> (i32, i32, i32) {
    %c0_i32 = arith.constant 0 : i32
    %c0_i32_0 = arith.constant 0 : i32
    %c0_i32_1 = arith.constant 0 : i32
    %c0_i32_2 = arith.constant 0 : i32
    return %c0_i32, %c0_i32_0, %c0_i32_1 : i32, i32, i32
  }
  func.func @transform_12(%arg0: i32) -> (i32, i32, i32) {
    %c0_i32 = arith.constant 0 : i32
    %c0_i32_0 = arith.constant 0 : i32
    %c0_i32_1 = arith.constant 0 : i32
    %c0_i32_2 = arith.constant 0 : i32
    return %c0_i32, %c0_i32_0, %c0_i32_1 : i32, i32, i32
  }
  func.func @transform_13(%arg0: i32) -> (i32, i32, i32) {
    %c0_i32 = arith.constant 0 : i32
    %c0_i32_0 = arith.constant 0 : i32
    %c0_i32_1 = arith.constant 0 : i32
    %c0_i32_2 = arith.constant 0 : i32
    return %c0_i32, %c0_i32_0, %c0_i32_1 : i32, i32, i32
  }
  func.func @transform_14(%arg0: i32) -> (i32, i32, i32) {
    %c0_i32 = arith.constant 0 : i32
    %c0_i32_0 = arith.constant 0 : i32
    %c0_i32_1 = arith.constant 0 : i32
    %c0_i32_2 = arith.constant 0 : i32
    return %c0_i32, %c0_i32_0, %c0_i32_1 : i32, i32, i32
  }
  func.func @transform_15(%arg0: i32) -> (i32, i32) {
    %c0_i32 = arith.constant 0 : i32
    %c0_i32_0 = arith.constant 0 : i32
    %c0_i32_1 = arith.constant 0 : i32
    return %c0_i32, %c0_i32_0 : i32, i32
  }
  func.func @transform_16(%arg0: i32) -> (i32, i32) {
    %c0_i32 = arith.constant 0 : i32
    %c0_i32_0 = arith.constant 0 : i32
    %c0_i32_1 = arith.constant 0 : i32
    return %c0_i32, %c0_i32_0 : i32, i32
  }
  func.func @transform_17(%arg0: i32) -> (i32, i32) {
    %c0_i32 = arith.constant 0 : i32
    %c0_i32_0 = arith.constant 0 : i32
    %c0_i32_1 = arith.constant 0 : i32
    return %c0_i32, %c0_i32_0 : i32, i32
  }
  func.func @transform_18(%arg0: i32) -> (i32, i32) {
    %c0_i32 = arith.constant 0 : i32
    %c0_i32_0 = arith.constant 0 : i32
    %c0_i32_1 = arith.constant 0 : i32
    return %c0_i32, %c0_i32_0 : i32, i32
  }
  func.func @transform_19(%arg0: i32) -> (i32, i32, i32) {
    %c0_i32 = arith.constant 0 : i32
    %c0_i32_0 = arith.constant 0 : i32
    %c0_i32_1 = arith.constant 0 : i32
    return %arg0, %c0_i32, %c0_i32_0 : i32, i32, i32
  }
  func.func @transform_20(%arg0: i32) -> (i32, i32, i32) {
    %c0_i32 = arith.constant 0 : i32
    %c0_i32_0 = arith.constant 0 : i32
    %c0_i32_1 = arith.constant 0 : i32
    return %arg0, %c0_i32, %c0_i32_0 : i32, i32, i32
  }
  func.func @transform_21(%arg0: i32) -> (i32, i32, i32) {
    %c0_i32 = arith.constant 0 : i32
    %c0_i32_0 = arith.constant 0 : i32
    %c0_i32_1 = arith.constant 0 : i32
    return %arg0, %c0_i32, %c0_i32_0 : i32, i32, i32
  }
}

</mosaic_0001>

<llo_original>
// kernel: custom-call.15
$region0: #{custom-call.15}
  %s0 = inlined_call_operand.vmem [shape: f32[4,4], index: 0, kind: input, shape index: {}]
  %s1 = inlined_call_operand.vmem [shape: f32[4,4], index: 1, kind: output, shape index: {0}]
  %s2 = inlined_call_operand.hbm [shape: s32[4], index: 2, kind: output, shape index: {1}]
  %s3 = inlined_call_operand.hbm [shape: s32[4], index: 3, kind: output, shape index: {2}]
  %4 = xla_tuple %s1, %s2, %s3
  $region1: #{custom-call.15} parent=0
    #allocation0 [shape = 'u8[4096]{0}', space=vmem, size = 0x1000, scoped, tag = 'operand span for operand 0']
    #allocation1 [shape = 'u8[2048]{0}', space=vmem, size = 0x800, scoped, tag = 'packed  for operand 0']
    #allocation2 [shape = 'u8[4096]{0}', space=vmem, size = 0x1000, scoped, tag = 'operand span for operand 1']
    #allocation3 [shape = 'u8[2048]{0}', space=vmem, size = 0x800, scoped, tag = 'packed  for operand 1']
    #allocation4 [shape = 'u8[4096]{0}', space=vmem, size = 0x1000, scoped, tag = 'operand span for operand 2']
    #allocation5 [shape = 'u8[512]{0}', space=vmem, size = 0x400, scoped, tag = 'packed  for operand 2']
    #allocation6 [shape = 's32[1]{0}', space=sflag, size = 0x4, scoped, tag = 'scoped memory for custom-call.15']
    #allocation7 [shape = 'u8[4096]{0}', space=vmem, size = 0x1000, scoped, tag = 'operand span for operand 3']
    #allocation8 [shape = 'u8[512]{0}', space=vmem, size = 0x400, scoped, tag = 'packed  for operand 3']
    #allocation9 [shape = 's32[1]{0}', space=sflag, size = 0x4, scoped, tag = 'scoped memory for custom-call.15']
    #allocation10 [shape = 's32[4,128]{1,0}', space=vmem, size = 0x1000, scoped, tag = 'scratch for permutations']
    %5 = vsyncpa [#allocation6], 0
    %6 = vsyncpa [#allocation9], 0
    %p8 = scmp.gt.s32.totalorder 4, 0
    // Predicated region
    $region2: #{custom-call.15} parent=1 // pred_check
      %p9 = pneg %p8
    $region3: #{custom-call.15} parent=1 // pred_check_branch
      %11 = sbr.rel (%p9) target = $region5
    $region4: #{custom-call.15} parent=1 // pred_region
      %s12 = sshra.s32 4, 3
      %p13 = scmp.gt.s32.totalorder %s12, 0
      // Predicated region
      $region6: #{custom-call.15} parent=4 // pred_check
        %p14 = pneg %p13
      $region7: #{custom-call.15} parent=4 // pred_check_branch
        %16 = sbr.rel (%p14) target = $region9
      $region8: #{custom-call.15} parent=4 // pred_region
        %s17 = ssub.s32 %s12, 1
        %s18 = smul.u32 %s17, 128
        %s19 = sshra.s32 %s18, 4
        %s20 = scalar_lea.vmem %s0, %s19
        %v21 = vld [vmem:[%s0] sm:$0xff]
        // While loop
        $region10: #{custom-call.15} parent=8 // loop_pre_header
          _
        $region11: #{custom-call.15} parent=8 // loop_header
          %s22 = sphi %s0, %s44
          %s23 = sphi [#allocation1], %s45
          %v24 = vphi %v21, %v46
          %s25 = ssub.s32 %s20, 64
          %p26 = scmp.gt.s32.totalorder %s22, %s25
        $region12: #{custom-call.15} parent=8 // loop_header_branch
          %28 = sbr.rel (%p26) target = $region16
        $region13: #{custom-call.15} parent=8 // loop_body
          %29 = vst [vmem:[%s23] sm:$0xff] %v24
          %v30 = vld [vmem:[%s22 + $0x8] sm:$0xff]
          %31 = vst [vmem:[%s23 + $0x8] sm:$0xff] %v30
          %v32 = vld [vmem:[%s22 + $0x10] sm:$0xff]
          %33 = vst [vmem:[%s23 + $0x10] sm:$0xff] %v32
          %v34 = vld [vmem:[%s22 + $0x18] sm:$0xff]
          %35 = vst [vmem:[%s23 + $0x18] sm:$0xff] %v34
          %v36 = vld [vmem:[%s22 + $0x20] sm:$0xff]
          %37 = vst [vmem:[%s23 + $0x20] sm:$0xff] %v36
          %v38 = vld [vmem:[%s22 + $0x28] sm:$0xff]
          %39 = vst [vmem:[%s23 + $0x28] sm:$0xff] %v38
          %v40 = vld [vmem:[%s22 + $0x30] sm:$0xff]
          %41 = vst [vmem:[%s23 + $0x30] sm:$0xff] %v40
          %v42 = vld [vmem:[%s22 + $0x38] sm:$0xff]
          %43 = vst [vmem:[%s23 + $0x38] sm:$0xff] %v42
        $region14: #{custom-call.15} parent=8 // loop_footer
          %s44 = scalar_lea.vmem %s22, 64
          %s45 = scalar_lea.vmem %s23, 64
          %v46 = vld [vmem:[%s22 + $0x40] sm:$0xff]
        $region15: #{custom-call.15} parent=8 // loop_footer_branch
          %47 = sbr.rel target = $region11
        $region16: #{custom-call.15} parent=8 // loop_exit
          _
        // While loop
        $region17: #{custom-call.15} parent=8 // loop_pre_header
          _
        $region18: #{custom-call.15} parent=8 // loop_header
          %s48 = sphi %s22, %s56
          %s49 = sphi %s23, %s57
          %v50 = vphi %v24, %v50
          %p51 = scmp.gt.s32.totalorder %s48, %s20
        $region19: #{custom-call.15} parent=8 // loop_header_branch
          %53 = sbr.rel (%p51) target = $region23
        $region20: #{custom-call.15} parent=8 // loop_body
          %v54 = vld [vmem:[%s48] sm:$0xff]
          %55 = vst [vmem:[%s49] sm:$0xff] %v54
        $region21: #{custom-call.15} parent=8 // loop_footer
          %s56 = scalar_lea.vmem %s48, 8
          %s57 = scalar_lea.vmem %s49, 8
        $region22: #{custom-call.15} parent=8 // loop_footer_branch
          %58 = sbr.rel target = $region18
        $region23: #{custom-call.15} parent=8 // loop_exit
          _
      $region9: #{custom-call.15} parent=4 // pred_fallthru
        _
      %s59 = sand.u32 4, 7
      %s60 = sshllo.u32 0, %s59
      %s61 = smul.u32 %s12, 128
      %s62 = sshra.s32 %s61, 4
      %s63 = scalar_lea.vmem [#allocation1], %s62
      %s64 = smul.u32 %s12, 128
      %s65 = sshra.s32 %s64, 4
      %s66 = scalar_lea.vmem %s0, %s65
      %v67 = vld [vmem:[%s66] sm:%s60]
      %68 = vst [vmem:[%s63] sm:%s60] %v67
    $region5: #{custom-call.15} parent=1 // pred_fallthru
      _
    %s70 = sshllo.u32 0, 4
    %v71 = vld [vmem:[#allocation1] sm:%s70]
    %72 = vst [vmem:[#allocation0] sm:%s70] %v71
    %v73 = vld [vmem:[#allocation0] sm:$0xff]
    %74 = vst [vmem:[#allocation2] sm:$0xff] %v73
    %75 = vst [vmem:[#allocation4] sm:$0x1] 0
    %v76 = vlaneseq
    %v77 = vshrl.u32 %v76, 7
    %v78 = vmov %v77
    %80 = vst [vmem:[#allocation10] sm:$0xff] %v78
    loop: start=0, step=1, limit=4
    $region25: #{custom-call.15} parent=1 // loop_pre_header
      _
    $region26: #{custom-call.15} parent=1 // loop_header
      %s82 = sphi 0, %s86
      %p83 = scmp.ge.s32.totalorder %s82, 4
    $region27: #{custom-call.15} parent=1 // loop_header_branch
      %85 = sbr.rel (%p83) target = $region31
    $region28: #{custom-call.15} parent=1 // loop_body
      %v87 = vstv %s82
      %v88 = vlaneseq
      %v89 = vshrl.u32 %v88, 7
      %v90 = vmov %v89
      %v91 = vld [vmem:[#allocation2] sm:$0xff]
      %v92 = vand.u32 2147483647, %v91
      %v94 = vstv %s82
      %vm95 = vcmp.ge.s32.totalorder %v90, %v94
      %vm96 = vcmp.lt.s32.totalorder %v90, 4
      %vm97 = vmand %vm95, %vm96
      %vm98 = vcmp.lt.f32.partialorder -inf, %v92
      %vm99 = vmand %vm97, %vm98
      %v100 = vsel %vm99, %v90, %v87
      %v101 = vsel %vm99, %v92, -inf
      %v102 = vrot.slane %v101, 1
      %v103 = vrot.slane %v100, 1
      %vm104 = vcmp.ge.f32.partialorder %v102, %v101
      %v105 = vsel %vm104, %v102, %v101
      %v106 = vsel %vm104, %v103, %v100
      %v107 = vrot.slane %v102, 1
      %v108 = vrot.slane %v103, 1
      %vm109 = vcmp.ge.f32.partialorder %v107, %v105
      %v110 = vsel %vm109, %v107, %v105
      %v111 = vsel %vm109, %v108, %v106
      %v112 = vrot.slane %v107, 1
      %v113 = vrot.slane %v108, 1
      %vm114 = vcmp.ge.f32.partialorder %v112, %v110
      %v115 = vsel %vm114, %v112, %v110
      %v116 = vsel %vm114, %v113, %v111
      %v117 = vrot.slane %v112, 1
      %v118 = vrot.slane %v113, 1
      %vm119 = vcmp.ge.f32.partialorder %v117, %v115
      %v120 = vsel %vm119, %v117, %v115
      %v121 = vsel %vm119, %v118, %v116
      %v122 = vrot.slane %v117, 1
      %v123 = vrot.slane %v118, 1
      %vm124 = vcmp.ge.f32.partialorder %v122, %v120
      %v125 = vsel %vm124, %v122, %v120
      %v126 = vsel %vm124, %v123, %v121
      %v127 = vrot.slane %v122, 1
      %v128 = vrot.slane %v123, 1
      %vm129 = vcmp.ge.f32.partialorder %v127, %v125
      %v130 = vsel %vm129, %v127, %v125
      %v131 = vsel %vm129, %v128, %v126
      %v132 = vrot.slane %v127, 1
      %v133 = vrot.slane %v128, 1
      %vm134 = vcmp.ge.f32.partialorder %v132, %v130
      %v135 = vsel %vm134, %v132, %v130
      %v136 = vsel %vm134, %v133, %v131
      %s137 = ssub.s32 128, %s82
      %138 = vrot.lane.b32.xlu0 %v136, %s137
      %v139 = vpop.permute.xlu0 %138
      %s140 = vtos %v139
      %v141 = vstv %s82
      %v142 = vlaneseq
      %v143 = vand.u32 %v142, 127
      %vm144 = vcmp.eq.s32.totalorder %v143, %v141
      %v145 = vstv %s140
      %v146 = vld [vmem:[#allocation4] ss:$0 sm:$0xff]
      %v147 = vsel %vm144, %v145, %v146
      %148 = vst [vmem:[#allocation4] sm:$0x1] %v147
      %s149 = scalar_lea.vmem [#allocation2], %s82
      %s150 = scalar_lea.vmem [#allocation2], %s140
      %v151 = vld [vmem:[%s149] ss:$0 sm:$0xff]
      %v152 = vld [vmem:[%s150] ss:$0 sm:$0xff]
      %153 = vst [vmem:[%s150] sm:$0x1] %v151
      %154 = vst [vmem:[%s149] sm:$0x1] %v152
      %s155 = scalar_lea.vmem [#allocation10], %s82
      %s156 = scalar_lea.vmem [#allocation10], %s140
      %v157 = vld [vmem:[%s155] ss:$0 sm:$0xff]
      %v158 = vld [vmem:[%s156] ss:$0 sm:$0xff]
      %159 = vst [vmem:[%s156] sm:$0x1] %v157
      %160 = vst [vmem:[%s155] sm:$0x1] %v158
      %vm161 = vcmp.ne.f32.partialorder %v152, 0.0
      %vm162 = vmand %vm144, %vm161
      %v163 = vsel %vm162, %v152, 1.0
      %v164 = vlaneseq
      %v165 = vand.u32 %v164, 127
      %v166 = vstv %s82
      %vm167 = vcmp.gt.s32.totalorder %v165, %v166
      %v168 = vsel %vm167, %v152, 0.0
      %v169 = vlaneseq
      %v170 = vshrl.u32 %v169, 7
      %v171 = vmov %v170
      %v172 = vld [vmem:[#allocation2] sm:$0xff]
      %v174 = vstv %s82
      %vm175 = vcmp.gt.s32.totalorder %v171, %v174
      %v176 = vsel %vm175, %v163, 1.0
      %v177 = vrcp.pop %v176
      %v178 = vmul.f32 %v172, %v177
      %vm179 = vmand %vm175, %vm144
      %v180 = vsel %vm179, %v178, 0.0
      %181 = vadd.xlane.f32.xlu0 %v180
      %v182 = vpop.xlane.xlu0 %181
      %v183 = vmul.f32 %v182, %v168
      %v184 = vsub.f32 %v178, %v183
      %185 = vst [vmem:[#allocation2] sm:$0xff] %v184
    $region29: #{custom-call.15} parent=1 // loop_footer
      %s86 = sadd.s32 1, %s82
    $region30: #{custom-call.15} parent=1 // loop_footer_branch
      %81 = sbr.rel target = $region26
    $region31: #{custom-call.15} parent=1 // loop_exit
      _
    %v186 = vld [vmem:[#allocation10] sm:$0xff]
    %s187 = scalar_lea.vmem [#allocation10], 8
    %s188 = scalar_lea.vmem [#allocation10], 16
    %s189 = scalar_lea.vmem [#allocation10], 24
    %s190 = scalar_lea.vmem [#allocation10], 32
    %s191 = scalar_lea.vmem [#allocation10], 40
    %s192 = scalar_lea.vmem [#allocation10], 48
    %s193 = scalar_lea.vmem [#allocation10], 56
    %s194 = scalar_lea.vmem [#allocation10], 64
    %s195 = scalar_lea.vmem [#allocation10], 72
    %s196 = scalar_lea.vmem [#allocation10], 80
    %s197 = scalar_lea.vmem [#allocation10], 88
    %s198 = scalar_lea.vmem [#allocation10], 96
    %s199 = scalar_lea.vmem [#allocation10], 104
    %s200 = scalar_lea.vmem [#allocation10], 112
    %s201 = scalar_lea.vmem [#allocation10], 120
    %202 = vxpose.xlu0.b32.start [1/16] %v186, 128
    %203 = vxpose.xlu0.b32.cont [2/16] 0, 128
    %204 = vxpose.xlu0.b32.cont [3/16] 0, 128
    %205 = vxpose.xlu0.b32.cont [4/16] 0, 128
    %206 = vxpose.xlu0.b32.cont [5/16] 0, 128
    %207 = vxpose.xlu0.b32.cont [6/16] 0, 128
    %208 = vxpose.xlu0.b32.cont [7/16] 0, 128
    %209 = vxpose.xlu0.b32.cont [8/16] 0, 128
    %210 = vxpose.xlu0.b32.cont [9/16] 0, 128
    %211 = vxpose.xlu0.b32.cont [10/16] 0, 128
    %212 = vxpose.xlu0.b32.cont [11/16] 0, 128
    %213 = vxpose.xlu0.b32.cont [12/16] 0, 128
    %214 = vxpose.xlu0.b32.cont [13/16] 0, 128
    %215 = vxpose.xlu0.b32.cont [14/16] 0, 128
    %216 = vxpose.xlu0.b32.cont [15/16] 0, 128
    %217 = vxpose.xlu0.b32.end [16/16] 0, 128
    %v218 = vpop.trf.xlu0
    %v219 = vpop.trf.xlu0
    %v220 = vpop.trf.xlu0
    %v221 = vpop.trf.xlu0
    %v222 = vpop.trf.xlu0
    %v223 = vpop.trf.xlu0
    %v224 = vpop.trf.xlu0
    %v225 = vpop.trf.xlu0
    %v226 = vpop.trf.xlu0
    %v227 = vpop.trf.xlu0
    %v228 = vpop.trf.xlu0
    %v229 = vpop.trf.xlu0
    %v230 = vpop.trf.xlu0
    %v231 = vpop.trf.xlu0
    %v232 = vpop.trf.xlu0
    %v233 = vpop.trf.xlu0
    %234 = vst [vmem:[#allocation7] sm:$0x1] %v218
    %s236 = sshllo.u32 0, 4
    %v238 = vld [vmem:[#allocation2] sm:%s236]
    %s239 = sshllo.u32 0, 4
    %240 = vst [vmem:[#allocation3] sm:%s239] %v238
    %s242 = sshllo.u32 0, 1
    %v244 = vld [vmem:[#allocation4] sm:%s242]
    %s245 = sshllo.u32 0, 1
    %246 = vst [vmem:[#allocation5] sm:%s245] %v244
    %s248 = sshllo.u32 0, 1
    %v250 = vld [vmem:[#allocation7] sm:%s248]
    %s251 = sshllo.u32 0, 1
    %252 = vst [vmem:[#allocation8] sm:%s251] %v250
    %p254 = scmp.gt.s32.totalorder 4, 0
    // Predicated region
    $region32: #{custom-call.15} parent=1 // pred_check
      %p255 = pneg %p254
    $region33: #{custom-call.15} parent=1 // pred_check_branch
      %257 = sbr.rel (%p255) target = $region35
    $region34: #{custom-call.15} parent=1 // pred_region
      %s258 = sshra.s32 4, 3
      %p259 = scmp.gt.s32.totalorder %s258, 0
      // Predicated region
      $region36: #{custom-call.15} parent=34 // pred_check
        %p260 = pneg %p259
      $region37: #{custom-call.15} parent=34 // pred_check_branch
        %262 = sbr.rel (%p260) target = $region39
      $region38: #{custom-call.15} parent=34 // pred_region
        %s263 = ssub.s32 %s258, 1
        %s264 = smul.u32 %s263, 128
        %s265 = sshra.s32 %s264, 4
        %s266 = scalar_lea.vmem [#allocation3], %s265
        %v267 = vld [vmem:[#allocation3] sm:$0xff]
        // While loop
        $region40: #{custom-call.15} parent=38 // loop_pre_header
          _
        $region41: #{custom-call.15} parent=38 // loop_header
          %s268 = sphi [#allocation3], %s290
          %s269 = sphi %s1, %s291
          %v270 = vphi %v267, %v292
          %s271 = ssub.s32 %s266, 64
          %p272 = scmp.gt.s32.totalorder %s268, %s271
        $region42: #{custom-call.15} parent=38 // loop_header_branch
          %274 = sbr.rel (%p272) target = $region46
        $region43: #{custom-call.15} parent=38 // loop_body
          %275 = vst [vmem:[%s269] sm:$0xff] %v270
          %v276 = vld [vmem:[%s268 + $0x8] sm:$0xff]
          %277 = vst [vmem:[%s269 + $0x8] sm:$0xff] %v276
          %v278 = vld [vmem:[%s268 + $0x10] sm:$0xff]
          %279 = vst [vmem:[%s269 + $0x10] sm:$0xff] %v278
          %v280 = vld [vmem:[%s268 + $0x18] sm:$0xff]
          %281 = vst [vmem:[%s269 + $0x18] sm:$0xff] %v280
          %v282 = vld [vmem:[%s268 + $0x20] sm:$0xff]
          %283 = vst [vmem:[%s269 + $0x20] sm:$0xff] %v282
          %v284 = vld [vmem:[%s268 + $0x28] sm:$0xff]
          %285 = vst [vmem:[%s269 + $0x28] sm:$0xff] %v284
          %v286 = vld [vmem:[%s268 + $0x30] sm:$0xff]
          %287 = vst [vmem:[%s269 + $0x30] sm:$0xff] %v286
          %v288 = vld [vmem:[%s268 + $0x38] sm:$0xff]
          %289 = vst [vmem:[%s269 + $0x38] sm:$0xff] %v288
        $region44: #{custom-call.15} parent=38 // loop_footer
          %s290 = scalar_lea.vmem %s268, 64
          %s291 = scalar_lea.vmem %s269, 64
          %v292 = vld [vmem:[%s268 + $0x40] sm:$0xff]
        $region45: #{custom-call.15} parent=38 // loop_footer_branch
          %293 = sbr.rel target = $region41
        $region46: #{custom-call.15} parent=38 // loop_exit
          _
        // While loop
        $region47: #{custom-call.15} parent=38 // loop_pre_header
          _
        $region48: #{custom-call.15} parent=38 // loop_header
          %s294 = sphi %s268, %s302
          %s295 = sphi %s269, %s303
          %v296 = vphi %v270, %v296
          %p297 = scmp.gt.s32.totalorder %s294, %s266
        $region49: #{custom-call.15} parent=38 // loop_header_branch
          %299 = sbr.rel (%p297) target = $region53
        $region50: #{custom-call.15} parent=38 // loop_body
          %v300 = vld [vmem:[%s294] sm:$0xff]
          %301 = vst [vmem:[%s295] sm:$0xff] %v300
        $region51: #{custom-call.15} parent=38 // loop_footer
          %s302 = scalar_lea.vmem %s294, 8
          %s303 = scalar_lea.vmem %s295, 8
        $region52: #{custom-call.15} parent=38 // loop_footer_branch
          %304 = sbr.rel target = $region48
        $region53: #{custom-call.15} parent=38 // loop_exit
          _
      $region39: #{custom-call.15} parent=34 // pred_fallthru
        _
      %s305 = sand.u32 4, 7
      %s306 = sshllo.u32 0, %s305
      %s307 = smul.u32 %s258, 128
      %s308 = sshra.s32 %s307, 4
      %s309 = scalar_lea.vmem %s1, %s308
      %s310 = smul.u32 %s258, 128
      %s311 = sshra.s32 %s310, 4
      %s312 = scalar_lea.vmem [#allocation3], %s311
      %v313 = vld [vmem:[%s312] sm:%s306]
      %314 = vst [vmem:[%s309] sm:%s306] %v313
    $region35: #{custom-call.15} parent=1 // pred_fallthru
      _
    // Predicated region
    $region54: #{custom-call.15} parent=1 // pred_check
      _
    $region55: #{custom-call.15} parent=1 // pred_check_branch
      %316 = sbr.rel (0) target = $region57
    $region56: #{custom-call.15} parent=1 // pred_region
      %s318 = ssub.s32 16, 16
      %319 = vsyncadd [#allocation6], %s318
      %s320 = sshll.u32 [#allocation5], 4
      %s321 = int_to_ptr.vmem [resolvable:$true] %s320
      %323 = dma.vmem_to_hbm [thread:$0]  %s321, 16, %s2, [#allocation6]
    $region57: #{custom-call.15} parent=1 // pred_fallthru
      _
    // Predicated region
    $region58: #{custom-call.15} parent=1 // pred_check
      _
    $region59: #{custom-call.15} parent=1 // pred_check_branch
      %325 = sbr.rel (0) target = $region61
    $region60: #{custom-call.15} parent=1 // pred_region
      %s327 = ssub.s32 16, 16
      %328 = vsyncadd [#allocation9], %s327
      %s329 = sshll.u32 [#allocation8], 4
      %s330 = int_to_ptr.vmem [resolvable:$true] %s329
      %332 = dma.vmem_to_hbm [thread:$0]  %s330, 16, %s3, [#allocation9]
    $region61: #{custom-call.15} parent=1 // pred_fallthru
      _
    // Predicated region
    $region62: #{custom-call.15} parent=1 // pred_check
      _
    $region63: #{custom-call.15} parent=1 // pred_check_branch
      %334 = sbr.rel (0) target = $region65
    $region64: #{custom-call.15} parent=1 // pred_region
      %335 = dma.done [#allocation6], 16
    $region65: #{custom-call.15} parent=1 // pred_fallthru
      _
    // Predicated region
    $region66: #{custom-call.15} parent=1 // pred_check
      _
    $region67: #{custom-call.15} parent=1 // pred_check_branch
      %337 = sbr.rel (0) target = $region69
    $region68: #{custom-call.15} parent=1 // pred_region
      %338 = dma.done [#allocation9], 16
    $region69: #{custom-call.15} parent=1 // pred_fallthru
      _
    %339 = vsyncpa [#allocation6], 1
    %340 = vsyncpa [#allocation9], 1

// kernel: mul.49
$region0: #{mul.49}
  %s0 = inlined_call_operand.vmem [shape: f32[2,8,1,2], index: 0, kind: input, shape index: {}]
  %s1 = inlined_call_operand.vmem [shape: f32[2,16], index: 1, kind: output, shape index: {}]
  $region1: #{mul.49} parent=0
    #allocation0 [shape = 'u8[4096]{0}', space=vmem, size = 0x1000, scoped, tag = 'scoped mem for output reshape']
    %s2 = smov 3
    %v3 = vld [vmem:[%s0] ss:$8 sm:%s2]
    %vm4 = vcmask 15360
    %5 = vst.msk [vmem:[#allocation0] sm:$0x3] %vm4, %v3
    %s6 = scalar_lea.vmem %s0, 7
    %s7 = smov 3
    %v8 = vld [vmem:[%s6] ss:$8 sm:%s7]
    %9 = vrot.lane.b32.xlu0 %v8, 14
    %v10 = vpop.permute.xlu0 %9
    %vm11 = vcmask 130160
    %12 = vst.msk [vmem:[#allocation0] sm:$0x3] %vm11, %v10
    %s13 = scalar_lea.vmem %s0, 6
    %s14 = smov 3
    %v15 = vld [vmem:[%s13] ss:$8 sm:%s14]
    %16 = vrot.lane.b32.xlu0 %v15, 12
    %v17 = vpop.permute.xlu0 %16
    %vm18 = vcmask 113760
    %19 = vst.msk [vmem:[#allocation0] sm:$0x3] %vm18, %v17
    %s20 = scalar_lea.vmem %s0, 5
    %s21 = smov 3
    %v22 = vld [vmem:[%s20] ss:$8 sm:%s21]
    %23 = vrot.lane.b32.xlu0 %v22, 10
    %v24 = vpop.permute.xlu0 %23
    %vm25 = vcmask 97360
    %26 = vst.msk [vmem:[#allocation0] sm:$0x3] %vm25, %v24
    %s27 = scalar_lea.vmem %s0, 4
    %s28 = smov 3
    %v29 = vld [vmem:[%s27] ss:$8 sm:%s28]
    %30 = vrot.lane.b32.xlu0 %v29, 8
    %v31 = vpop.permute.xlu0 %30
    %vm32 = vcmask 80960
    %33 = vst.msk [vmem:[#allocation0] sm:$0x3] %vm32, %v31
    %s34 = scalar_lea.vmem %s0, 3
    %s35 = smov 3
    %v36 = vld [vmem:[%s34] ss:$8 sm:%s35]
    %37 = vrot.lane.b32.xlu0 %v36, 6
    %v38 = vpop.permute.xlu0 %37
    %vm39 = vcmask 64560
    %40 = vst.msk [vmem:[#allocation0] sm:$0x3] %vm39, %v38
    %s41 = scalar_lea.vmem %s0, 2
    %s42 = smov 3
    %v43 = vld [vmem:[%s41] ss:$8 sm:%s42]
    %44 = vrot.lane.b32.xlu0 %v43, 4
    %v45 = vpop.permute.xlu0 %44
    %vm46 = vcmask 48160
    %47 = vst.msk [vmem:[#allocation0] sm:$0x3] %vm46, %v45
    %s48 = scalar_lea.vmem %s0, 1
    %s49 = smov 3
    %v50 = vld [vmem:[%s48] ss:$8 sm:%s49]
    %51 = vrot.lane.b32.xlu0 %v50, 2
    %v52 = vpop.permute.xlu0 %51
    %vm53 = vcmask 31760
    %54 = vst.msk [vmem:[#allocation0] sm:$0x3] %vm53, %v52
    %s56 = sshllo.u32 0, 2
    %v58 = vld [vmem:[#allocation0] sm:%s56]
    %s59 = sshllo.u32 0, 2
    %60 = vst [vmem:[%s1] sm:%s59] %v58

// kernel: flow_spec_decoder_forward.2
$region0: #{flow_spec_decoder_forward.2}
  #allocation0 [shape = 'u32[]', space=smem, size = 0x4, offset = 0x4, fixed_abs, tag = 'smem constant byte address 0x4 - core index']
  #allocation1 [shape = 'u32[144,128]{1,0:T(1,128)}', space=vmem, size = 0x12000, scoped, tag = 'internal scratch']
  %s0 = inlined_call_operand.vmem [shape: f32[2,4,128], index: 0, kind: input, shape index: {}]
  %s1 = inlined_call_operand.vmem [shape: f32[2,4,128], index: 1, kind: input, shape index: {}]
  %s2 = inlined_call_operand.vmem [shape: f32[2,1,128], index: 2, kind: input, shape index: {}]
  %s3 = inlined_call_operand.vmem [shape: f32[4,4], index: 3, kind: input, shape index: {}]
  %s4 = inlined_call_operand.vmem [shape: f32[4,4], index: 4, kind: input, shape index: {}]
  %s5 = inlined_call_operand.vmem [shape: f32[4,4], index: 5, kind: input, shape index: {}]
  %s6 = inlined_call_operand.vmem [shape: f32[4,4], index: 6, kind: input, shape index: {}]
  %s7 = inlined_call_operand.vmem [shape: f32[4,1], index: 7, kind: input, shape index: {}]
  %s8 = inlined_call_operand.vmem [shape: f32[4,1], index: 8, kind: input, shape index: {}]
  %s9 = inlined_call_operand.vmem [shape: f32[32,4], index: 9, kind: input, shape index: {}]
  %s10 = inlined_call_operand.vmem [shape: f32[32,1], index: 10, kind: input, shape index: {}]
  %s11 = inlined_call_operand.vmem [shape: f32[2,64,96], index: 11, kind: input, shape index: {}]
  %s12 = inlined_call_operand.vmem [shape: f32[2,64,1], index: 12, kind: input, shape index: {}]
  %s13 = inlined_call_operand.vmem [shape: f32[2,64,32], index: 13, kind: input, shape index: {}]
  %s14 = inlined_call_operand.vmem [shape: f32[2,64,1], index: 14, kind: input, shape index: {}]
  %s15 = inlined_call_operand.vmem [shape: f32[4,32], index: 15, kind: input, shape index: {}]
  %s16 = inlined_call_operand.vmem [shape: f32[4,1], index: 16, kind: input, shape index: {}]
  %s17 = inlined_call_operand.vmem [shape: f32[4,32], index: 17, kind: input, shape index: {}]
  %s18 = inlined_call_operand.vmem [shape: f32[4,1], index: 18, kind: input, shape index: {}]
  %s19 = inlined_call_operand.vmem [shape: f32[2,4,128], index: 19, kind: output, shape index: {0}]
  %s20 = inlined_call_operand.vmem [shape: f32[2,4,128], index: 20, kind: output, shape index: {1}]
  %s21 = inlined_call_operand.vmem [shape: f32[2,1,128], index: 21, kind: output, shape index: {2}]
  %22 = xla_tuple %s19, %s20, %s21
  %s23 = sld [smem:[#allocation0]]
  $region125: #{flow_spec_decoder_forward.2} parent=0
    _
  %s25 = ssub.s32 1, %s23
  %s26 = scalar_select 0, %s25, %s23
  loop: start=0, step=1, limit=4
  $region2: #{flow_spec_decoder_forward.2} parent=0 // loop_pre_header
    _
  $region3: #{flow_spec_decoder_forward.2} parent=0 // loop_header
    %s28 = sphi 0, %s32
    %p29 = scmp.ge.s32.totalorder %s28, 4
    %s38 = sphi 0, %s40
    %s41 = sphi 0, %s38
    %s42 = sphi 0, %s41
    %s58 = sphi 0, %s42
    %s64 = sphi 0, %s66
    %s67 = sphi 0, %s64
    %s68 = sphi 0, %s67
    %s84 = sphi 0, %s68
    %s90 = sphi 0, %s92
    %s93 = sphi 0, %s90
    %s94 = sphi 0, %s93
    %s110 = sphi 0, %s94
    %s114 = sphi 0, %s114
    %s116 = sphi 0, %s114
    %s117 = sphi 0, %s116
    %s131 = sphi 0, %s117
    %s135 = sphi 0, %s135
    %s137 = sphi 0, %s135
    %s138 = sphi 0, %s137
    %s152 = sphi 0, %s138
    %s156 = sphi 0, %s156
    %s158 = sphi 0, %s156
    %s159 = sphi 0, %s158
    %s173 = sphi 0, %s159
    %s177 = sphi 0, %s177
    %s179 = sphi 0, %s177
    %s180 = sphi 0, %s179
    %s194 = sphi 0, %s180
    %s198 = sphi 0, %s198
    %s200 = sphi 0, %s198
    %s201 = sphi 0, %s200
    %s215 = sphi 0, %s201
    %s219 = sphi 0, %s219
    %s221 = sphi 0, %s219
    %s222 = sphi 0, %s221
    %s236 = sphi 0, %s222
    %s240 = sphi 0, %s240
    %s242 = sphi 0, %s240
    %s243 = sphi 0, %s242
    %s257 = sphi 0, %s243
    %s261 = sphi 0, %s261
    %s263 = sphi 0, %s261
    %s264 = sphi 0, %s263
    %s278 = sphi 0, %s264
    %s282 = sphi 0, %s282
    %s284 = sphi 0, %s282
    %s285 = sphi 0, %s284
    %s299 = sphi 0, %s285
    %s303 = sphi 0, %s303
    %s305 = sphi 0, %s303
    %s306 = sphi 0, %s305
    %s320 = sphi 0, %s306
    %s324 = sphi 0, %s324
    %s326 = sphi 0, %s324
    %s327 = sphi 0, %s326
    %s341 = sphi 0, %s327
    %s345 = sphi 0, %s345
    %s347 = sphi 0, %s345
    %s348 = sphi 0, %s347
    %s362 = sphi 0, %s348
    %s366 = sphi 0, %s366
    %s368 = sphi 0, %s366
    %s369 = sphi 0, %s368
    %s383 = sphi 0, %s369
    %s387 = sphi 0, %s387
    %s389 = sphi 0, %s387
    %s390 = sphi 0, %s389
    %s404 = sphi 0, %s390
    %s408 = sphi 0, %s408
    %s410 = sphi 0, %s408
    %s411 = sphi 0, %s410
    %s425 = sphi 0, %s411
    %s429 = sphi 0, %s429
    %s431 = sphi 0, %s429
    %s432 = sphi 0, %s431
    %s446 = sphi 0, %s432
    %s452 = sphi 0, %s454
    %s455 = sphi 0, %s452
    %s456 = sphi 0, %s455
    %s472 = sphi 0, %s456
    %s478 = sphi 0, %s480
    %s481 = sphi 0, %s478
    %s482 = sphi 0, %s481
    %s498 = sphi 0, %s482
    %s504 = sphi 0, %s506
    %s507 = sphi 0, %s504
    %s508 = sphi 0, %s507
    %s524 = sphi 0, %s508
  $region4: #{flow_spec_decoder_forward.2} parent=0 // loop_header_branch
    %31 = sbr.rel (%p29) target = $region8
  $region5: #{flow_spec_decoder_forward.2} parent=0 // loop_body
    %s33 = ssub.s32 %s28, 1
    %s34 = ssub.s32 %s28, 2
    %s35 = sadd.s32 %s28, 1
    %s36 = ssub.s32 %s28, %s35
    %p37 = scmp.eq.s32.totalorder %s36, 0
    %s39 = sadd.s32 %s38, 1
    %s40 = scalar_select %p37, %s38, %s39
    %p43 = pneg %p37
    %p44 = scmp.eq.s32.totalorder %s28, 1
    %p45 = por %p43, %p44
    %p46 = scmp.ne.s32.totalorder %s38, %s41
    %p47 = scmp.eq.s32.totalorder %s28, 0
    %p48 = por %p46, %p47
    %p49 = scmp.ne.s32.totalorder %s38, %s41
    %p50 = scmp.eq.s32.totalorder %s33, 1
    %p51 = por %p49, %p50
    %p52 = scmp.ne.s32.totalorder %s41, %s42
    %p53 = scmp.eq.s32.totalorder %s33, 0
    %p54 = por %p52, %p53
    %p55 = scmp.ne.s32.totalorder %s41, %s42
    %p56 = scmp.eq.s32.totalorder %s34, 1
    %p57 = por %p55, %p56
    %p59 = scmp.ne.s32.totalorder %s42, %s58
    %p60 = scmp.eq.s32.totalorder %s34, 0
    %p61 = por %p59, %p60
    %s62 = ssub.s32 %s28, %s35
    %p63 = scmp.eq.s32.totalorder %s62, 0
    %s65 = sadd.s32 %s64, 1
    %s66 = scalar_select %p63, %s64, %s65
    %p69 = pneg %p63
    %p70 = scmp.eq.s32.totalorder %s28, 1
    %p71 = por %p69, %p70
    %p72 = scmp.ne.s32.totalorder %s64, %s67
    %p73 = scmp.eq.s32.totalorder %s28, 0
    %p74 = por %p72, %p73
    %p75 = scmp.ne.s32.totalorder %s64, %s67
    %p76 = scmp.eq.s32.totalorder %s33, 1
    %p77 = por %p75, %p76
    %p78 = scmp.ne.s32.totalorder %s67, %s68
    %p79 = scmp.eq.s32.totalorder %s33, 0
    %p80 = por %p78, %p79
    %p81 = scmp.ne.s32.totalorder %s67, %s68
    %p82 = scmp.eq.s32.totalorder %s34, 1
    %p83 = por %p81, %p82
    %p85 = scmp.ne.s32.totalorder %s68, %s84
    %p86 = scmp.eq.s32.totalorder %s34, 0
    %p87 = por %p85, %p86
    %s88 = ssub.s32 %s28, %s35
    %p89 = scmp.eq.s32.totalorder %s88, 0
    %s91 = sadd.s32 %s90, 1
    %s92 = scalar_select %p89, %s90, %s91
    %p95 = pneg %p89
    %p96 = scmp.eq.s32.totalorder %s28, 1
    %p97 = por %p95, %p96
    %p98 = scmp.ne.s32.totalorder %s90, %s93
    %p99 = scmp.eq.s32.totalorder %s28, 0
    %p100 = por %p98, %p99
    %p101 = scmp.ne.s32.totalorder %s90, %s93
    %p102 = scmp.eq.s32.totalorder %s33, 1
    %p103 = por %p101, %p102
    %p104 = scmp.ne.s32.totalorder %s93, %s94
    %p105 = scmp.eq.s32.totalorder %s33, 0
    %p106 = por %p104, %p105
    %p107 = scmp.ne.s32.totalorder %s93, %s94
    %p108 = scmp.eq.s32.totalorder %s34, 1
    %p109 = por %p107, %p108
    %p111 = scmp.ne.s32.totalorder %s94, %s110
    %p112 = scmp.eq.s32.totalorder %s34, 0
    %p113 = por %p111, %p112
    %s115 = sadd.s32 %s114, 1
    %p118 = scmp.eq.s32.totalorder %s28, 1
    %p119 = scmp.ne.s32.totalorder %s114, %s116
    %p120 = scmp.eq.s32.totalorder %s28, 0
    %p121 = por %p119, %p120
    %p122 = scmp.ne.s32.totalorder %s114, %s116
    %p123 = scmp.eq.s32.totalorder %s33, 1
    %p124 = por %p122, %p123
    %p125 = scmp.ne.s32.totalorder %s116, %s117
    %p126 = scmp.eq.s32.totalorder %s33, 0
    %p127 = por %p125, %p126
    %p128 = scmp.ne.s32.totalorder %s116, %s117
    %p129 = scmp.eq.s32.totalorder %s34, 1
    %p130 = por %p128, %p129
    %p132 = scmp.ne.s32.totalorder %s117, %s131
    %p133 = scmp.eq.s32.totalorder %s34, 0
    %p134 = por %p132, %p133
    %s136 = sadd.s32 %s135, 1
    %p139 = scmp.eq.s32.totalorder %s28, 1
    %p140 = scmp.ne.s32.totalorder %s135, %s137
    %p141 = scmp.eq.s32.totalorder %s28, 0
    %p142 = por %p140, %p141
    %p143 = scmp.ne.s32.totalorder %s135, %s137
    %p144 = scmp.eq.s32.totalorder %s33, 1
    %p145 = por %p143, %p144
    %p146 = scmp.ne.s32.totalorder %s137, %s138
    %p147 = scmp.eq.s32.totalorder %s33, 0
    %p148 = por %p146, %p147
    %p149 = scmp.ne.s32.totalorder %s137, %s138
    %p150 = scmp.eq.s32.totalorder %s34, 1
    %p151 = por %p149, %p150
    %p153 = scmp.ne.s32.totalorder %s138, %s152
    %p154 = scmp.eq.s32.totalorder %s34, 0
    %p155 = por %p153, %p154
    %s157 = sadd.s32 %s156, 1
    %p160 = scmp.eq.s32.totalorder %s28, 1
    %p161 = scmp.ne.s32.totalorder %s156, %s158
    %p162 = scmp.eq.s32.totalorder %s28, 0
    %p163 = por %p161, %p162
    %p164 = scmp.ne.s32.totalorder %s156, %s158
    %p165 = scmp.eq.s32.totalorder %s33, 1
    %p166 = por %p164, %p165
    %p167 = scmp.ne.s32.totalorder %s158, %s159
    %p168 = scmp.eq.s32.totalorder %s33, 0
    %p169 = por %p167, %p168
    %p170 = scmp.ne.s32.totalorder %s158, %s159
    %p171 = scmp.eq.s32.totalorder %s34, 1
    %p172 = por %p170, %p171
    %p174 = scmp.ne.s32.totalorder %s159, %s173
    %p175 = scmp.eq.s32.totalorder %s34, 0
    %p176 = por %p174, %p175
    %s178 = sadd.s32 %s177, 1
    %p181 = scmp.eq.s32.totalorder %s28, 1
    %p182 = scmp.ne.s32.totalorder %s177, %s179
    %p183 = scmp.eq.s32.totalorder %s28, 0
    %p184 = por %p182, %p183
    %p185 = scmp.ne.s32.totalorder %s177, %s179
    %p186 = scmp.eq.s32.totalorder %s33, 1
    %p187 = por %p185, %p186
    %p188 = scmp.ne.s32.totalorder %s179, %s180
    %p189 = scmp.eq.s32.totalorder %s33, 0
    %p190 = por %p188, %p189
    %p191 = scmp.ne.s32.totalorder %s179, %s180
    %p192 = scmp.eq.s32.totalorder %s34, 1
    %p193 = por %p191, %p192
    %p195 = scmp.ne.s32.totalorder %s180, %s194
    %p196 = scmp.eq.s32.totalorder %s34, 0
    %p197 = por %p195, %p196
    %s199 = sadd.s32 %s198, 1
    %p202 = scmp.eq.s32.totalorder %s28, 1
    %p203 = scmp.ne.s32.totalorder %s198, %s200
    %p204 = scmp.eq.s32.totalorder %s28, 0
    %p205 = por %p203, %p204
    %p206 = scmp.ne.s32.totalorder %s198, %s200
    %p207 = scmp.eq.s32.totalorder %s33, 1
    %p208 = por %p206, %p207
    %p209 = scmp.ne.s32.totalorder %s200, %s201
    %p210 = scmp.eq.s32.totalorder %s33, 0
    %p211 = por %p209, %p210
    %p212 = scmp.ne.s32.totalorder %s200, %s201
    %p213 = scmp.eq.s32.totalorder %s34, 1
    %p214 = por %p212, %p213
    %p216 = scmp.ne.s32.totalorder %s201, %s215
    %p217 = scmp.eq.s32.totalorder %s34, 0
    %p218 = por %p216, %p217
    %s220 = sadd.s32 %s219, 1
    %p223 = scmp.eq.s32.totalorder %s28, 1
    %p224 = scmp.ne.s32.totalorder %s219, %s221
    %p225 = scmp.eq.s32.totalorder %s28, 0
    %p226 = por %p224, %p225
    %p227 = scmp.ne.s32.totalorder %s219, %s221
    %p228 = scmp.eq.s32.totalorder %s33, 1
    %p229 = por %p227, %p228
    %p230 = scmp.ne.s32.totalorder %s221, %s222
    %p231 = scmp.eq.s32.totalorder %s33, 0
    %p232 = por %p230, %p231
    %p233 = scmp.ne.s32.totalorder %s221, %s222
    %p234 = scmp.eq.s32.totalorder %s34, 1
    %p235 = por %p233, %p234
    %p237 = scmp.ne.s32.totalorder %s222, %s236
    %p238 = scmp.eq.s32.totalorder %s34, 0
    %p239 = por %p237, %p238
    %s241 = sadd.s32 %s240, 1
    %p244 = scmp.eq.s32.totalorder %s28, 1
    %p245 = scmp.ne.s32.totalorder %s240, %s242
    %p246 = scmp.eq.s32.totalorder %s28, 0
    %p247 = por %p245, %p246
    %p248 = scmp.ne.s32.totalorder %s240, %s242
    %p249 = scmp.eq.s32.totalorder %s33, 1
    %p250 = por %p248, %p249
    %p251 = scmp.ne.s32.totalorder %s242, %s243
    %p252 = scmp.eq.s32.totalorder %s33, 0
    %p253 = por %p251, %p252
    %p254 = scmp.ne.s32.totalorder %s242, %s243
    %p255 = scmp.eq.s32.totalorder %s34, 1
    %p256 = por %p254, %p255
    %p258 = scmp.ne.s32.totalorder %s243, %s257
    %p259 = scmp.eq.s32.totalorder %s34, 0
    %p260 = por %p258, %p259
    %s262 = sadd.s32 %s261, 1
    %p265 = scmp.eq.s32.totalorder %s28, 1
    %p266 = scmp.ne.s32.totalorder %s261, %s263
    %p267 = scmp.eq.s32.totalorder %s28, 0
    %p268 = por %p266, %p267
    %p269 = scmp.ne.s32.totalorder %s261, %s263
    %p270 = scmp.eq.s32.totalorder %s33, 1
    %p271 = por %p269, %p270
    %p272 = scmp.ne.s32.totalorder %s263, %s264
    %p273 = scmp.eq.s32.totalorder %s33, 0
    %p274 = por %p272, %p273
    %p275 = scmp.ne.s32.totalorder %s263, %s264
    %p276 = scmp.eq.s32.totalorder %s34, 1
    %p277 = por %p275, %p276
    %p279 = scmp.ne.s32.totalorder %s264, %s278
    %p280 = scmp.eq.s32.totalorder %s34, 0
    %p281 = por %p279, %p280
    %s283 = sadd.s32 %s282, 1
    %p286 = scmp.eq.s32.totalorder %s28, 1
    %p287 = scmp.ne.s32.totalorder %s282, %s284
    %p288 = scmp.eq.s32.totalorder %s28, 0
    %p289 = por %p287, %p288
    %p290 = scmp.ne.s32.totalorder %s282, %s284
    %p291 = scmp.eq.s32.totalorder %s33, 1
    %p292 = por %p290, %p291
    %p293 = scmp.ne.s32.totalorder %s284, %s285
    %p294 = scmp.eq.s32.totalorder %s33, 0
    %p295 = por %p293, %p294
    %p296 = scmp.ne.s32.totalorder %s284, %s285
    %p297 = scmp.eq.s32.totalorder %s34, 1
    %p298 = por %p296, %p297
    %p300 = scmp.ne.s32.totalorder %s285, %s299
    %p301 = scmp.eq.s32.totalorder %s34, 0
    %p302 = por %p300, %p301
    %s304 = sadd.s32 %s303, 1
    %p307 = scmp.eq.s32.totalorder %s28, 1
    %p308 = scmp.ne.s32.totalorder %s303, %s305
    %p309 = scmp.eq.s32.totalorder %s28, 0
    %p310 = por %p308, %p309
    %p311 = scmp.ne.s32.totalorder %s303, %s305
    %p312 = scmp.eq.s32.totalorder %s33, 1
    %p313 = por %p311, %p312
    %p314 = scmp.ne.s32.totalorder %s305, %s306
    %p315 = scmp.eq.s32.totalorder %s33, 0
    %p316 = por %p314, %p315
    %p317 = scmp.ne.s32.totalorder %s305, %s306
    %p318 = scmp.eq.s32.totalorder %s34, 1
    %p319 = por %p317, %p318
    %p321 = scmp.ne.s32.totalorder %s306, %s320
    %p322 = scmp.eq.s32.totalorder %s34, 0
    %p323 = por %p321, %p322
    %s325 = sadd.s32 %s324, 1
    %p328 = scmp.eq.s32.totalorder %s28, 1
    %p329 = scmp.ne.s32.totalorder %s324, %s326
    %p330 = scmp.eq.s32.totalorder %s28, 0
    %p331 = por %p329, %p330
    %p332 = scmp.ne.s32.totalorder %s324, %s326
    %p333 = scmp.eq.s32.totalorder %s33, 1
    %p334 = por %p332, %p333
    %p335 = scmp.ne.s32.totalorder %s326, %s327
    %p336 = scmp.eq.s32.totalorder %s33, 0
    %p337 = por %p335, %p336
    %p338 = scmp.ne.s32.totalorder %s326, %s327
    %p339 = scmp.eq.s32.totalorder %s34, 1
    %p340 = por %p338, %p339
    %p342 = scmp.ne.s32.totalorder %s327, %s341
    %p343 = scmp.eq.s32.totalorder %s34, 0
    %p344 = por %p342, %p343
    %s346 = sadd.s32 %s345, 1
    %p349 = scmp.eq.s32.totalorder %s28, 1
    %p350 = scmp.ne.s32.totalorder %s345, %s347
    %p351 = scmp.eq.s32.totalorder %s28, 0
    %p352 = por %p350, %p351
    %p353 = scmp.ne.s32.totalorder %s345, %s347
    %p354 = scmp.eq.s32.totalorder %s33, 1
    %p355 = por %p353, %p354
    %p356 = scmp.ne.s32.totalorder %s347, %s348
    %p357 = scmp.eq.s32.totalorder %s33, 0
    %p358 = por %p356, %p357
    %p359 = scmp.ne.s32.totalorder %s347, %s348
    %p360 = scmp.eq.s32.totalorder %s34, 1
    %p361 = por %p359, %p360
    %p363 = scmp.ne.s32.totalorder %s348, %s362
    %p364 = scmp.eq.s32.totalorder %s34, 0
    %p365 = por %p363, %p364
    %s367 = sadd.s32 %s366, 1
    %p370 = scmp.eq.s32.totalorder %s28, 1
    %p371 = scmp.ne.s32.totalorder %s366, %s368
    %p372 = scmp.eq.s32.totalorder %s28, 0
    %p373 = por %p371, %p372
    %p374 = scmp.ne.s32.totalorder %s366, %s368
    %p375 = scmp.eq.s32.totalorder %s33, 1
    %p376 = por %p374, %p375
    %p377 = scmp.ne.s32.totalorder %s368, %s369
    %p378 = scmp.eq.s32.totalorder %s33, 0
    %p379 = por %p377, %p378
    %p380 = scmp.ne.s32.totalorder %s368, %s369
    %p381 = scmp.eq.s32.totalorder %s34, 1
    %p382 = por %p380, %p381
    %p384 = scmp.ne.s32.totalorder %s369, %s383
    %p385 = scmp.eq.s32.totalorder %s34, 0
    %p386 = por %p384, %p385
    %s388 = sadd.s32 %s387, 1
    %p391 = scmp.eq.s32.totalorder %s28, 1
    %p392 = scmp.ne.s32.totalorder %s387, %s389
    %p393 = scmp.eq.s32.totalorder %s28, 0
    %p394 = por %p392, %p393
    %p395 = scmp.ne.s32.totalorder %s387, %s389
    %p396 = scmp.eq.s32.totalorder %s33, 1
    %p397 = por %p395, %p396
    %p398 = scmp.ne.s32.totalorder %s389, %s390
    %p399 = scmp.eq.s32.totalorder %s33, 0
    %p400 = por %p398, %p399
    %p401 = scmp.ne.s32.totalorder %s389, %s390
    %p402 = scmp.eq.s32.totalorder %s34, 1
    %p403 = por %p401, %p402
    %p405 = scmp.ne.s32.totalorder %s390, %s404
    %p406 = scmp.eq.s32.totalorder %s34, 0
    %p407 = por %p405, %p406
    %s409 = sadd.s32 %s408, 1
    %p412 = scmp.eq.s32.totalorder %s28, 1
    %p413 = scmp.ne.s32.totalorder %s408, %s410
    %p414 = scmp.eq.s32.totalorder %s28, 0
    %p415 = por %p413, %p414
    %p416 = scmp.ne.s32.totalorder %s408, %s410
    %p417 = scmp.eq.s32.totalorder %s33, 1
    %p418 = por %p416, %p417
    %p419 = scmp.ne.s32.totalorder %s410, %s411
    %p420 = scmp.eq.s32.totalorder %s33, 0
    %p421 = por %p419, %p420
    %p422 = scmp.ne.s32.totalorder %s410, %s411
    %p423 = scmp.eq.s32.totalorder %s34, 1
    %p424 = por %p422, %p423
    %p426 = scmp.ne.s32.totalorder %s411, %s425
    %p427 = scmp.eq.s32.totalorder %s34, 0
    %p428 = por %p426, %p427
    %s430 = sadd.s32 %s429, 1
    %p433 = scmp.eq.s32.totalorder %s28, 1
    %p434 = scmp.ne.s32.totalorder %s429, %s431
    %p435 = scmp.eq.s32.totalorder %s28, 0
    %p436 = por %p434, %p435
    %p437 = scmp.ne.s32.totalorder %s429, %s431
    %p438 = scmp.eq.s32.totalorder %s33, 1
    %p439 = por %p437, %p438
    %p440 = scmp.ne.s32.totalorder %s431, %s432
    %p441 = scmp.eq.s32.totalorder %s33, 0
    %p442 = por %p440, %p441
    %p443 = scmp.ne.s32.totalorder %s431, %s432
    %p444 = scmp.eq.s32.totalorder %s34, 1
    %p445 = por %p443, %p444
    %p447 = scmp.ne.s32.totalorder %s432, %s446
    %p448 = scmp.eq.s32.totalorder %s34, 0
    %p449 = por %p447, %p448
    %s450 = ssub.s32 %s28, %s35
    %p451 = scmp.eq.s32.totalorder %s450, 0
    %s453 = sadd.s32 %s452, 1
    %s454 = scalar_select %p451, %s452, %s453
    %p457 = pneg %p451
    %p458 = scmp.eq.s32.totalorder %s28, 1
    %p459 = por %p457, %p458
    %p460 = scmp.ne.s32.totalorder %s452, %s455
    %p461 = scmp.eq.s32.totalorder %s28, 0
    %p462 = por %p460, %p461
    %p463 = scmp.ne.s32.totalorder %s452, %s455
    %p464 = scmp.eq.s32.totalorder %s33, 1
    %p465 = por %p463, %p464
    %p466 = scmp.ne.s32.totalorder %s455, %s456
    %p467 = scmp.eq.s32.totalorder %s33, 0
    %p468 = por %p466, %p467
    %p469 = scmp.ne.s32.totalorder %s455, %s456
    %p470 = scmp.eq.s32.totalorder %s34, 1
    %p471 = por %p469, %p470
    %p473 = scmp.ne.s32.totalorder %s456, %s472
    %p474 = scmp.eq.s32.totalorder %s34, 0
    %p475 = por %p473, %p474
    %s476 = ssub.s32 %s28, %s35
    %p477 = scmp.eq.s32.totalorder %s476, 0
    %s479 = sadd.s32 %s478, 1
    %s480 = scalar_select %p477, %s478, %s479
    %p483 = pneg %p477
    %p484 = scmp.eq.s32.totalorder %s28, 1
    %p485 = por %p483, %p484
    %p486 = scmp.ne.s32.totalorder %s478, %s481
    %p487 = scmp.eq.s32.totalorder %s28, 0
    %p488 = por %p486, %p487
    %p489 = scmp.ne.s32.totalorder %s478, %s481
    %p490 = scmp.eq.s32.totalorder %s33, 1
    %p491 = por %p489, %p490
    %p492 = scmp.ne.s32.totalorder %s481, %s482
    %p493 = scmp.eq.s32.totalorder %s33, 0
    %p494 = por %p492, %p493
    %p495 = scmp.ne.s32.totalorder %s481, %s482
    %p496 = scmp.eq.s32.totalorder %s34, 1
    %p497 = por %p495, %p496
    %p499 = scmp.ne.s32.totalorder %s482, %s498
    %p500 = scmp.eq.s32.totalorder %s34, 0
    %p501 = por %p499, %p500
    %s502 = ssub.s32 %s28, %s35
    %p503 = scmp.eq.s32.totalorder %s502, 0
    %s505 = sadd.s32 %s504, 1
    %s506 = scalar_select %p503, %s504, %s505
    %p509 = pneg %p503
    %p510 = scmp.eq.s32.totalorder %s28, 1
    %p511 = por %p509, %p510
    %p512 = scmp.ne.s32.totalorder %s504, %s507
    %p513 = scmp.eq.s32.totalorder %s28, 0
    %p514 = por %p512, %p513
    %p515 = scmp.ne.s32.totalorder %s504, %s507
    %p516 = scmp.eq.s32.totalorder %s33, 1
    %p517 = por %p515, %p516
    %p518 = scmp.ne.s32.totalorder %s507, %s508
    %p519 = scmp.eq.s32.totalorder %s33, 0
    %p520 = por %p518, %p519
    %p521 = scmp.ne.s32.totalorder %s507, %s508
    %p522 = scmp.eq.s32.totalorder %s34, 1
    %p523 = por %p521, %p522
    %p525 = scmp.ne.s32.totalorder %s508, %s524
    %p526 = scmp.eq.s32.totalorder %s34, 0
    %p527 = por %p525, %p526
    %p528 = scmp.le.s32.totalorder 1, %s28
    %p529 = scmp.lt.s32.totalorder %s28, 3
    %p530 = pnand %p528, %p529
    %p531 = pneg %p530
    // Predicated region
    $region9: #{flow_spec_decoder_forward.2} parent=5 // pred_check
      _
    $region10: #{flow_spec_decoder_forward.2} parent=5 // pred_check_branch
      %533 = sbr.rel (%p530) target = $region12
    $region11: #{flow_spec_decoder_forward.2} parent=5 // pred_region
      %s534 = ssub.s32 %s28, 1
      // Predicated region
      $region13: #{flow_spec_decoder_forward.2} parent=11 // pred_check
        %p535 = pneg %p127
      $region14: #{flow_spec_decoder_forward.2} parent=11 // pred_check_branch
        %537 = sbr.rel (%p535) target = $region16
      $region15: #{flow_spec_decoder_forward.2} parent=11 // pred_region
        _
      $region16: #{flow_spec_decoder_forward.2} parent=11 // pred_fallthru
        _
      // Predicated region
      $region17: #{flow_spec_decoder_forward.2} parent=11 // pred_check
        %p538 = pneg %p148
      $region18: #{flow_spec_decoder_forward.2} parent=11 // pred_check_branch
        %540 = sbr.rel (%p538) target = $region20
      $region19: #{flow_spec_decoder_forward.2} parent=11 // pred_region
        _
      $region20: #{flow_spec_decoder_forward.2} parent=11 // pred_fallthru
        _
      // Predicated region
      $region21: #{flow_spec_decoder_forward.2} parent=11 // pred_check
        %p541 = pneg %p169
      $region22: #{flow_spec_decoder_forward.2} parent=11 // pred_check_branch
        %543 = sbr.rel (%p541) target = $region24
      $region23: #{flow_spec_decoder_forward.2} parent=11 // pred_region
        _
      $region24: #{flow_spec_decoder_forward.2} parent=11 // pred_fallthru
        _
      // Predicated region
      $region25: #{flow_spec_decoder_forward.2} parent=11 // pred_check
        %p544 = pneg %p190
      $region26: #{flow_spec_decoder_forward.2} parent=11 // pred_check_branch
        %546 = sbr.rel (%p544) target = $region28
      $region27: #{flow_spec_decoder_forward.2} parent=11 // pred_region
        _
      $region28: #{flow_spec_decoder_forward.2} parent=11 // pred_fallthru
        _
      // Predicated region
      $region29: #{flow_spec_decoder_forward.2} parent=11 // pred_check
        %p547 = pneg %p211
      $region30: #{flow_spec_decoder_forward.2} parent=11 // pred_check_branch
        %549 = sbr.rel (%p547) target = $region32
      $region31: #{flow_spec_decoder_forward.2} parent=11 // pred_region
        _
      $region32: #{flow_spec_decoder_forward.2} parent=11 // pred_fallthru
        _
      // Predicated region
      $region33: #{flow_spec_decoder_forward.2} parent=11 // pred_check
        %p550 = pneg %p232
      $region34: #{flow_spec_decoder_forward.2} parent=11 // pred_check_branch
        %552 = sbr.rel (%p550) target = $region36
      $region35: #{flow_spec_decoder_forward.2} parent=11 // pred_region
        _
      $region36: #{flow_spec_decoder_forward.2} parent=11 // pred_fallthru
        _
      // Predicated region
      $region37: #{flow_spec_decoder_forward.2} parent=11 // pred_check
        %p553 = pneg %p253
      $region38: #{flow_spec_decoder_forward.2} parent=11 // pred_check_branch
        %555 = sbr.rel (%p553) target = $region40
      $region39: #{flow_spec_decoder_forward.2} parent=11 // pred_region
        _
      $region40: #{flow_spec_decoder_forward.2} parent=11 // pred_fallthru
        _
      // Predicated region
      $region41: #{flow_spec_decoder_forward.2} parent=11 // pred_check
        %p556 = pneg %p274
      $region42: #{flow_spec_decoder_forward.2} parent=11 // pred_check_branch
        %558 = sbr.rel (%p556) target = $region44
      $region43: #{flow_spec_decoder_forward.2} parent=11 // pred_region
        _
      $region44: #{flow_spec_decoder_forward.2} parent=11 // pred_fallthru
        _
      // Predicated region
      $region45: #{flow_spec_decoder_forward.2} parent=11 // pred_check
        %p559 = pneg %p295
      $region46: #{flow_spec_decoder_forward.2} parent=11 // pred_check_branch
        %561 = sbr.rel (%p559) target = $region48
      $region47: #{flow_spec_decoder_forward.2} parent=11 // pred_region
        _
      $region48: #{flow_spec_decoder_forward.2} parent=11 // pred_fallthru
        _
      // Predicated region
      $region49: #{flow_spec_decoder_forward.2} parent=11 // pred_check
        %p562 = pneg %p316
      $region50: #{flow_spec_decoder_forward.2} parent=11 // pred_check_branch
        %564 = sbr.rel (%p562) target = $region52
      $region51: #{flow_spec_decoder_forward.2} parent=11 // pred_region
        _
      $region52: #{flow_spec_decoder_forward.2} parent=11 // pred_fallthru
        _
      // Predicated region
      $region53: #{flow_spec_decoder_forward.2} parent=11 // pred_check
        %p565 = pneg %p337
      $region54: #{flow_spec_decoder_forward.2} parent=11 // pred_check_branch
        %567 = sbr.rel (%p565) target = $region56
      $region55: #{flow_spec_decoder_forward.2} parent=11 // pred_region
        _
      $region56: #{flow_spec_decoder_forward.2} parent=11 // pred_fallthru
        _
      // Predicated region
      $region57: #{flow_spec_decoder_forward.2} parent=11 // pred_check
        %p568 = pneg %p358
      $region58: #{flow_spec_decoder_forward.2} parent=11 // pred_check_branch
        %570 = sbr.rel (%p568) target = $region60
      $region59: #{flow_spec_decoder_forward.2} parent=11 // pred_region
        _
      $region60: #{flow_spec_decoder_forward.2} parent=11 // pred_fallthru
        _
      // Predicated region
      $region61: #{flow_spec_decoder_forward.2} parent=11 // pred_check
        %p571 = pneg %p379
      $region62: #{flow_spec_decoder_forward.2} parent=11 // pred_check_branch
        %573 = sbr.rel (%p571) target = $region64
      $region63: #{flow_spec_decoder_forward.2} parent=11 // pred_region
        _
      $region64: #{flow_spec_decoder_forward.2} parent=11 // pred_fallthru
        _
      // Predicated region
      $region65: #{flow_spec_decoder_forward.2} parent=11 // pred_check
        %p574 = pneg %p400
      $region66: #{flow_spec_decoder_forward.2} parent=11 // pred_check_branch
        %576 = sbr.rel (%p574) target = $region68
      $region67: #{flow_spec_decoder_forward.2} parent=11 // pred_region
        _
      $region68: #{flow_spec_decoder_forward.2} parent=11 // pred_fallthru
        _
      // Predicated region
      $region69: #{flow_spec_decoder_forward.2} parent=11 // pred_check
        %p577 = pneg %p421
      $region70: #{flow_spec_decoder_forward.2} parent=11 // pred_check_branch
        %579 = sbr.rel (%p577) target = $region72
      $region71: #{flow_spec_decoder_forward.2} parent=11 // pred_region
        _
      $region72: #{flow_spec_decoder_forward.2} parent=11 // pred_fallthru
        _
      // Predicated region
      $region73: #{flow_spec_decoder_forward.2} parent=11 // pred_check
        %p580 = pneg %p442
      $region74: #{flow_spec_decoder_forward.2} parent=11 // pred_check_branch
        %582 = sbr.rel (%p580) target = $region76
      $region75: #{flow_spec_decoder_forward.2} parent=11 // pred_region
        _
      $region76: #{flow_spec_decoder_forward.2} parent=11 // pred_fallthru
        _
    $region12: #{flow_spec_decoder_forward.2} parent=5 // pred_fallthru
      _
    %p583 = scmp.lt.s32.totalorder %s28, 2
    // Predicated region
    $region77: #{flow_spec_decoder_forward.2} parent=5 // pred_check
      %p584 = pneg %p583
    $region78: #{flow_spec_decoder_forward.2} parent=5 // pred_check_branch
      %586 = sbr.rel (%p584) target = $region80
    $region79: #{flow_spec_decoder_forward.2} parent=5 // pred_region
      // Predicated region
      $region81: #{flow_spec_decoder_forward.2} parent=79 // pred_check
        %p587 = pneg %p48
      $region82: #{flow_spec_decoder_forward.2} parent=79 // pred_check_branch
        %589 = sbr.rel (%p587) target = $region84
      $region83: #{flow_spec_decoder_forward.2} parent=79 // pred_region
        %p590 = scmp.lt.s32.totalorder %s28, 1
        %s591 = scalar_select %p590, %s28, 1
        %s592 = smul.addr %s591, 4
        %s593 = scalar_lea.vmem %s0, %s592
      $region84: #{flow_spec_decoder_forward.2} parent=79 // pred_fallthru
        _
      // Predicated region
      $region85: #{flow_spec_decoder_forward.2} parent=79 // pred_check
        %p594 = pneg %p74
      $region86: #{flow_spec_decoder_forward.2} parent=79 // pred_check_branch
        %596 = sbr.rel (%p594) target = $region88
      $region87: #{flow_spec_decoder_forward.2} parent=79 // pred_region
        %p597 = scmp.lt.s32.totalorder %s28, 1
        %s598 = scalar_select %p597, %s28, 1
        %s599 = smul.addr %s598, 4
        %s600 = scalar_lea.vmem %s1, %s599
      $region88: #{flow_spec_decoder_forward.2} parent=79 // pred_fallthru
        _
      // Predicated region
      $region89: #{flow_spec_decoder_forward.2} parent=79 // pred_check
        %p601 = pneg %p100
      $region90: #{flow_spec_decoder_forward.2} parent=79 // pred_check_branch
        %603 = sbr.rel (%p601) target = $region92
      $region91: #{flow_spec_decoder_forward.2} parent=79 // pred_region
        %p604 = scmp.lt.s32.totalorder %s28, 1
        %s605 = scalar_select %p604, %s28, 1
        %s606 = scalar_lea.vmem %s2, %s605
      $region92: #{flow_spec_decoder_forward.2} parent=79 // pred_fallthru
        _
    $region80: #{flow_spec_decoder_forward.2} parent=5 // pred_fallthru
      _
    %p607 = scmp.le.s32.totalorder 1, %s28
    %p608 = scmp.lt.s32.totalorder %s28, 3
    %p609 = pnand %p607, %p608
    %p610 = pneg %p609
    // Predicated region
    $region93: #{flow_spec_decoder_forward.2} parent=5 // pred_check
      _
    $region94: #{flow_spec_decoder_forward.2} parent=5 // pred_check_branch
      %612 = sbr.rel (%p609) target = $region96
    $region95: #{flow_spec_decoder_forward.2} parent=5 // pred_region
      %s613 = ssub.s32 %s28, 1
      %p614 = scmp.lt.s32.totalorder %s33, 1
      %s615 = scalar_select %p614, %s33, 1
      %s616 = smul.addr %s615, 4
      %s617 = scalar_lea.vmem %s0, %s616
      %p618 = pneg %p54
      %p619 = pneg %p51
      %p620 = scmp.lt.s32.totalorder %s33, 1
      %s621 = scalar_select %p620, %s33, 1
      %s622 = smul.addr %s621, 4
      %s623 = scalar_lea.vmem %s1, %s622
      %p624 = pneg %p80
      %p625 = pneg %p77
      %p626 = scmp.lt.s32.totalorder %s33, 1
      %s627 = scalar_select %p626, %s33, 1
      %s628 = scalar_lea.vmem %s2, %s627
      %p629 = pneg %p106
      %p630 = pneg %p103
      %p631 = pneg %p127
      %p632 = pneg %p124
      %p633 = pneg %p148
      %p634 = pneg %p145
      %p635 = pneg %p169
      %p636 = pneg %p166
      %p637 = pneg %p190
      %p638 = pneg %p187
      %p639 = pneg %p211
      %p640 = pneg %p208
      %p641 = pneg %p232
      %p642 = pneg %p229
      %p643 = pneg %p253
      %p644 = pneg %p250
      %p645 = pneg %p274
      %p646 = pneg %p271
      %p647 = pneg %p295
      %p648 = pneg %p292
      %p649 = pneg %p316
      %p650 = pneg %p313
      %p651 = pneg %p337
      %p652 = pneg %p334
      %p653 = pneg %p358
      %p654 = pneg %p355
      %p655 = pneg %p379
      %p656 = pneg %p376
      %p657 = pneg %p400
      %p658 = pneg %p397
      %p659 = pneg %p421
      %p660 = pneg %p418
      %p661 = pneg %p442
      %p662 = pneg %p439
      %p663 = pneg %p468
      %p664 = pneg %p465
      %p665 = scmp.lt.s32.totalorder %s33, 1
      %s666 = scalar_select %p665, %s33, 1
      %s667 = smul.addr %s666, 4
      %s668 = scalar_lea.vmem %s19, %s667
      %p669 = pneg %p494
      %p670 = pneg %p491
      %p671 = scmp.lt.s32.totalorder %s33, 1
      %s672 = scalar_select %p671, %s33, 1
      %s673 = smul.addr %s672, 4
      %s674 = scalar_lea.vmem %s20, %s673
      %p675 = pneg %p520
      %p676 = pneg %p517
      %p677 = scmp.lt.s32.totalorder %s33, 1
      %s678 = scalar_select %p677, %s33, 1
      %s679 = scalar_lea.vmem %s21, %s678
      %p680 = scmp.lt.s32.totalorder %s33, 1
      %s681 = scalar_select %p680, %s33, 1
      %s682 = smul.addr %s681, 4
      %s683 = scalar_lea.vmem %s0, %s682
      %p684 = scmp.lt.s32.totalorder %s33, 1
      %s685 = scalar_select %p684, %s33, 1
      %s686 = smul.addr %s685, 4
      %s687 = scalar_lea.vmem %s1, %s686
      %p688 = scmp.lt.s32.totalorder %s33, 1
      %s689 = scalar_select %p688, %s33, 1
      %s690 = scalar_lea.vmem %s2, %s689
      %p691 = scmp.lt.s32.totalorder %s33, 1
      %s692 = scalar_select %p691, %s33, 1
      %s693 = smul.addr %s692, 4
      %s694 = scalar_lea.vmem %s19, %s693
      %p695 = scmp.lt.s32.totalorder %s33, 1
      %s696 = scalar_select %p695, %s33, 1
      %s697 = smul.addr %s696, 4
      %s698 = scalar_lea.vmem %s20, %s697
      %p699 = scmp.lt.s32.totalorder %s33, 1
      %s700 = scalar_select %p699, %s33, 1
      %s701 = scalar_lea.vmem %s21, %s700
      %v702 = vld [vmem:[%s690] sm:$0x1]
      %v703 = vld [vmem:[%s683] sm:$0xf]
      %v704 = vld [vmem:[%s687] sm:$0xf]
      %v705 = vld [vmem:[%s3] sm:$0xf]
      %v706 = vld [vmem:[%s4] sm:$0xf]
      %vm707 = vcmask 31744
      %v709 = vsel %vm707, %v706, 0
      %vm711 = vcmask 1043456
      %v713 = vsel %vm711, %v704, 0
      %715 = vmatprep.subr.mxu0 0.0
      %716 = vmatpush1.msra.mxu0 %v713
      %717 = vmatprep.subr.mxu0 0.0
      %718 = vmatpush1.msra.mxu0 0.0
      %719 = vmatprep.subr.mxu0 0.0
      %720 = vmatpush1.msra.mxu0 0.0
      %721 = vmatprep.subr.mxu0 0.0
      %722 = vmatpush1.msra.mxu0 0.0
      %723 = vmatprep.subr.mxu0 0.0
      %724 = vmatpush1.msra.mxu0 0.0
      %725 = vmatprep.subr.mxu0 0.0
      %726 = vmatpush1.msra.mxu0 0.0
      %727 = vmatprep.subr.mxu0 0.0
      %728 = vmatpush1.msra.mxu0 0.0
      %729 = vmatprep.subr.mxu0 0.0
      %730 = vmatpush1.msra.mxu0 0.0
      %731 = vmatprep.subr.mxu0 0.0
      %732 = vmatpush1.msra.mxu0 0.0
      %733 = vmatprep.subr.mxu0 0.0
      %734 = vmatpush1.msra.mxu0 0.0
      %735 = vmatprep.subr.mxu0 0.0
      %736 = vmatpush1.msra.mxu0 0.0
      %737 = vmatprep.subr.mxu0 0.0
      %738 = vmatpush1.msra.mxu0 0.0
      %739 = vmatprep.subr.mxu0 0.0
      %740 = vmatpush1.msra.mxu0 0.0
      %741 = vmatprep.subr.mxu0 0.0
      %742 = vmatpush1.msra.mxu0 0.0
      %743 = vmatprep.subr.mxu0 0.0
      %744 = vmatpush1.msra.mxu0 0.0
      %745 = vmatprep.subr.mxu0 0.0
      %746 = vmatpush1.msra.mxu0 0.0
      %747 = vmatprep.subr.mxu0 0.0
      %748 = vmatpush1.msra.mxu0 0.0
      %749 = vmatprep.subr.mxu0 0.0
      %750 = vmatpush1.msra.mxu0 0.0
      %751 = vmatprep.subr.mxu0 0.0
      %752 = vmatpush1.msra.mxu0 0.0
      %753 = vmatprep.subr.mxu0 0.0
      %754 = vmatpush1.msra.mxu0 0.0
      %755 = vmatprep.subr.mxu0 0.0
      %756 = vmatpush1.msra.mxu0 0.0
      %757 = vmatprep.subr.mxu0 0.0
      %758 = vmatpush1.msra.mxu0 0.0
      %759 = vmatprep.subr.mxu0 0.0
      %760 = vmatpush1.msra.mxu0 0.0
      %761 = vmatprep.subr.mxu0 0.0
      %762 = vmatpush1.msra.mxu0 0.0
      %763 = vmatprep.subr.mxu0 0.0
      %764 = vmatpush1.msra.mxu0 0.0
      %765 = vmatprep.subr.mxu0 0.0
      %766 = vmatpush1.msra.mxu0 0.0
      %767 = vmatprep.subr.mxu0 0.0
      %768 = vmatpush1.msra.mxu0 0.0
      %769 = vmatprep.subr.mxu0 0.0
      %770 = vmatpush1.msra.mxu0 0.0
      %771 = vmatprep.subr.mxu0 0.0
      %772 = vmatpush1.msra.mxu0 0.0
      %773 = vmatprep.subr.mxu0 0.0
      %774 = vmatpush1.msra.mxu0 0.0
      %775 = vmatprep.subr.mxu0 0.0
      %776 = vmatpush1.msra.mxu0 0.0
      %777 = vmatprep.subr.mxu0 0.0
      %778 = vmatpush1.msra.mxu0 0.0
      %779 = vmatprep.mubr.f32.mxu0 0.0
      %780 = vmatmul.mubr.f32.gmra.mrb[0].mxu0 %v709
      %v781 = vpop.f32.mrb[0].mxu0
      %v782 = vadd.f32 0.0, %v781
      %v783 = vpop.f32.mrb[0].mxu0
      %784 = vdwg.mxu0
      %v786 = vsel %vm707, %v705, 0
      %v789 = vsel %vm711, %v703, 0
      %791 = vmatprep.subr.mxu0 0.0
      %792 = vmatpush1.msra.mxu0 %v789
      %793 = vmatprep.subr.mxu0 0.0
      %794 = vmatpush1.msra.mxu0 0.0
      %795 = vmatprep.subr.mxu0 0.0
      %796 = vmatpush1.msra.mxu0 0.0
      %797 = vmatprep.subr.mxu0 0.0
      %798 = vmatpush1.msra.mxu0 0.0
      %799 = vmatprep.subr.mxu0 0.0
      %800 = vmatpush1.msra.mxu0 0.0
      %801 = vmatprep.subr.mxu0 0.0
      %802 = vmatpush1.msra.mxu0 0.0
      %803 = vmatprep.subr.mxu0 0.0
      %804 = vmatpush1.msra.mxu0 0.0
      %805 = vmatprep.subr.mxu0 0.0
      %806 = vmatpush1.msra.mxu0 0.0
      %807 = vmatprep.subr.mxu0 0.0
      %808 = vmatpush1.msra.mxu0 0.0
      %809 = vmatprep.subr.mxu0 0.0
      %810 = vmatpush1.msra.mxu0 0.0
      %811 = vmatprep.subr.mxu0 0.0
      %812 = vmatpush1.msra.mxu0 0.0
      %813 = vmatprep.subr.mxu0 0.0
      %814 = vmatpush1.msra.mxu0 0.0
      %815 = vmatprep.subr.mxu0 0.0
      %816 = vmatpush1.msra.mxu0 0.0
      %817 = vmatprep.subr.mxu0 0.0
      %818 = vmatpush1.msra.mxu0 0.0
      %819 = vmatprep.subr.mxu0 0.0
      %820 = vmatpush1.msra.mxu0 0.0
      %821 = vmatprep.subr.mxu0 0.0
      %822 = vmatpush1.msra.mxu0 0.0
      %823 = vmatprep.subr.mxu0 0.0
      %824 = vmatpush1.msra.mxu0 0.0
      %825 = vmatprep.subr.mxu0 0.0
      %826 = vmatpush1.msra.mxu0 0.0
      %827 = vmatprep.subr.mxu0 0.0
      %828 = vmatpush1.msra.mxu0 0.0
      %829 = vmatprep.subr.mxu0 0.0
      %830 = vmatpush1.msra.mxu0 0.0
      %831 = vmatprep.subr.mxu0 0.0
      %832 = vmatpush1.msra.mxu0 0.0
      %833 = vmatprep.subr.mxu0 0.0
      %834 = vmatpush1.msra.mxu0 0.0
      %835 = vmatprep.subr.mxu0 0.0
      %836 = vmatpush1.msra.mxu0 0.0
      %837 = vmatprep.subr.mxu0 0.0
      %838 = vmatpush1.msra.mxu0 0.0
      %839 = vmatprep.subr.mxu0 0.0
      %840 = vmatpush1.msra.mxu0 0.0
      %841 = vmatprep.subr.mxu0 0.0
      %842 = vmatpush1.msra.mxu0 0.0
      %843 = vmatprep.subr.mxu0 0.0
      %844 = vmatpush1.msra.mxu0 0.0
      %845 = vmatprep.subr.mxu0 0.0
      %846 = vmatpush1.msra.mxu0 0.0
      %847 = vmatprep.subr.mxu0 0.0
      %848 = vmatpush1.msra.mxu0 0.0
      %849 = vmatprep.subr.mxu0 0.0
      %850 = vmatpush1.msra.mxu0 0.0
      %851 = vmatprep.subr.mxu0 0.0
      %852 = vmatpush1.msra.mxu0 0.0
      %853 = vmatprep.subr.mxu0 0.0
      %854 = vmatpush1.msra.mxu0 0.0
      %855 = vmatprep.mubr.f32.mxu0 0.0
      %856 = vmatmul.mubr.f32.gmra.mrb[0].mxu0 %v786
      %v857 = vpop.f32.mrb[0].mxu0
      %v858 = vadd.f32 %v782, %v857
      %v859 = vpop.f32.mrb[0].mxu0
      %860 = vdwg.mxu0
      %v861 = vld [vmem:[%s7] sm:$0xf]
      %863 = vset.pattern.permute.xlu0 0
      %864 = vperm.xlu0 %863, %v861
      %v865 = vpop.permute.xlu0 %864
      %v867 = vadd.f32 %v858, %v865
      %v869 = vlaneseq
      %v870 = vshrl.u32 %v869, 7
      %v871 = vsub.s32 0, %v870
      %v872 = vrot.slane %v702, %v871
      %v874 = vmul.f32 %v867, %v872
      %v875 = vld [vmem:[%s5] sm:$0xf]
      %v876 = vld [vmem:[%s6] sm:$0xf]
      %v878 = vsel %vm707, %v876, 0
      %880 = vmatprep.subr.mxu0 0.0
      %881 = vmatpush1.msra.mxu0 %v713
      %882 = vmatprep.subr.mxu0 0.0
      %883 = vmatpush1.msra.mxu0 0.0
      %884 = vmatprep.subr.mxu0 0.0
      %885 = vmatpush1.msra.mxu0 0.0
      %886 = vmatprep.subr.mxu0 0.0
      %887 = vmatpush1.msra.mxu0 0.0
      %888 = vmatprep.subr.mxu0 0.0
      %889 = vmatpush1.msra.mxu0 0.0
      %890 = vmatprep.subr.mxu0 0.0
      %891 = vmatpush1.msra.mxu0 0.0
      %892 = vmatprep.subr.mxu0 0.0
      %893 = vmatpush1.msra.mxu0 0.0
      %894 = vmatprep.subr.mxu0 0.0
      %895 = vmatpush1.msra.mxu0 0.0
      %896 = vmatprep.subr.mxu0 0.0
      %897 = vmatpush1.msra.mxu0 0.0
      %898 = vmatprep.subr.mxu0 0.0
      %899 = vmatpush1.msra.mxu0 0.0
      %900 = vmatprep.subr.mxu0 0.0
      %901 = vmatpush1.msra.mxu0 0.0
      %902 = vmatprep.subr.mxu0 0.0
      %903 = vmatpush1.msra.mxu0 0.0
      %904 = vmatprep.subr.mxu0 0.0
      %905 = vmatpush1.msra.mxu0 0.0
      %906 = vmatprep.subr.mxu0 0.0
      %907 = vmatpush1.msra.mxu0 0.0
      %908 = vmatprep.subr.mxu0 0.0
      %909 = vmatpush1.msra.mxu0 0.0
      %910 = vmatprep.subr.mxu0 0.0
      %911 = vmatpush1.msra.mxu0 0.0
      %912 = vmatprep.subr.mxu0 0.0
      %913 = vmatpush1.msra.mxu0 0.0
      %914 = vmatprep.subr.mxu0 0.0
      %915 = vmatpush1.msra.mxu0 0.0
      %916 = vmatprep.subr.mxu0 0.0
      %917 = vmatpush1.msra.mxu0 0.0
      %918 = vmatprep.subr.mxu0 0.0
      %919 = vmatpush1.msra.mxu0 0.0
      %920 = vmatprep.subr.mxu0 0.0
      %921 = vmatpush1.msra.mxu0 0.0
      %922 = vmatprep.subr.mxu0 0.0
      %923 = vmatpush1.msra.mxu0 0.0
      %924 = vmatprep.subr.mxu0 0.0
      %925 = vmatpush1.msra.mxu0 0.0
      %926 = vmatprep.subr.mxu0 0.0
      %927 = vmatpush1.msra.mxu0 0.0
      %928 = vmatprep.subr.mxu0 0.0
      %929 = vmatpush1.msra.mxu0 0.0
      %930 = vmatprep.subr.mxu0 0.0
      %931 = vmatpush1.msra.mxu0 0.0
      %932 = vmatprep.subr.mxu0 0.0
      %933 = vmatpush1.msra.mxu0 0.0
      %934 = vmatprep.subr.mxu0 0.0
      %935 = vmatpush1.msra.mxu0 0.0
      %936 = vmatprep.subr.mxu0 0.0
      %937 = vmatpush1.msra.mxu0 0.0
      %938 = vmatprep.subr.mxu0 0.0
      %939 = vmatpush1.msra.mxu0 0.0
      %940 = vmatprep.subr.mxu0 0.0
      %941 = vmatpush1.msra.mxu0 0.0
      %942 = vmatprep.subr.mxu0 0.0
      %943 = vmatpush1.msra.mxu0 0.0
      %944 = vmatprep.mubr.f32.mxu0 0.0
      %945 = vmatmul.mubr.f32.gmra.mrb[0].mxu0 %v878
      %v946 = vpop.f32.mrb[0].mxu0
      %v947 = vadd.f32 0.0, %v946
      %v948 = vpop.f32.mrb[0].mxu0
      %949 = vdwg.mxu0
      %v951 = vsel %vm707, %v875, 0
      %953 = vmatprep.subr.mxu0 0.0
      %954 = vmatpush1.msra.mxu0 %v789
      %955 = vmatprep.subr.mxu0 0.0
      %956 = vmatpush1.msra.mxu0 0.0
      %957 = vmatprep.subr.mxu0 0.0
      %958 = vmatpush1.msra.mxu0 0.0
      %959 = vmatprep.subr.mxu0 0.0
      %960 = vmatpush1.msra.mxu0 0.0
      %961 = vmatprep.subr.mxu0 0.0
      %962 = vmatpush1.msra.mxu0 0.0
      %963 = vmatprep.subr.mxu0 0.0
      %964 = vmatpush1.msra.mxu0 0.0
      %965 = vmatprep.subr.mxu0 0.0
      %966 = vmatpush1.msra.mxu0 0.0
      %967 = vmatprep.subr.mxu0 0.0
      %968 = vmatpush1.msra.mxu0 0.0
      %969 = vmatprep.subr.mxu0 0.0
      %970 = vmatpush1.msra.mxu0 0.0
      %971 = vmatprep.subr.mxu0 0.0
      %972 = vmatpush1.msra.mxu0 0.0
      %973 = vmatprep.subr.mxu0 0.0
      %974 = vmatpush1.msra.mxu0 0.0
      %975 = vmatprep.subr.mxu0 0.0
      %976 = vmatpush1.msra.mxu0 0.0
      %977 = vmatprep.subr.mxu0 0.0
      %978 = vmatpush1.msra.mxu0 0.0
      %979 = vmatprep.subr.mxu0 0.0
      %980 = vmatpush1.msra.mxu0 0.0
      %981 = vmatprep.subr.mxu0 0.0
      %982 = vmatpush1.msra.mxu0 0.0
      %983 = vmatprep.subr.mxu0 0.0
      %984 = vmatpush1.msra.mxu0 0.0
      %985 = vmatprep.subr.mxu0 0.0
      %986 = vmatpush1.msra.mxu0 0.0
      %987 = vmatprep.subr.mxu0 0.0
      %988 = vmatpush1.msra.mxu0 0.0
      %989 = vmatprep.subr.mxu0 0.0
      %990 = vmatpush1.msra.mxu0 0.0
      %991 = vmatprep.subr.mxu0 0.0
      %992 = vmatpush1.msra.mxu0 0.0
      %993 = vmatprep.subr.mxu0 0.0
      %994 = vmatpush1.msra.mxu0 0.0
      %995 = vmatprep.subr.mxu0 0.0
      %996 = vmatpush1.msra.mxu0 0.0
      %997 = vmatprep.subr.mxu0 0.0
      %998 = vmatpush1.msra.mxu0 0.0
      %999 = vmatprep.subr.mxu0 0.0
      %1000 = vmatpush1.msra.mxu0 0.0
      %1001 = vmatprep.subr.mxu0 0.0
      %1002 = vmatpush1.msra.mxu0 0.0
      %1003 = vmatprep.subr.mxu0 0.0
      %1004 = vmatpush1.msra.mxu0 0.0
      %1005 = vmatprep.subr.mxu0 0.0
      %1006 = vmatpush1.msra.mxu0 0.0
      %1007 = vmatprep.subr.mxu0 0.0
      %1008 = vmatpush1.msra.mxu0 0.0
      %1009 = vmatprep.subr.mxu0 0.0
      %1010 = vmatpush1.msra.mxu0 0.0
      %1011 = vmatprep.subr.mxu0 0.0
      %1012 = vmatpush1.msra.mxu0 0.0
      %1013 = vmatprep.subr.mxu0 0.0
      %1014 = vmatpush1.msra.mxu0 0.0
      %1015 = vmatprep.subr.mxu0 0.0
      %1016 = vmatpush1.msra.mxu0 0.0
      %1017 = vmatprep.mubr.f32.mxu0 0.0
      %1018 = vmatmul.mubr.f32.gmra.mrb[0].mxu0 %v951
      %v1019 = vpop.f32.mrb[0].mxu0
      %v1020 = vadd.f32 %v947, %v1019
      %v1021 = vpop.f32.mrb[0].mxu0
      %1022 = vdwg.mxu0
      %v1023 = vld [vmem:[%s8] sm:$0xf]
      %1025 = vset.pattern.permute.xlu0 0
      %1026 = vperm.xlu0 %1025, %v1023
      %v1027 = vpop.permute.xlu0 %1026
      %v1029 = vadd.f32 %v1020, %v1027
      %v1030 = vmul.f32 %v1029, %v872
      %v1031 = vld [vmem:[%s9] sm:$0xff]
      %v1032 = vld [vmem:[%s9 + $0x8] sm:$0xff]
      %v1033 = vld [vmem:[%s9 + $0x10] sm:$0xff]
      %v1034 = vld [vmem:[%s9 + $0x18] sm:$0xff]
      %v1035 = vld [vmem:[%s10] sm:$0xff]
      %v1036 = vld [vmem:[%s10 + $0x8] sm:$0xff]
      %v1037 = vld [vmem:[%s10 + $0x10] sm:$0xff]
      %v1038 = vld [vmem:[%s10 + $0x18] sm:$0xff]
      %1040 = vset.pattern.permute.xlu0 0
      %1041 = vperm.xlu0 %1040, %v1035
      %v1042 = vpop.permute.xlu0 %1041
      %1045 = vset.pattern.permute.xlu0 0
      %1046 = vperm.xlu0 %1045, %v1036
      %v1047 = vpop.permute.xlu0 %1046
      %1050 = vset.pattern.permute.xlu0 0
      %1051 = vperm.xlu0 %1050, %v1037
      %v1052 = vpop.permute.xlu0 %1051
      %1055 = vset.pattern.permute.xlu0 0
      %1056 = vperm.xlu0 %1055, %v1038
      %v1057 = vpop.permute.xlu0 %1056
      %v1060 = vsel %vm707, %v1031, 0
      %v1063 = vsel %vm707, %v1032, 0
      %v1066 = vsel %vm707, %v1033, 0
      %v1069 = vsel %vm707, %v1034, 0
      %v1072 = vsel %vm711, %v874, 0
      %1074 = vmatprep.subr.mxu0 0.0
      %1075 = vmatpush1.msra.mxu0 %v1072
      %1076 = vmatprep.subr.mxu0 0.0
      %1077 = vmatpush1.msra.mxu0 0.0
      %1078 = vmatprep.subr.mxu0 0.0
      %1079 = vmatpush1.msra.mxu0 0.0
      %1080 = vmatprep.subr.mxu0 0.0
      %1081 = vmatpush1.msra.mxu0 0.0
      %1082 = vmatprep.subr.mxu0 0.0
      %1083 = vmatpush1.msra.mxu0 0.0
      %1084 = vmatprep.subr.mxu0 0.0
      %1085 = vmatpush1.msra.mxu0 0.0
      %1086 = vmatprep.subr.mxu0 0.0
      %1087 = vmatpush1.msra.mxu0 0.0
      %1088 = vmatprep.subr.mxu0 0.0
      %1089 = vmatpush1.msra.mxu0 0.0
      %1090 = vmatprep.subr.mxu0 0.0
      %1091 = vmatpush1.msra.mxu0 0.0
      %1092 = vmatprep.subr.mxu0 0.0
      %1093 = vmatpush1.msra.mxu0 0.0
      %1094 = vmatprep.subr.mxu0 0.0
      %1095 = vmatpush1.msra.mxu0 0.0
      %1096 = vmatprep.subr.mxu0 0.0
      %1097 = vmatpush1.msra.mxu0 0.0
      %1098 = vmatprep.subr.mxu0 0.0
      %1099 = vmatpush1.msra.mxu0 0.0
      %1100 = vmatprep.subr.mxu0 0.0
      %1101 = vmatpush1.msra.mxu0 0.0
      %1102 = vmatprep.subr.mxu0 0.0
      %1103 = vmatpush1.msra.mxu0 0.0
      %1104 = vmatprep.subr.mxu0 0.0
      %1105 = vmatpush1.msra.mxu0 0.0
      %1106 = vmatprep.subr.mxu0 0.0
      %1107 = vmatpush1.msra.mxu0 0.0
      %1108 = vmatprep.subr.mxu0 0.0
      %1109 = vmatpush1.msra.mxu0 0.0
      %1110 = vmatprep.subr.mxu0 0.0
      %1111 = vmatpush1.msra.mxu0 0.0
      %1112 = vmatprep.subr.mxu0 0.0
      %1113 = vmatpush1.msra.mxu0 0.0
      %1114 = vmatprep.subr.mxu0 0.0
      %1115 = vmatpush1.msra.mxu0 0.0
      %1116 = vmatprep.subr.mxu0 0.0
      %1117 = vmatpush1.msra.mxu0 0.0
      %1118 = vmatprep.subr.mxu0 0.0
      %1119 = vmatpush1.msra.mxu0 0.0
      %1120 = vmatprep.subr.mxu0 0.0
      %1121 = vmatpush1.msra.mxu0 0.0
      %1122 = vmatprep.subr.mxu0 0.0
      %1123 = vmatpush1.msra.mxu0 0.0
      %1124 = vmatprep.subr.mxu0 0.0
      %1125 = vmatpush1.msra.mxu0 0.0
      %1126 = vmatprep.subr.mxu0 0.0
      %1127 = vmatpush1.msra.mxu0 0.0
      %1128 = vmatprep.subr.mxu0 0.0
      %1129 = vmatpush1.msra.mxu0 0.0
      %1130 = vmatprep.subr.mxu0 0.0
      %1131 = vmatpush1.msra.mxu0 0.0
      %1132 = vmatprep.subr.mxu0 0.0
      %1133 = vmatpush1.msra.mxu0 0.0
      %1134 = vmatprep.subr.mxu0 0.0
      %1135 = vmatpush1.msra.mxu0 0.0
      %1136 = vmatprep.subr.mxu0 0.0
      %1137 = vmatpush1.msra.mxu0 0.0
      %1138 = vmatprep.mubr.f32.mxu0 0.0
      %1139 = vmatmul.mubr.f32.gmra.mrb[0].mxu0 %v1060
      %v1140 = vpop.f32.mrb[0].mxu0
      %v1141 = vadd.f32 %v1042, %v1140
      %v1142 = vpop.f32.mrb[0].mxu0
      %1143 = vmatprep.mubr.f32.mxu0 0.0
      %1144 = vmatmul.mubr.f32.gmra.mrb[0].mxu0 %v1063
      %v1145 = vpop.f32.mrb[0].mxu0
      %v1146 = vadd.f32 %v1047, %v1145
      %v1147 = vpop.f32.mrb[0].mxu0
      %1148 = vmatprep.mubr.f32.mxu0 0.0
      %1149 = vmatmul.mubr.f32.gmra.mrb[0].mxu0 %v1066
      %v1150 = vpop.f32.mrb[0].mxu0
      %v1151 = vadd.f32 %v1052, %v1150
      %v1152 = vpop.f32.mrb[0].mxu0
      %1153 = vmatprep.mubr.f32.mxu0 0.0
      %1154 = vmatmul.mubr.f32.gmra.mrb[0].mxu0 %v1069
      %v1155 = vpop.f32.mrb[0].mxu0
      %v1156 = vadd.f32 %v1057, %v1155
      %v1157 = vpop.f32.mrb[0].mxu0
      %1158 = vdwg.mxu0
      %v1159 = vmul.f32 %v1141, %v872
      %v1160 = vmul.f32 %v1146, %v872
      %v1161 = vmul.f32 %v1151, %v872
      %v1162 = vmul.f32 %v1156, %v872
      %1163 = vrot.lane.b32.xlu0 %v1159, 1
      %v1164 = vpop.permute.xlu0 %1163
      %1165 = vrot.lane.b32.xlu0 %v1160, 1
      %v1166 = vpop.permute.xlu0 %1165
      %1167 = vrot.lane.b32.xlu0 %v1161, 1
      %v1168 = vpop.permute.xlu0 %1167
      %1169 = vrot.lane.b32.xlu0 %v1162, 1
      %v1170 = vpop.permute.xlu0 %1169
      %1171 = vrot.lane.b32.xlu0 %v1159, 127
      %v1172 = vpop.permute.xlu0 %1171
      %1173 = vrot.lane.b32.xlu0 %v1160, 127
      %v1174 = vpop.permute.xlu0 %1173
      %1175 = vrot.lane.b32.xlu0 %v1161, 127
      %v1176 = vpop.permute.xlu0 %1175
      %1177 = vrot.lane.b32.xlu0 %v1162, 127
      %v1178 = vpop.permute.xlu0 %1177
      %v1179 = vld [vmem:[%s11] sm:$0xff]
      %v1180 = vld [vmem:[%s11 + $0x8] sm:$0xff]
      %v1181 = vld [vmem:[%s11 + $0x10] sm:$0xff]
      %v1182 = vld [vmem:[%s11 + $0x18] sm:$0xff]
      %v1183 = vld [vmem:[%s11 + $0x20] sm:$0xff]
      %v1184 = vld [vmem:[%s11 + $0x28] sm:$0xff]
      %v1185 = vld [vmem:[%s11 + $0x30] sm:$0xff]
      %v1186 = vld [vmem:[%s11 + $0x38] sm:$0xff]
      %v1187 = vld [vmem:[%s12] sm:$0xff]
      %v1188 = vld [vmem:[%s12 + $0x8] sm:$0xff]
      %v1189 = vld [vmem:[%s12 + $0x10] sm:$0xff]
      %v1190 = vld [vmem:[%s12 + $0x18] sm:$0xff]
      %v1191 = vld [vmem:[%s12 + $0x20] sm:$0xff]
      %v1192 = vld [vmem:[%s12 + $0x28] sm:$0xff]
      %v1193 = vld [vmem:[%s12 + $0x30] sm:$0xff]
      %v1194 = vld [vmem:[%s12 + $0x38] sm:$0xff]
      %1196 = vset.pattern.permute.xlu0 0
      %1197 = vperm.xlu0 %1196, %v1187
      %v1198 = vpop.permute.xlu0 %1197
      %1201 = vset.pattern.permute.xlu0 0
      %1202 = vperm.xlu0 %1201, %v1188
      %v1203 = vpop.permute.xlu0 %1202
      %1206 = vset.pattern.permute.xlu0 0
      %1207 = vperm.xlu0 %1206, %v1189
      %v1208 = vpop.permute.xlu0 %1207
      %1211 = vset.pattern.permute.xlu0 0
      %1212 = vperm.xlu0 %1211, %v1190
      %v1213 = vpop.permute.xlu0 %1212
      %1216 = vset.pattern.permute.xlu0 0
      %1217 = vperm.xlu0 %1216, %v1191
      %v1218 = vpop.permute.xlu0 %1217
      %1221 = vset.pattern.permute.xlu0 0
      %1222 = vperm.xlu0 %1221, %v1192
      %v1223 = vpop.permute.xlu0 %1222
      %1226 = vset.pattern.permute.xlu0 0
      %1227 = vperm.xlu0 %1226, %v1193
      %v1228 = vpop.permute.xlu0 %1227
      %1231 = vset.pattern.permute.xlu0 0
      %1232 = vperm.xlu0 %1231, %v1194
      %v1233 = vpop.permute.xlu0 %1232
      %vm1235 = vcmask 785408
      %v1237 = vsel %vm1235, %v1179, 0
      %v1240 = vsel %vm1235, %v1180, 0
      %v1243 = vsel %vm1235, %v1181, 0
      %v1246 = vsel %vm1235, %v1182, 0
      %v1249 = vsel %vm1235, %v1183, 0
      %v1252 = vsel %vm1235, %v1184, 0
      %v1255 = vsel %vm1235, %v1185, 0
      %v1258 = vsel %vm1235, %v1186, 0
      %1260 = vmatprep.subr.mxu0 0.0
      %1261 = vmatpush1.msra.mxu0 %v1164
      %1262 = vmatprep.subr.mxu0 0.0
      %1263 = vmatpush1.msra.mxu0 %v1166
      %1264 = vmatprep.subr.mxu0 0.0
      %1265 = vmatpush1.msra.mxu0 %v1168
      %1266 = vmatprep.subr.mxu0 0.0
      %1267 = vmatpush1.msra.mxu0 %v1170
      %1268 = vmatprep.subr.mxu0 0.0
      %1269 = vmatpush1.msra.mxu0 %v1159
      %1270 = vmatprep.subr.mxu0 0.0
      %1271 = vmatpush1.msra.mxu0 %v1160
      %1272 = vmatprep.subr.mxu0 0.0
      %1273 = vmatpush1.msra.mxu0 %v1161
      %1274 = vmatprep.subr.mxu0 0.0
      %1275 = vmatpush1.msra.mxu0 %v1162
      %1276 = vmatprep.subr.mxu0 0.0
      %1277 = vmatpush1.msra.mxu0 %v1172
      %1278 = vmatprep.subr.mxu0 0.0
      %1279 = vmatpush1.msra.mxu0 %v1174
      %1280 = vmatprep.subr.mxu0 0.0
      %1281 = vmatpush1.msra.mxu0 %v1176
      %1282 = vmatprep.subr.mxu0 0.0
      %1283 = vmatpush1.msra.mxu0 %v1178
      %1284 = vmatprep.subr.mxu0 0.0
      %1285 = vmatpush1.msra.mxu0 0.0
      %1286 = vmatprep.subr.mxu0 0.0
      %1287 = vmatpush1.msra.mxu0 0.0
      %1288 = vmatprep.subr.mxu0 0.0
      %1289 = vmatpush1.msra.mxu0 0.0
      %1290 = vmatprep.subr.mxu0 0.0
      %1291 = vmatpush1.msra.mxu0 0.0
      %1292 = vmatprep.subr.mxu0 0.0
      %1293 = vmatpush1.msra.mxu0 0.0
      %1294 = vmatprep.subr.mxu0 0.0
      %1295 = vmatpush1.msra.mxu0 0.0
      %1296 = vmatprep.subr.mxu0 0.0
      %1297 = vmatpush1.msra.mxu0 0.0
      %1298 = vmatprep.subr.mxu0 0.0
      %1299 = vmatpush1.msra.mxu0 0.0
      %1300 = vmatprep.subr.mxu0 0.0
      %1301 = vmatpush1.msra.mxu0 0.0
      %1302 = vmatprep.subr.mxu0 0.0
      %1303 = vmatpush1.msra.mxu0 0.0
      %1304 = vmatprep.subr.mxu0 0.0
      %1305 = vmatpush1.msra.mxu0 0.0
      %1306 = vmatprep.subr.mxu0 0.0
      %1307 = vmatpush1.msra.mxu0 0.0
      %1308 = vmatprep.subr.mxu0 0.0
      %1309 = vmatpush1.msra.mxu0 0.0
      %1310 = vmatprep.subr.mxu0 0.0
      %1311 = vmatpush1.msra.mxu0 0.0
      %1312 = vmatprep.subr.mxu0 0.0
      %1313 = vmatpush1.msra.mxu0 0.0
      %1314 = vmatprep.subr.mxu0 0.0
      %1315 = vmatpush1.msra.mxu0 0.0
      %1316 = vmatprep.subr.mxu0 0.0
      %1317 = vmatpush1.msra.mxu0 0.0
      %1318 = vmatprep.subr.mxu0 0.0
      %1319 = vmatpush1.msra.mxu0 0.0
      %1320 = vmatprep.subr.mxu0 0.0
      %1321 = vmatpush1.msra.mxu0 0.0
      %1322 = vmatprep.subr.mxu0 0.0
      %1323 = vmatpush1.msra.mxu0 0.0
      %1324 = vmatprep.mubr.f32.mxu0 0.0
      %1325 = vmatmul.mubr.f32.gmra.mrb[0].mxu0 %v1237
      %v1326 = vpop.f32.mrb[0].mxu0
      %v1327 = vadd.f32 %v1198, %v1326
      %v1328 = vpop.f32.mrb[0].mxu0
      %1329 = vmatprep.mubr.f32.mxu0 0.0
      %1330 = vmatmul.mubr.f32.gmra.mrb[0].mxu0 %v1240
      %v1331 = vpop.f32.mrb[0].mxu0
      %v1332 = vadd.f32 %v1203, %v1331
      %v1333 = vpop.f32.mrb[0].mxu0
      %1334 = vmatprep.mubr.f32.mxu0 0.0
      %1335 = vmatmul.mubr.f32.gmra.mrb[0].mxu0 %v1243
      %v1336 = vpop.f32.mrb[0].mxu0
      %v1337 = vadd.f32 %v1208, %v1336
      %v1338 = vpop.f32.mrb[0].mxu0
      %1339 = vmatprep.mubr.f32.mxu0 0.0
      %1340 = vmatmul.mubr.f32.gmra.mrb[0].mxu0 %v1246
      %v1341 = vpop.f32.mrb[0].mxu0
      %v1342 = vadd.f32 %v1213, %v1341
      %v1343 = vpop.f32.mrb[0].mxu0
      %1344 = vmatprep.mubr.f32.mxu0 0.0
      %1345 = vmatmul.mubr.f32.gmra.mrb[0].mxu0 %v1249
      %v1346 = vpop.f32.mrb[0].mxu0
      %v1347 = vadd.f32 %v1218, %v1346
      %v1348 = vpop.f32.mrb[0].mxu0
      %1349 = vmatprep.mubr.f32.mxu0 0.0
      %1350 = vmatmul.mubr.f32.gmra.mrb[0].mxu0 %v1252
      %v1351 = vpop.f32.mrb[0].mxu0
      %v1352 = vadd.f32 %v1223, %v1351
      %v1353 = vpop.f32.mrb[0].mxu0
      %1354 = vmatprep.mubr.f32.mxu0 0.0
      %1355 = vmatmul.mubr.f32.gmra.mrb[0].mxu0 %v1255
      %v1356 = vpop.f32.mrb[0].mxu0
      %v1357 = vadd.f32 %v1228, %v1356
      %v1358 = vpop.f32.mrb[0].mxu0
      %1359 = vmatprep.mubr.f32.mxu0 0.0
      %1360 = vmatmul.mubr.f32.gmra.mrb[0].mxu0 %v1258
      %v1361 = vpop.f32.mrb[0].mxu0
      %v1362 = vadd.f32 %v1233, %v1361
      %v1363 = vpop.f32.mrb[0].mxu0
      %1364 = vdwg.mxu0
      %v1365 = vtanh.pop %v1327
      %v1366 = vtanh.pop %v1332
      %v1367 = vtanh.pop %v1337
      %v1368 = vtanh.pop %v1342
      %v1369 = vxor.u32 %v1347, 2147483648
      %v1370 = vxor.u32 %v1352, 2147483648
      %v1371 = vxor.u32 %v1357, 2147483648
      %v1372 = vxor.u32 %v1362, 2147483648
      %v1373 = vmul.f32 %v1369, 1.442695
      %v1374 = vpow.pop %v1373
      %v1375 = vmul.f32 %v1370, 1.442695
      %v1376 = vpow.pop %v1375
      %v1377 = vmul.f32 %v1371, 1.442695
      %v1378 = vpow.pop %v1377
      %v1379 = vmul.f32 %v1372, 1.442695
      %v1380 = vpow.pop %v1379
      %v1381 = vadd.f32 %v1374, 1.0
      %v1382 = vadd.f32 %v1376, 1.0
      %v1383 = vadd.f32 %v1378, 1.0
      %v1384 = vadd.f32 %v1380, 1.0
      %v1385 = vrcp.pop %v1381
      %v1386 = vmul.f32 1.0, %v1385
      %v1387 = vrcp.pop %v1382
      %v1388 = vmul.f32 1.0, %v1387
      %v1389 = vrcp.pop %v1383
      %v1390 = vmul.f32 1.0, %v1389
      %v1391 = vrcp.pop %v1384
      %v1392 = vmul.f32 1.0, %v1391
      %v1393 = vmul.f32 %v1365, %v1386
      %v1394 = vmul.f32 %v1366, %v1388
      %v1395 = vmul.f32 %v1367, %v1390
      %v1396 = vmul.f32 %v1368, %v1392
      %v1397 = vld [vmem:[%s13] sm:$0xff]
      %v1398 = vld [vmem:[%s13 + $0x8] sm:$0xff]
      %v1399 = vld [vmem:[%s13 + $0x10] sm:$0xff]
      %v1400 = vld [vmem:[%s13 + $0x18] sm:$0xff]
      %v1401 = vld [vmem:[%s13 + $0x20] sm:$0xff]
      %v1402 = vld [vmem:[%s13 + $0x28] sm:$0xff]
      %v1403 = vld [vmem:[%s13 + $0x30] sm:$0xff]
      %v1404 = vld [vmem:[%s13 + $0x38] sm:$0xff]
      %v1405 = vld [vmem:[%s14] sm:$0xff]
      %v1406 = vld [vmem:[%s14 + $0x8] sm:$0xff]
      %v1407 = vld [vmem:[%s14 + $0x10] sm:$0xff]
      %v1408 = vld [vmem:[%s14 + $0x18] sm:$0xff]
      %v1409 = vld [vmem:[%s14 + $0x20] sm:$0xff]
      %v1410 = vld [vmem:[%s14 + $0x28] sm:$0xff]
      %v1411 = vld [vmem:[%s14 + $0x30] sm:$0xff]
      %v1412 = vld [vmem:[%s14 + $0x38] sm:$0xff]
      %1414 = vset.pattern.permute.xlu0 0
      %1415 = vperm.xlu0 %1414, %v1405
      %v1416 = vpop.permute.xlu0 %1415
      %1419 = vset.pattern.permute.xlu0 0
      %1420 = vperm.xlu0 %1419, %v1406
      %v1421 = vpop.permute.xlu0 %1420
      %1424 = vset.pattern.permute.xlu0 0
      %1425 = vperm.xlu0 %1424, %v1407
      %v1426 = vpop.permute.xlu0 %1425
      %1429 = vset.pattern.permute.xlu0 0
      %1430 = vperm.xlu0 %1429, %v1408
      %v1431 = vpop.permute.xlu0 %1430
      %1434 = vset.pattern.permute.xlu0 0
      %1435 = vperm.xlu0 %1434, %v1409
      %v1436 = vpop.permute.xlu0 %1435
      %1439 = vset.pattern.permute.xlu0 0
      %1440 = vperm.xlu0 %1439, %v1410
      %v1441 = vpop.permute.xlu0 %1440
      %1444 = vset.pattern.permute.xlu0 0
      %1445 = vperm.xlu0 %1444, %v1411
      %v1446 = vpop.permute.xlu0 %1445
      %1449 = vset.pattern.permute.xlu0 0
      %1450 = vperm.xlu0 %1449, %v1412
      %v1451 = vpop.permute.xlu0 %1450
      %vm1453 = vcmask 261120
      %v1455 = vsel %vm1453, %v1397, 0
      %v1458 = vsel %vm1453, %v1398, 0
      %v1461 = vsel %vm1453, %v1399, 0
      %v1464 = vsel %vm1453, %v1400, 0
      %v1467 = vsel %vm1453, %v1401, 0
      %v1470 = vsel %vm1453, %v1402, 0
      %v1473 = vsel %vm1453, %v1403, 0
      %v1476 = vsel %vm1453, %v1404, 0
      %1478 = vmatprep.subr.mxu0 0.0
      %1479 = vmatpush1.msra.mxu0 %v1393
      %1480 = vmatprep.subr.mxu0 0.0
      %1481 = vmatpush1.msra.mxu0 %v1394
      %1482 = vmatprep.subr.mxu0 0.0
      %1483 = vmatpush1.msra.mxu0 %v1395
      %1484 = vmatprep.subr.mxu0 0.0
      %1485 = vmatpush1.msra.mxu0 %v1396
      %1486 = vmatprep.subr.mxu0 0.0
      %1487 = vmatpush1.msra.mxu0 0.0
      %1488 = vmatprep.subr.mxu0 0.0
      %1489 = vmatpush1.msra.mxu0 0.0
      %1490 = vmatprep.subr.mxu0 0.0
      %1491 = vmatpush1.msra.mxu0 0.0
      %1492 = vmatprep.subr.mxu0 0.0
      %1493 = vmatpush1.msra.mxu0 0.0
      %1494 = vmatprep.subr.mxu0 0.0
      %1495 = vmatpush1.msra.mxu0 0.0
      %1496 = vmatprep.subr.mxu0 0.0
      %1497 = vmatpush1.msra.mxu0 0.0
      %1498 = vmatprep.subr.mxu0 0.0
      %1499 = vmatpush1.msra.mxu0 0.0
      %1500 = vmatprep.subr.mxu0 0.0
      %1501 = vmatpush1.msra.mxu0 0.0
      %1502 = vmatprep.subr.mxu0 0.0
      %1503 = vmatpush1.msra.mxu0 0.0
      %1504 = vmatprep.subr.mxu0 0.0
      %1505 = vmatpush1.msra.mxu0 0.0
      %1506 = vmatprep.subr.mxu0 0.0
      %1507 = vmatpush1.msra.mxu0 0.0
      %1508 = vmatprep.subr.mxu0 0.0
      %1509 = vmatpush1.msra.mxu0 0.0
      %1510 = vmatprep.subr.mxu0 0.0
      %1511 = vmatpush1.msra.mxu0 0.0
      %1512 = vmatprep.subr.mxu0 0.0
      %1513 = vmatpush1.msra.mxu0 0.0
      %1514 = vmatprep.subr.mxu0 0.0
      %1515 = vmatpush1.msra.mxu0 0.0
      %1516 = vmatprep.subr.mxu0 0.0
      %1517 = vmatpush1.msra.mxu0 0.0
      %1518 = vmatprep.subr.mxu0 0.0
      %1519 = vmatpush1.msra.mxu0 0.0
      %1520 = vmatprep.subr.mxu0 0.0
      %1521 = vmatpush1.msra.mxu0 0.0
      %1522 = vmatprep.subr.mxu0 0.0
      %1523 = vmatpush1.msra.mxu0 0.0
      %1524 = vmatprep.subr.mxu0 0.0
      %1525 = vmatpush1.msra.mxu0 0.0
      %1526 = vmatprep.subr.mxu0 0.0
      %1527 = vmatpush1.msra.mxu0 0.0
      %1528 = vmatprep.subr.mxu0 0.0
      %1529 = vmatpush1.msra.mxu0 0.0
      %1530 = vmatprep.subr.mxu0 0.0
      %1531 = vmatpush1.msra.mxu0 0.0
      %1532 = vmatprep.subr.mxu0 0.0
      %1533 = vmatpush1.msra.mxu0 0.0
      %1534 = vmatprep.subr.mxu0 0.0
      %1535 = vmatpush1.msra.mxu0 0.0
      %1536 = vmatprep.subr.mxu0 0.0
      %1537 = vmatpush1.msra.mxu0 0.0
      %1538 = vmatprep.subr.mxu0 0.0
      %1539 = vmatpush1.msra.mxu0 0.0
      %1540 = vmatprep.subr.mxu0 0.0
      %1541 = vmatpush1.msra.mxu0 0.0
      %1542 = vmatprep.mubr.f32.mxu0 0.0
      %1543 = vmatmul.mubr.f32.gmra.mrb[0].mxu0 %v1455
      %v1544 = vpop.f32.mrb[0].mxu0
      %v1545 = vadd.f32 %v1416, %v1544
      %v1546 = vpop.f32.mrb[0].mxu0
      %1547 = vmatprep.mubr.f32.mxu0 0.0
      %1548 = vmatmul.mubr.f32.gmra.mrb[0].mxu0 %v1458
      %v1549 = vpop.f32.mrb[0].mxu0
      %v1550 = vadd.f32 %v1421, %v1549
      %v1551 = vpop.f32.mrb[0].mxu0
      %1552 = vmatprep.mubr.f32.mxu0 0.0
      %1553 = vmatmul.mubr.f32.gmra.mrb[0].mxu0 %v1461
      %v1554 = vpop.f32.mrb[0].mxu0
      %v1555 = vadd.f32 %v1426, %v1554
      %v1556 = vpop.f32.mrb[0].mxu0
      %1557 = vmatprep.mubr.f32.mxu0 0.0
      %1558 = vmatmul.mubr.f32.gmra.mrb[0].mxu0 %v1464
      %v1559 = vpop.f32.mrb[0].mxu0
      %v1560 = vadd.f32 %v1431, %v1559
      %v1561 = vpop.f32.mrb[0].mxu0
      %1562 = vmatprep.mubr.f32.mxu0 0.0
      %1563 = vmatmul.mubr.f32.gmra.mrb[0].mxu0 %v1467
      %v1564 = vpop.f32.mrb[0].mxu0
      %v1565 = vadd.f32 %v1436, %v1564
      %v1566 = vpop.f32.mrb[0].mxu0
      %1567 = vmatprep.mubr.f32.mxu0 0.0
      %1568 = vmatmul.mubr.f32.gmra.mrb[0].mxu0 %v1470
      %v1569 = vpop.f32.mrb[0].mxu0
      %v1570 = vadd.f32 %v1441, %v1569
      %v1571 = vpop.f32.mrb[0].mxu0
      %1572 = vmatprep.mubr.f32.mxu0 0.0
      %1573 = vmatmul.mubr.f32.gmra.mrb[0].mxu0 %v1473
      %v1574 = vpop.f32.mrb[0].mxu0
      %v1575 = vadd.f32 %v1446, %v1574
      %v1576 = vpop.f32.mrb[0].mxu0
      %1577 = vmatprep.mubr.f32.mxu0 0.0
      %1578 = vmatmul.mubr.f32.gmra.mrb[0].mxu0 %v1476
      %v1579 = vpop.f32.mrb[0].mxu0
      %v1580 = vadd.f32 %v1451, %v1579
      %v1581 = vpop.f32.mrb[0].mxu0
      %1582 = vdwg.mxu0
      %v1583 = vadd.f32 %v1159, %v1545
      %v1584 = vadd.f32 %v1160, %v1550
      %v1585 = vadd.f32 %v1161, %v1555
      %v1586 = vadd.f32 %v1162, %v1560
      %v1587 = vmul.f32 %v1583, %v872
      %v1588 = vmul.f32 %v1584, %v872
      %v1589 = vmul.f32 %v1585, %v872
      %v1590 = vmul.f32 %v1586, %v872
      %v1591 = vadd.f32 %v1565, 0.0
      %v1592 = vadd.f32 %v1570, 0.0
      %v1593 = vadd.f32 %v1575, 0.0
      %v1594 = vadd.f32 %v1580, 0.0
      %1595 = vrot.lane.b32.xlu0 %v1587, 2
      %v1596 = vpop.permute.xlu0 %1595
      %1597 = vrot.lane.b32.xlu0 %v1588, 2
      %v1598 = vpop.permute.xlu0 %1597
      %1599 = vrot.lane.b32.xlu0 %v1589, 2
      %v1600 = vpop.permute.xlu0 %1599
      %1601 = vrot.lane.b32.xlu0 %v1590, 2
      %v1602 = vpop.permute.xlu0 %1601
      %1603 = vrot.lane.b32.xlu0 %v1587, 126
      %v1604 = vpop.permute.xlu0 %1603
      %1605 = vrot.lane.b32.xlu0 %v1588, 126
      %v1606 = vpop.permute.xlu0 %1605
      %1607 = vrot.lane.b32.xlu0 %v1589, 126
      %v1608 = vpop.permute.xlu0 %1607
      %1609 = vrot.lane.b32.xlu0 %v1590, 126
      %v1610 = vpop.permute.xlu0 %1609
      %s1611 = scalar_lea.vmem %s11, 64
      %v1612 = vld [vmem:[%s1611] sm:$0xff]
      %v1613 = vld [vmem:[%s1611 + $0x8] sm:$0xff]
      %v1614 = vld [vmem:[%s1611 + $0x10] sm:$0xff]
      %v1615 = vld [vmem:[%s1611 + $0x18] sm:$0xff]
      %v1616 = vld [vmem:[%s1611 + $0x20] sm:$0xff]
      %v1617 = vld [vmem:[%s1611 + $0x28] sm:$0xff]
      %v1618 = vld [vmem:[%s1611 + $0x30] sm:$0xff]
      %v1619 = vld [vmem:[%s1611 + $0x38] sm:$0xff]
      %s1620 = scalar_lea.vmem %s12, 64
      %v1621 = vld [vmem:[%s1620] sm:$0xff]
      %v1622 = vld [vmem:[%s1620 + $0x8] sm:$0xff]
      %v1623 = vld [vmem:[%s1620 + $0x10] sm:$0xff]
      %v1624 = vld [vmem:[%s1620 + $0x18] sm:$0xff]
      %v1625 = vld [vmem:[%s1620 + $0x20] sm:$0xff]
      %v1626 = vld [vmem:[%s1620 + $0x28] sm:$0xff]
      %v1627 = vld [vmem:[%s1620 + $0x30] sm:$0xff]
      %v1628 = vld [vmem:[%s1620 + $0x38] sm:$0xff]
      %1630 = vset.pattern.permute.xlu0 0
      %1631 = vperm.xlu0 %1630, %v1621
      %v1632 = vpop.permute.xlu0 %1631
      %1635 = vset.pattern.permute.xlu0 0
      %1636 = vperm.xlu0 %1635, %v1622
      %v1637 = vpop.permute.xlu0 %1636
      %1640 = vset.pattern.permute.xlu0 0
      %1641 = vperm.xlu0 %1640, %v1623
      %v1642 = vpop.permute.xlu0 %1641
      %1645 = vset.pattern.permute.xlu0 0
      %1646 = vperm.xlu0 %1645, %v1624
      %v1647 = vpop.permute.xlu0 %1646
      %1650 = vset.pattern.permute.xlu0 0
      %1651 = vperm.xlu0 %1650, %v1625
      %v1652 = vpop.permute.xlu0 %1651
      %1655 = vset.pattern.permute.xlu0 0
      %1656 = vperm.xlu0 %1655, %v1626
      %v1657 = vpop.permute.xlu0 %1656
      %1660 = vset.pattern.permute.xlu0 0
      %1661 = vperm.xlu0 %1660, %v1627
      %v1662 = vpop.permute.xlu0 %1661
      %1665 = vset.pattern.permute.xlu0 0
      %1666 = vperm.xlu0 %1665, %v1628
      %v1667 = vpop.permute.xlu0 %1666
      %v1670 = vsel %vm1235, %v1612, 0
      %v1673 = vsel %vm1235, %v1613, 0
      %v1676 = vsel %vm1235, %v1614, 0
      %v1679 = vsel %vm1235, %v1615, 0
      %v1682 = vsel %vm1235, %v1616, 0
      %v1685 = vsel %vm1235, %v1617, 0
      %v1688 = vsel %vm1235, %v1618, 0
      %v1691 = vsel %vm1235, %v1619, 0
      %1693 = vmatprep.subr.mxu0 0.0
      %1694 = vmatpush1.msra.mxu0 %v1596
      %1695 = vmatprep.subr.mxu0 0.0
      %1696 = vmatpush1.msra.mxu0 %v1598
      %1697 = vmatprep.subr.mxu0 0.0
      %1698 = vmatpush1.msra.mxu0 %v1600
      %1699 = vmatprep.subr.mxu0 0.0
      %1700 = vmatpush1.msra.mxu0 %v1602
      %1701 = vmatprep.subr.mxu0 0.0
      %1702 = vmatpush1.msra.mxu0 %v1587
      %1703 = vmatprep.subr.mxu0 0.0
      %1704 = vmatpush1.msra.mxu0 %v1588
      %1705 = vmatprep.subr.mxu0 0.0
      %1706 = vmatpush1.msra.mxu0 %v1589
      %1707 = vmatprep.subr.mxu0 0.0
      %1708 = vmatpush1.msra.mxu0 %v1590
      %1709 = vmatprep.subr.mxu0 0.0
      %1710 = vmatpush1.msra.mxu0 %v1604
      %1711 = vmatprep.subr.mxu0 0.0
      %1712 = vmatpush1.msra.mxu0 %v1606
      %1713 = vmatprep.subr.mxu0 0.0
      %1714 = vmatpush1.msra.mxu0 %v1608
      %1715 = vmatprep.subr.mxu0 0.0
      %1716 = vmatpush1.msra.mxu0 %v1610
      %1717 = vmatprep.subr.mxu0 0.0
      %1718 = vmatpush1.msra.mxu0 0.0
      %1719 = vmatprep.subr.mxu0 0.0
      %1720 = vmatpush1.msra.mxu0 0.0
      %1721 = vmatprep.subr.mxu0 0.0
      %1722 = vmatpush1.msra.mxu0 0.0
      %1723 = vmatprep.subr.mxu0 0.0
      %1724 = vmatpush1.msra.mxu0 0.0
      %1725 = vmatprep.subr.mxu0 0.0
      %1726 = vmatpush1.msra.mxu0 0.0
      %1727 = vmatprep.subr.mxu0 0.0
      %1728 = vmatpush1.msra.mxu0 0.0
      %1729 = vmatprep.subr.mxu0 0.0
      %1730 = vmatpush1.msra.mxu0 0.0
      %1731 = vmatprep.subr.mxu0 0.0
      %1732 = vmatpush1.msra.mxu0 0.0
      %1733 = vmatprep.subr.mxu0 0.0
      %1734 = vmatpush1.msra.mxu0 0.0
      %1735 = vmatprep.subr.mxu0 0.0
      %1736 = vmatpush1.msra.mxu0 0.0
      %1737 = vmatprep.subr.mxu0 0.0
      %1738 = vmatpush1.msra.mxu0 0.0
      %1739 = vmatprep.subr.mxu0 0.0
      %1740 = vmatpush1.msra.mxu0 0.0
      %1741 = vmatprep.subr.mxu0 0.0
      %1742 = vmatpush1.msra.mxu0 0.0
      %1743 = vmatprep.subr.mxu0 0.0
      %1744 = vmatpush1.msra.mxu0 0.0
      %1745 = vmatprep.subr.mxu0 0.0
      %1746 = vmatpush1.msra.mxu0 0.0
      %1747 = vmatprep.subr.mxu0 0.0
      %1748 = vmatpush1.msra.mxu0 0.0
      %1749 = vmatprep.subr.mxu0 0.0
      %1750 = vmatpush1.msra.mxu0 0.0
      %1751 = vmatprep.subr.mxu0 0.0
      %1752 = vmatpush1.msra.mxu0 0.0
      %1753 = vmatprep.subr.mxu0 0.0
      %1754 = vmatpush1.msra.mxu0 0.0
      %1755 = vmatprep.subr.mxu0 0.0
      %1756 = vmatpush1.msra.mxu0 0.0
      %1757 = vmatprep.mubr.f32.mxu0 0.0
      %1758 = vmatmul.mubr.f32.gmra.mrb[0].mxu0 %v1670
      %v1759 = vpop.f32.mrb[0].mxu0
      %v1760 = vadd.f32 %v1632, %v1759
      %v1761 = vpop.f32.mrb[0].mxu0
      %1762 = vmatprep.mubr.f32.mxu0 0.0
      %1763 = vmatmul.mubr.f32.gmra.mrb[0].mxu0 %v1673
      %v1764 = vpop.f32.mrb[0].mxu0
      %v1765 = vadd.f32 %v1637, %v1764
      %v1766 = vpop.f32.mrb[0].mxu0
      %1767 = vmatprep.mubr.f32.mxu0 0.0
      %1768 = vmatmul.mubr.f32.gmra.mrb[0].mxu0 %v1676
      %v1769 = vpop.f32.mrb[0].mxu0
      %v1770 = vadd.f32 %v1642, %v1769
      %v1771 = vpop.f32.mrb[0].mxu0
      %1772 = vmatprep.mubr.f32.mxu0 0.0
      %1773 = vmatmul.mubr.f32.gmra.mrb[0].mxu0 %v1679
      %v1774 = vpop.f32.mrb[0].mxu0
      %v1775 = vadd.f32 %v1647, %v1774
      %v1776 = vpop.f32.mrb[0].mxu0
      %1777 = vmatprep.mubr.f32.mxu0 0.0
      %1778 = vmatmul.mubr.f32.gmra.mrb[0].mxu0 %v1682
      %v1779 = vpop.f32.mrb[0].mxu0
      %v1780 = vadd.f32 %v1652, %v1779
      %v1781 = vpop.f32.mrb[0].mxu0
      %1782 = vmatprep.mubr.f32.mxu0 0.0
      %1783 = vmatmul.mubr.f32.gmra.mrb[0].mxu0 %v1685
      %v1784 = vpop.f32.mrb[0].mxu0
      %v1785 = vadd.f32 %v1657, %v1784
      %v1786 = vpop.f32.mrb[0].mxu0
      %1787 = vmatprep.mubr.f32.mxu0 0.0
      %1788 = vmatmul.mubr.f32.gmra.mrb[0].mxu0 %v1688
      %v1789 = vpop.f32.mrb[0].mxu0
      %v1790 = vadd.f32 %v1662, %v1789
      %v1791 = vpop.f32.mrb[0].mxu0
      %1792 = vmatprep.mubr.f32.mxu0 0.0
      %1793 = vmatmul.mubr.f32.gmra.mrb[0].mxu0 %v1691
      %v1794 = vpop.f32.mrb[0].mxu0
      %v1795 = vadd.f32 %v1667, %v1794
      %v1796 = vpop.f32.mrb[0].mxu0
      %1797 = vdwg.mxu0
      %v1798 = vtanh.pop %v1760
      %v1799 = vtanh.pop %v1765
      %v1800 = vtanh.pop %v1770
      %v1801 = vtanh.pop %v1775
      %v1802 = vxor.u32 %v1780, 2147483648
      %v1803 = vxor.u32 %v1785, 2147483648
      %v1804 = vxor.u32 %v1790, 2147483648
      %v1805 = vxor.u32 %v1795, 2147483648
      %v1806 = vmul.f32 %v1802, 1.442695
      %v1807 = vpow.pop %v1806
      %v1808 = vmul.f32 %v1803, 1.442695
      %v1809 = vpow.pop %v1808
      %v1810 = vmul.f32 %v1804, 1.442695
      %v1811 = vpow.pop %v1810
      %v1812 = vmul.f32 %v1805, 1.442695
      %v1813 = vpow.pop %v1812
      %v1814 = vadd.f32 %v1807, 1.0
      %v1815 = vadd.f32 %v1809, 1.0
      %v1816 = vadd.f32 %v1811, 1.0
      %v1817 = vadd.f32 %v1813, 1.0
      %v1818 = vrcp.pop %v1814
      %v1819 = vmul.f32 1.0, %v1818
      %v1820 = vrcp.pop %v1815
      %v1821 = vmul.f32 1.0, %v1820
      %v1822 = vrcp.pop %v1816
      %v1823 = vmul.f32 1.0, %v1822
      %v1824 = vrcp.pop %v1817
      %v1825 = vmul.f32 1.0, %v1824
      %v1826 = vmul.f32 %v1798, %v1819
      %v1827 = vmul.f32 %v1799, %v1821
      %v1828 = vmul.f32 %v1800, %v1823
      %v1829 = vmul.f32 %v1801, %v1825
      %s1830 = scalar_lea.vmem %s13, 64
      %v1831 = vld [vmem:[%s1830] sm:$0xff]
      %v1832 = vld [vmem:[%s1830 + $0x8] sm:$0xff]
      %v1833 = vld [vmem:[%s1830 + $0x10] sm:$0xff]
      %v1834 = vld [vmem:[%s1830 + $0x18] sm:$0xff]
      %v1835 = vld [vmem:[%s1830 + $0x20] sm:$0xff]
      %v1836 = vld [vmem:[%s1830 + $0x28] sm:$0xff]
      %v1837 = vld [vmem:[%s1830 + $0x30] sm:$0xff]
      %v1838 = vld [vmem:[%s1830 + $0x38] sm:$0xff]
      %s1839 = scalar_lea.vmem %s14, 64
      %v1840 = vld [vmem:[%s1839] sm:$0xff]
      %v1841 = vld [vmem:[%s1839 + $0x8] sm:$0xff]
      %v1842 = vld [vmem:[%s1839 + $0x10] sm:$0xff]
      %v1843 = vld [vmem:[%s1839 + $0x18] sm:$0xff]
      %v1844 = vld [vmem:[%s1839 + $0x20] sm:$0xff]
      %v1845 = vld [vmem:[%s1839 + $0x28] sm:$0xff]
      %v1846 = vld [vmem:[%s1839 + $0x30] sm:$0xff]
      %v1847 = vld [vmem:[%s1839 + $0x38] sm:$0xff]
      %1849 = vset.pattern.permute.xlu0 0
      %1850 = vperm.xlu0 %1849, %v1840
      %v1851 = vpop.permute.xlu0 %1850
      %1853 = vset.pattern.permute.xlu0 0
      %1854 = vperm.xlu0 %1853, %v1841
      %v1855 = vpop.permute.xlu0 %1854
      %1857 = vset.pattern.permute.xlu0 0
      %1858 = vperm.xlu0 %1857, %v1842
      %v1859 = vpop.permute.xlu0 %1858
      %1861 = vset.pattern.permute.xlu0 0
      %1862 = vperm.xlu0 %1861, %v1843
      %v1863 = vpop.permute.xlu0 %1862
      %1865 = vset.pattern.permute.xlu0 0
      %1866 = vperm.xlu0 %1865, %v1844
      %v1867 = vpop.permute.xlu0 %1866
      %1870 = vset.pattern.permute.xlu0 0
      %1871 = vperm.xlu0 %1870, %v1845
      %v1872 = vpop.permute.xlu0 %1871
      %1875 = vset.pattern.permute.xlu0 0
      %1876 = vperm.xlu0 %1875, %v1846
      %v1877 = vpop.permute.xlu0 %1876
      %1880 = vset.pattern.permute.xlu0 0
      %1881 = vperm.xlu0 %1880, %v1847
      %v1882 = vpop.permute.xlu0 %1881
      %v1885 = vsel %vm1453, %v1831, 0
      %v1888 = vsel %vm1453, %v1832, 0
      %v1891 = vsel %vm1453, %v1833, 0
      %v1894 = vsel %vm1453, %v1834, 0
      %v1897 = vsel %vm1453, %v1835, 0
      %v1900 = vsel %vm1453, %v1836, 0
      %v1903 = vsel %vm1453, %v1837, 0
      %v1906 = vsel %vm1453, %v1838, 0
      %1908 = vmatprep.subr.mxu0 0.0
      %1909 = vmatpush1.msra.mxu0 %v1826
      %1910 = vmatprep.subr.mxu0 0.0
      %1911 = vmatpush1.msra.mxu0 %v1827
      %1912 = vmatprep.subr.mxu0 0.0
      %1913 = vmatpush1.msra.mxu0 %v1828
      %1914 = vmatprep.subr.mxu0 0.0
      %1915 = vmatpush1.msra.mxu0 %v1829
      %1916 = vmatprep.subr.mxu0 0.0
      %1917 = vmatpush1.msra.mxu0 0.0
      %1918 = vmatprep.subr.mxu0 0.0
      %1919 = vmatpush1.msra.mxu0 0.0
      %1920 = vmatprep.subr.mxu0 0.0
      %1921 = vmatpush1.msra.mxu0 0.0
      %1922 = vmatprep.subr.mxu0 0.0
      %1923 = vmatpush1.msra.mxu0 0.0
      %1924 = vmatprep.subr.mxu0 0.0
      %1925 = vmatpush1.msra.mxu0 0.0
      %1926 = vmatprep.subr.mxu0 0.0
      %1927 = vmatpush1.msra.mxu0 0.0
      %1928 = vmatprep.subr.mxu0 0.0
      %1929 = vmatpush1.msra.mxu0 0.0
      %1930 = vmatprep.subr.mxu0 0.0
      %1931 = vmatpush1.msra.mxu0 0.0
      %1932 = vmatprep.subr.mxu0 0.0
      %1933 = vmatpush1.msra.mxu0 0.0
      %1934 = vmatprep.subr.mxu0 0.0
      %1935 = vmatpush1.msra.mxu0 0.0
      %1936 = vmatprep.subr.mxu0 0.0
      %1937 = vmatpush1.msra.mxu0 0.0
      %1938 = vmatprep.subr.mxu0 0.0
      %1939 = vmatpush1.msra.mxu0 0.0
      %1940 = vmatprep.subr.mxu0 0.0
      %1941 = vmatpush1.msra.mxu0 0.0
      %1942 = vmatprep.subr.mxu0 0.0
      %1943 = vmatpush1.msra.mxu0 0.0
      %1944 = vmatprep.subr.mxu0 0.0
      %1945 = vmatpush1.msra.mxu0 0.0
      %1946 = vmatprep.subr.mxu0 0.0
      %1947 = vmatpush1.msra.mxu0 0.0
      %1948 = vmatprep.subr.mxu0 0.0
      %1949 = vmatpush1.msra.mxu0 0.0
      %1950 = vmatprep.subr.mxu0 0.0
      %1951 = vmatpush1.msra.mxu0 0.0
      %1952 = vmatprep.subr.mxu0 0.0
      %1953 = vmatpush1.msra.mxu0 0.0
      %1954 = vmatprep.subr.mxu0 0.0
      %1955 = vmatpush1.msra.mxu0 0.0
      %1956 = vmatprep.subr.mxu0 0.0
      %1957 = vmatpush1.msra.mxu0 0.0
      %1958 = vmatprep.subr.mxu0 0.0
      %1959 = vmatpush1.msra.mxu0 0.0
      %1960 = vmatprep.subr.mxu0 0.0
      %1961 = vmatpush1.msra.mxu0 0.0
      %1962 = vmatprep.subr.mxu0 0.0
      %1963 = vmatpush1.msra.mxu0 0.0
      %1964 = vmatprep.subr.mxu0 0.0
      %1965 = vmatpush1.msra.mxu0 0.0
      %1966 = vmatprep.subr.mxu0 0.0
      %1967 = vmatpush1.msra.mxu0 0.0
      %1968 = vmatprep.subr.mxu0 0.0
      %1969 = vmatpush1.msra.mxu0 0.0
      %1970 = vmatprep.subr.mxu0 0.0
      %1971 = vmatpush1.msra.mxu0 0.0
      %1972 = vmatprep.mubr.f32.mxu0 0.0
      %1973 = vmatmul.mubr.f32.gmra.mrb[0].mxu0 %v1885
      %v1974 = vpop.f32.mrb[0].mxu0
      %v1975 = vpop.f32.mrb[0].mxu0
      %1976 = vmatprep.mubr.f32.mxu0 0.0
      %1977 = vmatmul.mubr.f32.gmra.mrb[0].mxu0 %v1888
      %v1978 = vpop.f32.mrb[0].mxu0
      %v1979 = vpop.f32.mrb[0].mxu0
      %1980 = vmatprep.mubr.f32.mxu0 0.0
      %1981 = vmatmul.mubr.f32.gmra.mrb[0].mxu0 %v1891
      %v1982 = vpop.f32.mrb[0].mxu0
      %v1983 = vpop.f32.mrb[0].mxu0
      %1984 = vmatprep.mubr.f32.mxu0 0.0
      %1985 = vmatmul.mubr.f32.gmra.mrb[0].mxu0 %v1894
      %v1986 = vpop.f32.mrb[0].mxu0
      %v1987 = vpop.f32.mrb[0].mxu0
      %1988 = vmatprep.mubr.f32.mxu0 0.0
      %1989 = vmatmul.mubr.f32.gmra.mrb[0].mxu0 %v1897
      %v1990 = vpop.f32.mrb[0].mxu0
      %v1991 = vadd.f32 %v1867, %v1990
      %v1992 = vpop.f32.mrb[0].mxu0
      %1993 = vmatprep.mubr.f32.mxu0 0.0
      %1994 = vmatmul.mubr.f32.gmra.mrb[0].mxu0 %v1900
      %v1995 = vpop.f32.mrb[0].mxu0
      %v1996 = vadd.f32 %v1872, %v1995
      %v1997 = vpop.f32.mrb[0].mxu0
      %1998 = vmatprep.mubr.f32.mxu0 0.0
      %1999 = vmatmul.mubr.f32.gmra.mrb[0].mxu0 %v1903
      %v2000 = vpop.f32.mrb[0].mxu0
      %v2001 = vadd.f32 %v1877, %v2000
      %v2002 = vpop.f32.mrb[0].mxu0
      %2003 = vmatprep.mubr.f32.mxu0 0.0
      %2004 = vmatmul.mubr.f32.gmra.mrb[0].mxu0 %v1906
      %v2005 = vpop.f32.mrb[0].mxu0
      %v2006 = vadd.f32 %v1882, %v2005
      %v2007 = vpop.f32.mrb[0].mxu0
      %2008 = vdwg.mxu0
      %v2009 = vadd.f32 %v1591, %v1991
      %v2010 = vadd.f32 %v1592, %v1996
      %v2011 = vadd.f32 %v1593, %v2001
      %v2012 = vadd.f32 %v1594, %v2006
      %v2013 = vmul.f32 %v2009, %v872
      %v2014 = vmul.f32 %v2010, %v872
      %v2015 = vmul.f32 %v2011, %v872
      %v2016 = vmul.f32 %v2012, %v872
      %v2017 = vld [vmem:[%s15] sm:$0xf]
      %v2018 = vld [vmem:[%s16] sm:$0xf]
      %2020 = vset.pattern.permute.xlu0 0
      %2021 = vperm.xlu0 %2020, %v2018
      %v2022 = vpop.permute.xlu0 %2021
      %v2025 = vsel %vm1453, %v2017, 0
      %2027 = vmatprep.subr.mxu0 0.0
      %2028 = vmatpush1.msra.mxu0 %v2013
      %2029 = vmatprep.subr.mxu0 0.0
      %2030 = vmatpush1.msra.mxu0 %v2014
      %2031 = vmatprep.subr.mxu0 0.0
      %2032 = vmatpush1.msra.mxu0 %v2015
      %2033 = vmatprep.subr.mxu0 0.0
      %2034 = vmatpush1.msra.mxu0 %v2016
      %2035 = vmatprep.subr.mxu0 0.0
      %2036 = vmatpush1.msra.mxu0 0.0
      %2037 = vmatprep.subr.mxu0 0.0
      %2038 = vmatpush1.msra.mxu0 0.0
      %2039 = vmatprep.subr.mxu0 0.0
      %2040 = vmatpush1.msra.mxu0 0.0
      %2041 = vmatprep.subr.mxu0 0.0
      %2042 = vmatpush1.msra.mxu0 0.0
      %2043 = vmatprep.subr.mxu0 0.0
      %2044 = vmatpush1.msra.mxu0 0.0
      %2045 = vmatprep.subr.mxu0 0.0
      %2046 = vmatpush1.msra.mxu0 0.0
      %2047 = vmatprep.subr.mxu0 0.0
      %2048 = vmatpush1.msra.mxu0 0.0
      %2049 = vmatprep.subr.mxu0 0.0
      %2050 = vmatpush1.msra.mxu0 0.0
      %2051 = vmatprep.subr.mxu0 0.0
      %2052 = vmatpush1.msra.mxu0 0.0
      %2053 = vmatprep.subr.mxu0 0.0
      %2054 = vmatpush1.msra.mxu0 0.0
      %2055 = vmatprep.subr.mxu0 0.0
      %2056 = vmatpush1.msra.mxu0 0.0
      %2057 = vmatprep.subr.mxu0 0.0
      %2058 = vmatpush1.msra.mxu0 0.0
      %2059 = vmatprep.subr.mxu0 0.0
      %2060 = vmatpush1.msra.mxu0 0.0
      %2061 = vmatprep.subr.mxu0 0.0
      %2062 = vmatpush1.msra.mxu0 0.0
      %2063 = vmatprep.subr.mxu0 0.0
      %2064 = vmatpush1.msra.mxu0 0.0
      %2065 = vmatprep.subr.mxu0 0.0
      %2066 = vmatpush1.msra.mxu0 0.0
      %2067 = vmatprep.subr.mxu0 0.0
      %2068 = vmatpush1.msra.mxu0 0.0
      %2069 = vmatprep.subr.mxu0 0.0
      %2070 = vmatpush1.msra.mxu0 0.0
      %2071 = vmatprep.subr.mxu0 0.0
      %2072 = vmatpush1.msra.mxu0 0.0
      %2073 = vmatprep.subr.mxu0 0.0
      %2074 = vmatpush1.msra.mxu0 0.0
      %2075 = vmatprep.subr.mxu0 0.0
      %2076 = vmatpush1.msra.mxu0 0.0
      %2077 = vmatprep.subr.mxu0 0.0
      %2078 = vmatpush1.msra.mxu0 0.0
      %2079 = vmatprep.subr.mxu0 0.0
      %2080 = vmatpush1.msra.mxu0 0.0
      %2081 = vmatprep.subr.mxu0 0.0
      %2082 = vmatpush1.msra.mxu0 0.0
      %2083 = vmatprep.subr.mxu0 0.0
      %2084 = vmatpush1.msra.mxu0 0.0
      %2085 = vmatprep.subr.mxu0 0.0
      %2086 = vmatpush1.msra.mxu0 0.0
      %2087 = vmatprep.subr.mxu0 0.0
      %2088 = vmatpush1.msra.mxu0 0.0
      %2089 = vmatprep.subr.mxu0 0.0
      %2090 = vmatpush1.msra.mxu0 0.0
      %2091 = vmatprep.mubr.f32.mxu0 0.0
      %2092 = vmatmul.mubr.f32.gmra.mrb[0].mxu0 %v2025
      %v2093 = vpop.f32.mrb[0].mxu0
      %v2094 = vadd.f32 %v2022, %v2093
      %v2095 = vpop.f32.mrb[0].mxu0
      %2096 = vdwg.mxu0
      %v2097 = vld [vmem:[%s17] sm:$0xf]
      %v2098 = vld [vmem:[%s18] sm:$0xf]
      %2100 = vset.pattern.permute.xlu0 0
      %2101 = vperm.xlu0 %2100, %v2098
      %v2102 = vpop.permute.xlu0 %2101
      %v2105 = vsel %vm1453, %v2097, 0
      %2107 = vmatprep.subr.mxu0 0.0
      %2108 = vmatpush1.msra.mxu0 %v2013
      %2109 = vmatprep.subr.mxu0 0.0
      %2110 = vmatpush1.msra.mxu0 %v2014
      %2111 = vmatprep.subr.mxu0 0.0
      %2112 = vmatpush1.msra.mxu0 %v2015
      %2113 = vmatprep.subr.mxu0 0.0
      %2114 = vmatpush1.msra.mxu0 %v2016
      %2115 = vmatprep.subr.mxu0 0.0
      %2116 = vmatpush1.msra.mxu0 0.0
      %2117 = vmatprep.subr.mxu0 0.0
      %2118 = vmatpush1.msra.mxu0 0.0
      %2119 = vmatprep.subr.mxu0 0.0
      %2120 = vmatpush1.msra.mxu0 0.0
      %2121 = vmatprep.subr.mxu0 0.0
      %2122 = vmatpush1.msra.mxu0 0.0
      %2123 = vmatprep.subr.mxu0 0.0
      %2124 = vmatpush1.msra.mxu0 0.0
      %2125 = vmatprep.subr.mxu0 0.0
      %2126 = vmatpush1.msra.mxu0 0.0
      %2127 = vmatprep.subr.mxu0 0.0
      %2128 = vmatpush1.msra.mxu0 0.0
      %2129 = vmatprep.subr.mxu0 0.0
      %2130 = vmatpush1.msra.mxu0 0.0
      %2131 = vmatprep.subr.mxu0 0.0
      %2132 = vmatpush1.msra.mxu0 0.0
      %2133 = vmatprep.subr.mxu0 0.0
      %2134 = vmatpush1.msra.mxu0 0.0
      %2135 = vmatprep.subr.mxu0 0.0
      %2136 = vmatpush1.msra.mxu0 0.0
      %2137 = vmatprep.subr.mxu0 0.0
      %2138 = vmatpush1.msra.mxu0 0.0
      %2139 = vmatprep.subr.mxu0 0.0
      %2140 = vmatpush1.msra.mxu0 0.0
      %2141 = vmatprep.subr.mxu0 0.0
      %2142 = vmatpush1.msra.mxu0 0.0
      %2143 = vmatprep.subr.mxu0 0.0
      %2144 = vmatpush1.msra.mxu0 0.0
      %2145 = vmatprep.subr.mxu0 0.0
      %2146 = vmatpush1.msra.mxu0 0.0
      %2147 = vmatprep.subr.mxu0 0.0
      %2148 = vmatpush1.msra.mxu0 0.0
      %2149 = vmatprep.subr.mxu0 0.0
      %2150 = vmatpush1.msra.mxu0 0.0
      %2151 = vmatprep.subr.mxu0 0.0
      %2152 = vmatpush1.msra.mxu0 0.0
      %2153 = vmatprep.subr.mxu0 0.0
      %2154 = vmatpush1.msra.mxu0 0.0
      %2155 = vmatprep.subr.mxu0 0.0
      %2156 = vmatpush1.msra.mxu0 0.0
      %2157 = vmatprep.subr.mxu0 0.0
      %2158 = vmatpush1.msra.mxu0 0.0
      %2159 = vmatprep.subr.mxu0 0.0
      %2160 = vmatpush1.msra.mxu0 0.0
      %2161 = vmatprep.subr.mxu0 0.0
      %2162 = vmatpush1.msra.mxu0 0.0
      %2163 = vmatprep.subr.mxu0 0.0
      %2164 = vmatpush1.msra.mxu0 0.0
      %2165 = vmatprep.subr.mxu0 0.0
      %2166 = vmatpush1.msra.mxu0 0.0
      %2167 = vmatprep.subr.mxu0 0.0
      %2168 = vmatpush1.msra.mxu0 0.0
      %2169 = vmatprep.subr.mxu0 0.0
      %2170 = vmatpush1.msra.mxu0 0.0
      %2171 = vmatprep.mubr.f32.mxu0 0.0
      %2172 = vmatmul.mubr.f32.gmra.mrb[0].mxu0 %v2105
      %v2173 = vpop.f32.mrb[0].mxu0
      %v2174 = vadd.f32 %v2102, %v2173
      %v2175 = vpop.f32.mrb[0].mxu0
      %2176 = vdwg.mxu0
      %2177 = vst [vmem:[%s694] sm:$0xf] %v874
      %v2178 = vmul.f32 %v2174, 1.442695
      %v2179 = vpow.pop %v2178
      %v2180 = vmul.f32 %v2179, %v1030
      %v2181 = vadd.f32 %v2094, %v2180
      %v2182 = vmul.f32 %v2181, %v872
      %2183 = vst [vmem:[%s698] sm:$0xf] %v2182
      %v2184 = vmul.f32 %v2174, %v872
      %v2185 = vsel %vm711, %v2184, 0.0
      %v2186 = vrot.slane %v2185, 4
      %v2187 = vadd.f32 %v2185, %v2186
      %v2188 = vrot.slane %v2187, 2
      %v2189 = vadd.f32 %v2187, %v2188
      %v2190 = vrot.slane %v2189, 1
      %v2191 = vadd.f32 %v2189, %v2190
      %2192 = vst [vmem:[%s701] sm:$0x1] %v2191
      %p2193 = scmp.lt.s32.totalorder %s33, 1
      %s2194 = scalar_select %p2193, %s33, 1
      %s2195 = smul.addr %s2194, 4
      %s2196 = scalar_lea.vmem %s19, %s2195
      %p2197 = scmp.lt.s32.totalorder %s33, 1
      %s2198 = scalar_select %p2197, %s33, 1
      %s2199 = smul.addr %s2198, 4
      %s2200 = scalar_lea.vmem %s20, %s2199
      %p2201 = scmp.lt.s32.totalorder %s33, 1
      %s2202 = scalar_select %p2201, %s33, 1
      %s2203 = scalar_lea.vmem %s21, %s2202
      // Predicated region
      $region97: #{flow_spec_decoder_forward.2} parent=95 // pred_check
        %p2204 = pneg %p465
      $region98: #{flow_spec_decoder_forward.2} parent=95 // pred_check_branch
        %2206 = sbr.rel (%p2204) target = $region100
      $region99: #{flow_spec_decoder_forward.2} parent=95 // pred_region
        _
      $region100: #{flow_spec_decoder_forward.2} parent=95 // pred_fallthru
        _
      // Predicated region
      $region101: #{flow_spec_decoder_forward.2} parent=95 // pred_check
        %p2207 = pneg %p491
      $region102: #{flow_spec_decoder_forward.2} parent=95 // pred_check_branch
        %2209 = sbr.rel (%p2207) target = $region104
      $region103: #{flow_spec_decoder_forward.2} parent=95 // pred_region
        _
      $region104: #{flow_spec_decoder_forward.2} parent=95 // pred_fallthru
        _
      // Predicated region
      $region105: #{flow_spec_decoder_forward.2} parent=95 // pred_check
        %p2210 = pneg %p517
      $region106: #{flow_spec_decoder_forward.2} parent=95 // pred_check_branch
        %2212 = sbr.rel (%p2210) target = $region108
      $region107: #{flow_spec_decoder_forward.2} parent=95 // pred_region
        _
      $region108: #{flow_spec_decoder_forward.2} parent=95 // pred_fallthru
        _
    $region96: #{flow_spec_decoder_forward.2} parent=5 // pred_fallthru
      _
    %p2213 = scmp.le.s32.totalorder 2, %s28
    // Predicated region
    $region109: #{flow_spec_decoder_forward.2} parent=5 // pred_check
      %p2214 = pneg %p2213
    $region110: #{flow_spec_decoder_forward.2} parent=5 // pred_check_branch
      %2216 = sbr.rel (%p2214) target = $region112
    $region111: #{flow_spec_decoder_forward.2} parent=5 // pred_region
      %s2217 = ssub.s32 %s28, 2
      // Predicated region
      $region113: #{flow_spec_decoder_forward.2} parent=111 // pred_check
        %p2218 = pneg %p471
      $region114: #{flow_spec_decoder_forward.2} parent=111 // pred_check_branch
        %2220 = sbr.rel (%p2218) target = $region116
      $region115: #{flow_spec_decoder_forward.2} parent=111 // pred_region
        %p2221 = scmp.lt.s32.totalorder %s34, 1
        %s2222 = scalar_select %p2221, %s34, 1
        %s2223 = smul.addr %s2222, 4
        %s2224 = scalar_lea.vmem %s19, %s2223
      $region116: #{flow_spec_decoder_forward.2} parent=111 // pred_fallthru
        _
      // Predicated region
      $region117: #{flow_spec_decoder_forward.2} parent=111 // pred_check
        %p2225 = pneg %p497
      $region118: #{flow_spec_decoder_forward.2} parent=111 // pred_check_branch
        %2227 = sbr.rel (%p2225) target = $region120
      $region119: #{flow_spec_decoder_forward.2} parent=111 // pred_region
        %p2228 = scmp.lt.s32.totalorder %s34, 1
        %s2229 = scalar_select %p2228, %s34, 1
        %s2230 = smul.addr %s2229, 4
        %s2231 = scalar_lea.vmem %s20, %s2230
      $region120: #{flow_spec_decoder_forward.2} parent=111 // pred_fallthru
        _
      // Predicated region
      $region121: #{flow_spec_decoder_forward.2} parent=111 // pred_check
        %p2232 = pneg %p523
      $region122: #{flow_spec_decoder_forward.2} parent=111 // pred_check_branch
        %2234 = sbr.rel (%p2232) target = $region124
      $region123: #{flow_spec_decoder_forward.2} parent=111 // pred_region
        %p2235 = scmp.lt.s32.totalorder %s34, 1
        %s2236 = scalar_select %p2235, %s34, 1
        %s2237 = scalar_lea.vmem %s21, %s2236
      $region124: #{flow_spec_decoder_forward.2} parent=111 // pred_fallthru
        _
    $region112: #{flow_spec_decoder_forward.2} parent=5 // pred_fallthru
      _
  $region6: #{flow_spec_decoder_forward.2} parent=0 // loop_footer
    %s32 = sadd.s32 1, %s28
  $region7: #{flow_spec_decoder_forward.2} parent=0 // loop_footer_branch
    %27 = sbr.rel target = $region3
  $region8: #{flow_spec_decoder_forward.2} parent=0 // loop_exit
    _

</llo_original>
